<compile_context>
chip_gen: v7x
topology: tpu7x:2x2x1
jax: 0.10.0
libtpu: 0.0.40
codegen_flags: <defaults>
</compile_context>

<pallas_src>
import math

import jax
import jax.numpy as jnp
from jax import lax
from jax.experimental import pallas as pl
from jax.experimental.pallas import tpu as pltpu


# ---------------------------------------------------------------------------
# Per-generation VMEM limit (v7x has only 64 MiB physical; v5e/v6e have 128)
# ---------------------------------------------------------------------------
def _vmem_limit_bytes():
    default = 32 * 1024 * 1024
    try:
        cap = getattr(pltpu.get_tpu_info(), "vmem_capacity_bytes", None)
        if not cap:
            return default
        return int(max(default, min(cap * 0.6, 100 * 1024 * 1024)))
    except Exception:
        return default


# ---------------------------------------------------------------------------
# Fused bottleneck kernel
# ---------------------------------------------------------------------------
def _bottleneck_kernel(top_ref, band_ref, bot_ref, w1_ref, b1_ref,
                       w2_ref, b2_ref, w3_ref, b3_ref, o_ref):
    """Fused conv1(1x1)+bn1+relu -> conv2(3x3)+bn2+relu -> conv3(1x1)+bn3
    + identity residual + relu on one (TH, W) spatial band.

    top_ref  : (1, 1, W, Cin)   row above the band (masked to 0 at image top)
    band_ref : (1, TH, W, Cin)  the band; also the identity residual
    bot_ref  : (1, 1, W, Cin)   row below the band (masked to 0 at image bottom)
    w1_ref   : (Cin, Cmid)      bn1 scale folded, bf16
    w2_ref   : (9*Cmid, Cmid)   HWIO 3x3 weights flattened (dy,dx,cin), bf16
    w3_ref   : (Cmid, Cout)     bn3 scale folded, bf16
    b*_ref   : (1, C)           f32 folded-BN biases
    o_ref    : (1, TH, W, Cout) bf16 output band
    """
    ht = pl.program_id(1)
    nht = pl.num_programs(1)
    _, th, w, cin = band_ref.shape
    cmid = w1_ref.shape[1]
    cout = w3_ref.shape[1]

    w1 = w1_ref[...]
    b1 = b1_ref[...]

    def conv1(x2d):  # 1x1 conv + bn1 bias + relu, f32 accumulation
        y = jnp.dot(x2d, w1, preferred_element_type=jnp.float32)
        return jnp.maximum(y + b1, 0.0)

    band = band_ref[0]                                              # (TH, W, Cin) bf16

    # ---- conv1 on the band and on the two halo rows (MXU) -------------------
    y1_mid = conv1(band.reshape(th * w, cin)).reshape(th, w, cmid)
    y1_top = jnp.where(ht > 0, conv1(top_ref[0, 0]), 0.0)           # zero above image
    y1_bot = jnp.where(ht < nht - 1, conv1(bot_ref[0, 0]), 0.0)     # zero below image

    y1 = jnp.concatenate(
        [y1_top.reshape(1, w, cmid).astype(jnp.bfloat16),
         y1_mid.astype(jnp.bfloat16),
         y1_bot.reshape(1, w, cmid).astype(jnp.bfloat16)], axis=0)  # (TH+2, W, Cmid)
    zcol = jnp.zeros((th + 2, 1, cmid), jnp.bfloat16)               # W halo (padding=1)
    y1 = jnp.concatenate([zcol, y1, zcol], axis=1)                  # (TH+2, W+2, Cmid)

    # ---- conv2 (3x3): K-concatenated im2col, single K = 9*Cmid matmul -------
    taps = [y1[dy:dy + th, dx:dx + w, :]
            for dy in range(3) for dx in range(3)]                  # 9 x (TH, W, Cmid)
    patches = jnp.concatenate(taps, axis=-1).reshape(th * w, 9 * cmid)
    y2 = jnp.dot(patches, w2_ref[...], preferred_element_type=jnp.float32)
    y2 = jnp.maximum(y2 + b2_ref[...], 0.0)                         # bn2 bias + relu

    # ---- conv3 (1x1) + bn3 + residual + relu --------------------------------
    y3 = jnp.dot(y2.astype(jnp.bfloat16), w3_ref[...],
                 preferred_element_type=jnp.float32)
    y3 = y3 + b3_ref[...] + band.reshape(th * w, cout).astype(jnp.float32)
    o_ref[0] = jnp.maximum(y3, 0.0).reshape(th, w, cout).astype(o_ref.dtype)


# ---------------------------------------------------------------------------
# Wrapper (pallas_call plumbing)
# ---------------------------------------------------------------------------
def _pick_h_tile(h, w, cin, cmid, cout, vmem_budget=6 * 1024 * 1024):
    """Pick a band height TH (divisor of H): large enough to fill the MXU,
    small enough to bound VMEM, and >= 2 bands when possible (v7x megacore)."""
    per_pos = 4 * cin + 8 * cout + 26 * cmid          # rough VMEM bytes / position
    max_pos = max(w, vmem_budget // per_pos)
    divs = [d for d in range(1, h + 1) if h % d == 0 and d * w <= max_pos]
    if not divs:
        divs = [1]
    multi = [d for d in divs if d < h and d * w >= 128]
    return multi[-1] if multi else divs[-1]


def bottleneck_forward_nhwc(x, prep, *, th=None):
    """Pallas Bottleneck.forward (stride=1, identity residual), NHWC bf16 in/out."""
    n, h, w, cin = x.shape
    cmid = prep["w1"].shape[1]
    cout = prep["w3"].shape[1]
    assert cin == cout, "identity residual requires inplanes == planes*expansion"

    if th is None:
        th = _pick_h_tile(h, w, cin, cmid, cout)
    assert h % th == 0
    n_bands = h // th

    return pl.pallas_call(
        _bottleneck_kernel,
        out_shape=jax.ShapeDtypeStruct((n, h, w, cout), jnp.bfloat16),
        grid=(n, n_bands),
        in_specs=[
            # row above the band (clamped at the top edge, masked in-kernel)
            pl.BlockSpec((1, 1, w, cin),
                         lambda i, t: (i, jnp.maximum(t * th - 1, 0), 0, 0)),
            # the band itself (conv1 input AND identity residual)
            pl.BlockSpec((1, th, w, cin), lambda i, t: (i, t, 0, 0)),
            # row below the band (clamped at the bottom edge, masked in-kernel)
            pl.BlockSpec((1, 1, w, cin),
                         lambda i, t: (i, jnp.minimum((t + 1) * th, h - 1), 0, 0)),
            pl.BlockSpec((cin, cmid), lambda i, t: (0, 0)),
            pl.BlockSpec((1, cmid), lambda i, t: (0, 0)),
            pl.BlockSpec((9 * cmid, cmid), lambda i, t: (0, 0)),
            pl.BlockSpec((1, cmid), lambda i, t: (0, 0)),
            pl.BlockSpec((cmid, cout), lambda i, t: (0, 0)),
            pl.BlockSpec((1, cout), lambda i, t: (0, 0)),
        ],
        out_specs=pl.BlockSpec((1, th, w, cout), lambda i, t: (i, t, 0, 0)),
        compiler_params=pltpu.CompilerParams(
            dimension_semantics=("parallel", "parallel"),
            vmem_limit_bytes=_vmem_limit_bytes()),
    )(x, x, x, prep["w1"], prep["b1"], prep["w2f"], prep["b2"],
      prep["w3"], prep["b3"])


# ---------------------------------------------------------------------------
# Bottleneck parameters (eval-mode BN folded into the conv weights)
# ---------------------------------------------------------------------------
def fold_bn(gamma, beta, mean, var, eps=1e-5):
    scale = gamma / jnp.sqrt(var + eps)
    bias = beta - mean * scale
    return scale.reshape(1, -1), bias.reshape(1, -1)


def init_bottleneck_params(key, inplanes, planes, cardinality=1, base_width=64):
    width = int(math.floor(planes * (base_width / 64)) * cardinality)
    outplanes = planes * 4                     # Bottleneck.expansion
    ks = jax.random.split(key, 12)

    def bn(k0, k1, k2, k3, c):
        return (jax.random.uniform(k0, (c,), minval=0.5, maxval=1.5),
                jax.random.normal(k1, (c,)) * 0.1,
                jax.random.normal(k2, (c,)) * 0.1,
                jax.random.uniform(k3, (c,), minval=0.5, maxval=1.5))

    return {
        # conv1: torch (width, inplanes, 1, 1) -> (inplanes, width)
        "w1": jax.random.normal(ks[0], (inplanes, width), jnp.float32) * 0.1,
        "bn1": bn(ks[1], ks[2], ks[3], ks[4], width),
        # conv2: torch (width, width, 3, 3)    -> HWIO (3, 3, width, width)
        "w2": jax.random.normal(ks[5], (3, 3, width, width), jnp.float32) * 0.1,
        "bn2": bn(ks[6], ks[7], ks[8], ks[9], width),
        # conv3: torch (outplanes, width, 1, 1) -> (width, outplanes)
        "w3": jax.random.normal(ks[10], (width, outplanes), jnp.float32) * 0.1,
        "bn3": bn(*jax.random.split(ks[11], 4), outplanes),
    }


def prepare_params(p):
    """Fold the BN scale into the conv weights (bias stays separate, f32) and
    cast the MXU operands to bf16.  w2f is the (dy,dx,cin)-flattened 3x3 weight
    matching the kernel's K-concatenated im2col."""
    s1, b1 = fold_bn(*p["bn1"])
    s2, b2 = fold_bn(*p["bn2"])
    s3, b3 = fold_bn(*p["bn3"])
    w2 = (p["w2"] * s2.reshape(1, 1, 1, -1)).astype(jnp.bfloat16)   # HWIO
    cmid = w2.shape[2]
    return {
        "w1": (p["w1"] * s1).astype(jnp.bfloat16), "b1": b1,
        "w2": w2, "w2f": w2.reshape(9 * cmid, cmid), "b2": b2,
        "w3": (p["w3"] * s3).astype(jnp.bfloat16), "b3": b3,
    }


# ---------------------------------------------------------------------------
# Pure-JAX reference with the same folded-BN + bf16-activation semantics
# ---------------------------------------------------------------------------
def bottleneck_reference_nhwc(x, prep):
    y1 = jnp.maximum(
        jnp.einsum("nhwc,cd->nhwd", x, prep["w1"],
                   preferred_element_type=jnp.float32) + prep["b1"][0], 0.0)
    y2 = lax.conv_general_dilated(
        y1.astype(jnp.bfloat16), prep["w2"], window_strides=(1, 1),
        padding=((1, 1), (1, 1)),
        dimension_numbers=("NHWC", "HWIO", "NHWC"),
        preferred_element_type=jnp.float32)
    y2 = jnp.maximum(y2 + prep["b2"][0], 0.0)
    y3 = jnp.einsum("nhwc,cd->nhwd", y2.astype(jnp.bfloat16), prep["w3"],
                    preferred_element_type=jnp.float32) + prep["b3"][0] \
        + x.astype(jnp.float32)
    return jnp.maximum(y3, 0.0).astype(jnp.bfloat16)


if __name__ == "__main__":
    # Two chained stride-1 bottlenecks at (small but lane-dense) real-ResNet
    # widths: inplanes=256, planes=64 -> width=64, outplanes=256 (layer1-style
    # identity-residual blocks).  NCHW<->NHWC + f32->bf16 conversion happens
    # once, outside the block chain.
    n, inplanes, planes, h, w = 2, 256, 64, 16, 16

    key = jax.random.PRNGKey(0)
    kx, k1, k2 = jax.random.split(key, 3)
    x_nchw = jax.random.normal(kx, (n, inplanes, h, w), jnp.float32)
    prep1 = prepare_params(init_bottleneck_params(k1, inplanes, planes))
    prep2 = prepare_params(init_bottleneck_params(k2, inplanes, planes))

    x_nhwc = jnp.transpose(x_nchw, (0, 2, 3, 1)).astype(jnp.bfloat16)

    @jax.jit
    def pallas_fwd(xin):
        y = bottleneck_forward_nhwc(xin, prep1)
        return bottleneck_forward_nhwc(y, prep2)

    @jax.jit
    def ref_fwd(xin):
        y = bottleneck_reference_nhwc(xin, prep1)
        return bottleneck_reference_nhwc(y, prep2)

    out = jax.block_until_ready(pallas_fwd(x_nhwc))
    ref = jax.block_until_ready(ref_fwd(x_nhwc))

    out_nchw = jnp.transpose(out, (0, 3, 1, 2))
    assert out_nchw.shape == (n, planes * 4, h, w), out_nchw.shape

    out_f32 = out.astype(jnp.float32)
    ref_f32 = ref.astype(jnp.float32)
    if not jnp.allclose(out_f32, ref_f32, rtol=2e-2, atol=2e-2):
        err = float(jnp.max(jnp.abs(out_f32 - ref_f32)))
        raise RuntimeError(f"Pallas Bottleneck mismatch vs reference (max abs err {err})")
    print("KERNEL_OK")
</pallas_src>

<mosaic_0001>
module attributes {stable_mosaic.version = 11 : i64} {
  func.func @_bottleneck_kernel(%arg0: i32, %arg1: i32, %arg2: memref<1x1x16x256xbf16, #tpu.memory_space<vmem>>, %arg3: memref<1x8x16x256xbf16, #tpu.memory_space<vmem>>, %arg4: memref<1x1x16x256xbf16, #tpu.memory_space<vmem>>, %arg5: memref<256x64xbf16, #tpu.memory_space<vmem>>, %arg6: memref<1x64xf32, #tpu.memory_space<vmem>>, %arg7: memref<576x64xbf16, #tpu.memory_space<vmem>>, %arg8: memref<1x64xf32, #tpu.memory_space<vmem>>, %arg9: memref<64x256xbf16, #tpu.memory_space<vmem>>, %arg10: memref<1x256xf32, #tpu.memory_space<vmem>>, %arg11: memref<1x8x16x256xbf16, #tpu.memory_space<vmem>>) attributes {dimension_semantics = [#tpu.dimension_semantics<parallel>, #tpu.dimension_semantics<parallel>], iteration_bounds = array<i64: 2, 2>, scalar_prefetch = 0 : i64, scratch_operands = 0 : i64, tpu.core_type = #tpu.core_type<tc>, window_params = [{transform_indices = @transform_0, window_bounds = array<i64: 1, 1, 16, 256>}, {transform_indices = @transform_1, window_bounds = array<i64: 1, 8, 16, 256>}, {transform_indices = @transform_2, window_bounds = array<i64: 1, 1, 16, 256>}, {pipeline_mode = #tpu.pipeline_mode<synchronous>, transform_indices = @transform_3, window_bounds = array<i64: 256, 64>}, {pipeline_mode = #tpu.pipeline_mode<synchronous>, transform_indices = @transform_4, window_bounds = array<i64: 1, 64>}, {pipeline_mode = #tpu.pipeline_mode<synchronous>, transform_indices = @transform_5, window_bounds = array<i64: 576, 64>}, {pipeline_mode = #tpu.pipeline_mode<synchronous>, transform_indices = @transform_6, window_bounds = array<i64: 1, 64>}, {pipeline_mode = #tpu.pipeline_mode<synchronous>, transform_indices = @transform_7, window_bounds = array<i64: 64, 256>}, {pipeline_mode = #tpu.pipeline_mode<synchronous>, transform_indices = @transform_8, window_bounds = array<i64: 1, 256>}, {transform_indices = @transform_9, window_bounds = array<i64: 1, 8, 16, 256>}]} {
    %c0 = arith.constant 0 : index
    %c0_0 = arith.constant 0 : index
    %0 = vector.load %arg5[%c0, %c0_0] : memref<256x64xbf16, #tpu.memory_space<vmem>>, vector<256x64xbf16>
    %c0_1 = arith.constant 0 : index
    %c0_2 = arith.constant 0 : index
    %1 = vector.load %arg6[%c0_1, %c0_2] : memref<1x64xf32, #tpu.memory_space<vmem>>, vector<1x64xf32>
    %c0_3 = arith.constant 0 : index
    %c0_4 = arith.constant 0 : index
    %c0_5 = arith.constant 0 : index
    %c0_6 = arith.constant 0 : index
    %2 = vector.load %arg3[%c0_3, %c0_4, %c0_5, %c0_6] : memref<1x8x16x256xbf16, #tpu.memory_space<vmem>>, vector<1x8x16x256xbf16>
    %3 = vector.shape_cast %2 : vector<1x8x16x256xbf16> to vector<8x16x256xbf16>
    %4 = vector.shape_cast %3 : vector<8x16x256xbf16> to vector<128x256xbf16>
    %cst = arith.constant dense<0.000000e+00> : vector<128x64xf32>
    %5 = tpu.matmul %4, %0, %cst {dimension_numbers = #tpu.dot_dimension_numbers<[1], [0], [0], [1], [0, 0, 1, 1], [], []>} : vector<128x256xbf16>, vector<256x64xbf16>, vector<128x64xf32> -> vector<128x64xf32>
    %6 = vector.broadcast %1 : vector<1x64xf32> to vector<128x64xf32>
    %7 = arith.addf %5, %6 : vector<128x64xf32>
    %cst_7 = arith.constant 0.000000e+00 : f32
    %8 = vector.broadcast %cst_7 : f32 to vector<128x64xf32>
    %9 = arith.maximumf %7, %8 : vector<128x64xf32>
    %10 = vector.shape_cast %9 : vector<128x64xf32> to vector<8x16x64xf32>
    %c0_i32 = arith.constant 0 : i32
    %11 = arith.cmpi sgt, %arg1, %c0_i32 : i32
    %c0_8 = arith.constant 0 : index
    %c0_9 = arith.constant 0 : index
    %c0_10 = arith.constant 0 : index
    %c0_11 = arith.constant 0 : index
    %12 = vector.load %arg2[%c0_8, %c0_9, %c0_10, %c0_11] : memref<1x1x16x256xbf16, #tpu.memory_space<vmem>>, vector<1x1x16x256xbf16>
    %13 = vector.shape_cast %12 : vector<1x1x16x256xbf16> to vector<16x256xbf16>
    %cst_12 = arith.constant dense<0.000000e+00> : vector<16x64xf32>
    %14 = tpu.matmul %13, %0, %cst_12 {dimension_numbers = #tpu.dot_dimension_numbers<[1], [0], [0], [1], [0, 0, 1, 1], [], []>} : vector<16x256xbf16>, vector<256x64xbf16>, vector<16x64xf32> -> vector<16x64xf32>
    %15 = vector.broadcast %1 : vector<1x64xf32> to vector<16x64xf32>
    %16 = arith.addf %14, %15 : vector<16x64xf32>
    %cst_13 = arith.constant 0.000000e+00 : f32
    %17 = vector.broadcast %cst_13 : f32 to vector<16x64xf32>
    %18 = arith.maximumf %16, %17 : vector<16x64xf32>
    %cst_14 = arith.constant 0.000000e+00 : f32
    %19 = vector.broadcast %cst_14 : f32 to vector<16x64xf32>
    %20 = arith.select %11, %18, %19 : vector<16x64xf32>
    %c1_i32 = arith.constant 1 : i32
    %21 = arith.cmpi slt, %arg1, %c1_i32 : i32
    %c0_15 = arith.constant 0 : index
    %c0_16 = arith.constant 0 : index
    %c0_17 = arith.constant 0 : index
    %c0_18 = arith.constant 0 : index
    %22 = vector.load %arg4[%c0_15, %c0_16, %c0_17, %c0_18] : memref<1x1x16x256xbf16, #tpu.memory_space<vmem>>, vector<1x1x16x256xbf16>
    %23 = vector.shape_cast %22 : vector<1x1x16x256xbf16> to vector<16x256xbf16>
    %cst_19 = arith.constant dense<0.000000e+00> : vector<16x64xf32>
    %24 = tpu.matmul %23, %0, %cst_19 {dimension_numbers = #tpu.dot_dimension_numbers<[1], [0], [0], [1], [0, 0, 1, 1], [], []>} : vector<16x256xbf16>, vector<256x64xbf16>, vector<16x64xf32> -> vector<16x64xf32>
    %25 = vector.broadcast %1 : vector<1x64xf32> to vector<16x64xf32>
    %26 = arith.addf %24, %25 : vector<16x64xf32>
    %cst_20 = arith.constant 0.000000e+00 : f32
    %27 = vector.broadcast %cst_20 : f32 to vector<16x64xf32>
    %28 = arith.maximumf %26, %27 : vector<16x64xf32>
    %cst_21 = arith.constant 0.000000e+00 : f32
    %29 = vector.broadcast %cst_21 : f32 to vector<16x64xf32>
    %30 = arith.select %21, %28, %29 : vector<16x64xf32>
    %31 = vector.shape_cast %20 : vector<16x64xf32> to vector<1x16x64xf32>
    %32 = arith.truncf %31 : vector<1x16x64xf32> to vector<1x16x64xbf16>
    %33 = arith.truncf %10 : vector<8x16x64xf32> to vector<8x16x64xbf16>
    %34 = vector.shape_cast %30 : vector<16x64xf32> to vector<1x16x64xf32>
    %35 = arith.truncf %34 : vector<1x16x64xf32> to vector<1x16x64xbf16>
    %36 = tpu.concatenate %32, %33, %35 in 0 : vector<1x16x64xbf16>, vector<8x16x64xbf16>, vector<1x16x64xbf16> -> vector<10x16x64xbf16>
    %cst_22 = arith.constant 0.000000e+00 : bf16
    %37 = vector.broadcast %cst_22 : bf16 to vector<10x1x64xbf16>
    %38 = tpu.concatenate %37, %36, %37 in 1 : vector<10x1x64xbf16>, vector<10x16x64xbf16>, vector<10x1x64xbf16> -> vector<10x18x64xbf16>
    %39 = vector.extract_strided_slice %38 {offsets = [0, 0, 0], sizes = [8, 16, 64], strides = [1, 1, 1]} : vector<10x18x64xbf16> to vector<8x16x64xbf16>
    %40 = vector.extract_strided_slice %38 {offsets = [0, 1, 0], sizes = [8, 16, 64], strides = [1, 1, 1]} : vector<10x18x64xbf16> to vector<8x16x64xbf16>
    %41 = vector.extract_strided_slice %38 {offsets = [0, 2, 0], sizes = [8, 16, 64], strides = [1, 1, 1]} : vector<10x18x64xbf16> to vector<8x16x64xbf16>
    %42 = vector.extract_strided_slice %38 {offsets = [1, 0, 0], sizes = [8, 16, 64], strides = [1, 1, 1]} : vector<10x18x64xbf16> to vector<8x16x64xbf16>
    %43 = vector.extract_strided_slice %38 {offsets = [1, 1, 0], sizes = [8, 16, 64], strides = [1, 1, 1]} : vector<10x18x64xbf16> to vector<8x16x64xbf16>
    %44 = vector.extract_strided_slice %38 {offsets = [1, 2, 0], sizes = [8, 16, 64], strides = [1, 1, 1]} : vector<10x18x64xbf16> to vector<8x16x64xbf16>
    %45 = vector.extract_strided_slice %38 {offsets = [2, 0, 0], sizes = [8, 16, 64], strides = [1, 1, 1]} : vector<10x18x64xbf16> to vector<8x16x64xbf16>
    %46 = vector.extract_strided_slice %38 {offsets = [2, 1, 0], sizes = [8, 16, 64], strides = [1, 1, 1]} : vector<10x18x64xbf16> to vector<8x16x64xbf16>
    %47 = vector.extract_strided_slice %38 {offsets = [2, 2, 0], sizes = [8, 16, 64], strides = [1, 1, 1]} : vector<10x18x64xbf16> to vector<8x16x64xbf16>
    %48 = tpu.concatenate %39, %40, %41, %42, %43, %44, %45, %46, %47 in 2 : vector<8x16x64xbf16>, vector<8x16x64xbf16>, vector<8x16x64xbf16>, vector<8x16x64xbf16>, vector<8x16x64xbf16>, vector<8x16x64xbf16>, vector<8x16x64xbf16>, vector<8x16x64xbf16>, vector<8x16x64xbf16> -> vector<8x16x576xbf16>
    %49 = vector.shape_cast %48 : vector<8x16x576xbf16> to vector<128x576xbf16>
    %c0_23 = arith.constant 0 : index
    %c0_24 = arith.constant 0 : index
    %50 = vector.load %arg7[%c0_23, %c0_24] : memref<576x64xbf16, #tpu.memory_space<vmem>>, vector<576x64xbf16>
    %cst_25 = arith.constant dense<0.000000e+00> : vector<128x64xf32>
    %51 = tpu.matmul %49, %50, %cst_25 {dimension_numbers = #tpu.dot_dimension_numbers<[1], [0], [0], [1], [0, 0, 1, 1], [], []>} : vector<128x576xbf16>, vector<576x64xbf16>, vector<128x64xf32> -> vector<128x64xf32>
    %c0_26 = arith.constant 0 : index
    %c0_27 = arith.constant 0 : index
    %52 = vector.load %arg8[%c0_26, %c0_27] : memref<1x64xf32, #tpu.memory_space<vmem>>, vector<1x64xf32>
    %53 = vector.broadcast %52 : vector<1x64xf32> to vector<128x64xf32>
    %54 = arith.addf %51, %53 : vector<128x64xf32>
    %cst_28 = arith.constant 0.000000e+00 : f32
    %55 = vector.broadcast %cst_28 : f32 to vector<128x64xf32>
    %56 = arith.maximumf %54, %55 : vector<128x64xf32>
    %57 = arith.truncf %56 : vector<128x64xf32> to vector<128x64xbf16>
    %c0_29 = arith.constant 0 : index
    %c0_30 = arith.constant 0 : index
    %58 = vector.load %arg9[%c0_29, %c0_30] : memref<64x256xbf16, #tpu.memory_space<vmem>>, vector<64x256xbf16>
    %cst_31 = arith.constant dense<0.000000e+00> : vector<128x256xf32>
    %59 = tpu.matmul %57, %58, %cst_31 {dimension_numbers = #tpu.dot_dimension_numbers<[1], [0], [0], [1], [0, 0, 1, 1], [], []>} : vector<128x64xbf16>, vector<64x256xbf16>, vector<128x256xf32> -> vector<128x256xf32>
    %c0_32 = arith.constant 0 : index
    %c0_33 = arith.constant 0 : index
    %60 = vector.load %arg10[%c0_32, %c0_33] : memref<1x256xf32, #tpu.memory_space<vmem>>, vector<1x256xf32>
    %61 = vector.broadcast %60 : vector<1x256xf32> to vector<128x256xf32>
    %62 = arith.addf %59, %61 : vector<128x256xf32>
    %63 = vector.shape_cast %3 : vector<8x16x256xbf16> to vector<128x256xbf16>
    %64 = arith.extf %63 : vector<128x256xbf16> to vector<128x256xf32>
    %65 = arith.addf %62, %64 : vector<128x256xf32>
    %cst_34 = arith.constant 0.000000e+00 : f32
    %66 = vector.broadcast %cst_34 : f32 to vector<128x256xf32>
    %67 = arith.maximumf %65, %66 : vector<128x256xf32>
    %68 = vector.shape_cast %67 : vector<128x256xf32> to vector<8x16x256xf32>
    %69 = arith.truncf %68 : vector<8x16x256xf32> to vector<8x16x256xbf16>
    %c0_35 = arith.constant 0 : index
    %c0_36 = arith.constant 0 : index
    %c0_37 = arith.constant 0 : index
    %c0_38 = arith.constant 0 : index
    %70 = vector.load %arg11[%c0_35, %c0_36, %c0_37, %c0_38] : memref<1x8x16x256xbf16, #tpu.memory_space<vmem>>, vector<1x8x16x256xbf16>
    %71 = vector.shape_cast %70 : vector<1x8x16x256xbf16> to vector<8x16x256xbf16>
    %72 = vector.shape_cast %69 : vector<8x16x256xbf16> to vector<1x8x16x256xbf16>
    tpu.vector_store %arg11[%c0_35, %c0_36, %c0_37, %c0_38], %72 {strides = array<i32>} : memref<1x8x16x256xbf16, #tpu.memory_space<vmem>>, vector<1x8x16x256xbf16>,
    return
  }
  func.func @transform_0(%arg0: i32, %arg1: i32) -> (i32, i32, i32, i32) {
    %c8_i32 = arith.constant 8 : i32
    %0 = arith.muli %arg1, %c8_i32 : i32
    %c1_i32 = arith.constant 1 : i32
    %1 = arith.subi %0, %c1_i32 : i32
    %c0_i32 = arith.constant 0 : i32
    %2 = arith.maxsi %1, %c0_i32 : i32
    %c0_i32_0 = arith.constant 0 : i32
    %c0_i32_1 = arith.constant 0 : i32
    %c0_i32_2 = arith.constant 0 : i32
    return %arg0, %2, %c0_i32_0, %c0_i32_1 : i32, i32, i32, i32
  }
  func.func @transform_1(%arg0: i32, %arg1: i32) -> (i32, i32, i32, i32) {
    %c0_i32 = arith.constant 0 : i32
    %c0_i32_0 = arith.constant 0 : i32
    %c0_i32_1 = arith.constant 0 : i32
    return %arg0, %arg1, %c0_i32, %c0_i32_0 : i32, i32, i32, i32
  }
  func.func @transform_2(%arg0: i32, %arg1: i32) -> (i32, i32, i32, i32) {
    %c1_i32 = arith.constant 1 : i32
    %0 = arith.addi %arg1, %c1_i32 : i32
    %c8_i32 = arith.constant 8 : i32
    %1 = arith.muli %0, %c8_i32 : i32
    %c15_i32 = arith.constant 15 : i32
    %2 = arith.minsi %1, %c15_i32 : i32
    %c0_i32 = arith.constant 0 : i32
    %c0_i32_0 = arith.constant 0 : i32
    %c0_i32_1 = arith.constant 0 : i32
    return %arg0, %2, %c0_i32, %c0_i32_0 : i32, i32, i32, i32
  }
  func.func @transform_3(%arg0: i32, %arg1: i32) -> (i32, i32) {
    %c0_i32 = arith.constant 0 : i32
    %c0_i32_0 = arith.constant 0 : i32
    %c0_i32_1 = arith.constant 0 : i32
    return %c0_i32, %c0_i32_0 : i32, i32
  }
  func.func @transform_4(%arg0: i32, %arg1: i32) -> (i32, i32) {
    %c0_i32 = arith.constant 0 : i32
    %c0_i32_0 = arith.constant 0 : i32
    %c0_i32_1 = arith.constant 0 : i32
    return %c0_i32, %c0_i32_0 : i32, i32
  }
  func.func @transform_5(%arg0: i32, %arg1: i32) -> (i32, i32) {
    %c0_i32 = arith.constant 0 : i32
    %c0_i32_0 = arith.constant 0 : i32
    %c0_i32_1 = arith.constant 0 : i32
    return %c0_i32, %c0_i32_0 : i32, i32
  }
  func.func @transform_6(%arg0: i32, %arg1: i32) -> (i32, i32) {
    %c0_i32 = arith.constant 0 : i32
    %c0_i32_0 = arith.constant 0 : i32
    %c0_i32_1 = arith.constant 0 : i32
    return %c0_i32, %c0_i32_0 : i32, i32
  }
  func.func @transform_7(%arg0: i32, %arg1: i32) -> (i32, i32) {
    %c0_i32 = arith.constant 0 : i32
    %c0_i32_0 = arith.constant 0 : i32
    %c0_i32_1 = arith.constant 0 : i32
    return %c0_i32, %c0_i32_0 : i32, i32
  }
  func.func @transform_8(%arg0: i32, %arg1: i32) -> (i32, i32) {
    %c0_i32 = arith.constant 0 : i32
    %c0_i32_0 = arith.constant 0 : i32
    %c0_i32_1 = arith.constant 0 : i32
    return %c0_i32, %c0_i32_0 : i32, i32
  }
  func.func @transform_9(%arg0: i32, %arg1: i32) -> (i32, i32, i32, i32) {
    %c0_i32 = arith.constant 0 : i32
    %c0_i32_0 = arith.constant 0 : i32
    %c0_i32_1 = arith.constant 0 : i32
    return %arg0, %arg1, %c0_i32, %c0_i32_0 : i32, i32, i32, i32
  }
}

module attributes {stable_mosaic.version = 11 : i64} {
  func.func @_bottleneck_kernel(%arg0: i32, %arg1: i32, %arg2: memref<1x1x16x256xbf16, #tpu.memory_space<vmem>>, %arg3: memref<1x8x16x256xbf16, #tpu.memory_space<vmem>>, %arg4: memref<1x1x16x256xbf16, #tpu.memory_space<vmem>>, %arg5: memref<256x64xbf16, #tpu.memory_space<vmem>>, %arg6: memref<1x64xf32, #tpu.memory_space<vmem>>, %arg7: memref<576x64xbf16, #tpu.memory_space<vmem>>, %arg8: memref<1x64xf32, #tpu.memory_space<vmem>>, %arg9: memref<64x256xbf16, #tpu.memory_space<vmem>>, %arg10: memref<1x256xf32, #tpu.memory_space<vmem>>, %arg11: memref<1x8x16x256xbf16, #tpu.memory_space<vmem>>) attributes {dimension_semantics = [#tpu.dimension_semantics<parallel>, #tpu.dimension_semantics<parallel>], iteration_bounds = array<i64: 2, 2>, scalar_prefetch = 0 : i64, scratch_operands = 0 : i64, tpu.core_type = #tpu.core_type<tc>, window_params = [{transform_indices = @transform_0, window_bounds = array<i64: 1, 1, 16, 256>}, {transform_indices = @transform_1, window_bounds = array<i64: 1, 8, 16, 256>}, {transform_indices = @transform_2, window_bounds = array<i64: 1, 1, 16, 256>}, {pipeline_mode = #tpu.pipeline_mode<synchronous>, transform_indices = @transform_3, window_bounds = array<i64: 256, 64>}, {pipeline_mode = #tpu.pipeline_mode<synchronous>, transform_indices = @transform_4, window_bounds = array<i64: 1, 64>}, {pipeline_mode = #tpu.pipeline_mode<synchronous>, transform_indices = @transform_5, window_bounds = array<i64: 576, 64>}, {pipeline_mode = #tpu.pipeline_mode<synchronous>, transform_indices = @transform_6, window_bounds = array<i64: 1, 64>}, {pipeline_mode = #tpu.pipeline_mode<synchronous>, transform_indices = @transform_7, window_bounds = array<i64: 64, 256>}, {pipeline_mode = #tpu.pipeline_mode<synchronous>, transform_indices = @transform_8, window_bounds = array<i64: 1, 256>}, {transform_indices = @transform_9, window_bounds = array<i64: 1, 8, 16, 256>}]} {
    %c0 = arith.constant 0 : index
    %c0_0 = arith.constant 0 : index
    %0 = vector.load %arg5[%c0, %c0_0] : memref<256x64xbf16, #tpu.memory_space<vmem>>, vector<256x64xbf16>
    %c0_1 = arith.constant 0 : index
    %c0_2 = arith.constant 0 : index
    %1 = vector.load %arg6[%c0_1, %c0_2] : memref<1x64xf32, #tpu.memory_space<vmem>>, vector<1x64xf32>
    %c0_3 = arith.constant 0 : index
    %c0_4 = arith.constant 0 : index
    %c0_5 = arith.constant 0 : index
    %c0_6 = arith.constant 0 : index
    %2 = vector.load %arg3[%c0_3, %c0_4, %c0_5, %c0_6] : memref<1x8x16x256xbf16, #tpu.memory_space<vmem>>, vector<1x8x16x256xbf16>
    %3 = vector.shape_cast %2 : vector<1x8x16x256xbf16> to vector<8x16x256xbf16>
    %4 = vector.shape_cast %3 : vector<8x16x256xbf16> to vector<128x256xbf16>
    %cst = arith.constant dense<0.000000e+00> : vector<128x64xf32>
    %5 = tpu.matmul %4, %0, %cst {dimension_numbers = #tpu.dot_dimension_numbers<[1], [0], [0], [1], [0, 0, 1, 1], [], []>} : vector<128x256xbf16>, vector<256x64xbf16>, vector<128x64xf32> -> vector<128x64xf32>
    %6 = vector.broadcast %1 : vector<1x64xf32> to vector<128x64xf32>
    %7 = arith.addf %5, %6 : vector<128x64xf32>
    %cst_7 = arith.constant 0.000000e+00 : f32
    %8 = vector.broadcast %cst_7 : f32 to vector<128x64xf32>
    %9 = arith.maximumf %7, %8 : vector<128x64xf32>
    %10 = vector.shape_cast %9 : vector<128x64xf32> to vector<8x16x64xf32>
    %c0_i32 = arith.constant 0 : i32
    %11 = arith.cmpi sgt, %arg1, %c0_i32 : i32
    %c0_8 = arith.constant 0 : index
    %c0_9 = arith.constant 0 : index
    %c0_10 = arith.constant 0 : index
    %c0_11 = arith.constant 0 : index
    %12 = vector.load %arg2[%c0_8, %c0_9, %c0_10, %c0_11] : memref<1x1x16x256xbf16, #tpu.memory_space<vmem>>, vector<1x1x16x256xbf16>
    %13 = vector.shape_cast %12 : vector<1x1x16x256xbf16> to vector<16x256xbf16>
    %cst_12 = arith.constant dense<0.000000e+00> : vector<16x64xf32>
    %14 = tpu.matmul %13, %0, %cst_12 {dimension_numbers = #tpu.dot_dimension_numbers<[1], [0], [0], [1], [0, 0, 1, 1], [], []>} : vector<16x256xbf16>, vector<256x64xbf16>, vector<16x64xf32> -> vector<16x64xf32>
    %15 = vector.broadcast %1 : vector<1x64xf32> to vector<16x64xf32>
    %16 = arith.addf %14, %15 : vector<16x64xf32>
    %cst_13 = arith.constant 0.000000e+00 : f32
    %17 = vector.broadcast %cst_13 : f32 to vector<16x64xf32>
    %18 = arith.maximumf %16, %17 : vector<16x64xf32>
    %cst_14 = arith.constant 0.000000e+00 : f32
    %19 = vector.broadcast %cst_14 : f32 to vector<16x64xf32>
    %20 = arith.select %11, %18, %19 : vector<16x64xf32>
    %c1_i32 = arith.constant 1 : i32
    %21 = arith.cmpi slt, %arg1, %c1_i32 : i32
    %c0_15 = arith.constant 0 : index
    %c0_16 = arith.constant 0 : index
    %c0_17 = arith.constant 0 : index
    %c0_18 = arith.constant 0 : index
    %22 = vector.load %arg4[%c0_15, %c0_16, %c0_17, %c0_18] : memref<1x1x16x256xbf16, #tpu.memory_space<vmem>>, vector<1x1x16x256xbf16>
    %23 = vector.shape_cast %22 : vector<1x1x16x256xbf16> to vector<16x256xbf16>
    %cst_19 = arith.constant dense<0.000000e+00> : vector<16x64xf32>
    %24 = tpu.matmul %23, %0, %cst_19 {dimension_numbers = #tpu.dot_dimension_numbers<[1], [0], [0], [1], [0, 0, 1, 1], [], []>} : vector<16x256xbf16>, vector<256x64xbf16>, vector<16x64xf32> -> vector<16x64xf32>
    %25 = vector.broadcast %1 : vector<1x64xf32> to vector<16x64xf32>
    %26 = arith.addf %24, %25 : vector<16x64xf32>
    %cst_20 = arith.constant 0.000000e+00 : f32
    %27 = vector.broadcast %cst_20 : f32 to vector<16x64xf32>
    %28 = arith.maximumf %26, %27 : vector<16x64xf32>
    %cst_21 = arith.constant 0.000000e+00 : f32
    %29 = vector.broadcast %cst_21 : f32 to vector<16x64xf32>
    %30 = arith.select %21, %28, %29 : vector<16x64xf32>
    %31 = vector.shape_cast %20 : vector<16x64xf32> to vector<1x16x64xf32>
    %32 = arith.truncf %31 : vector<1x16x64xf32> to vector<1x16x64xbf16>
    %33 = arith.truncf %10 : vector<8x16x64xf32> to vector<8x16x64xbf16>
    %34 = vector.shape_cast %30 : vector<16x64xf32> to vector<1x16x64xf32>
    %35 = arith.truncf %34 : vector<1x16x64xf32> to vector<1x16x64xbf16>
    %36 = tpu.concatenate %32, %33, %35 in 0 : vector<1x16x64xbf16>, vector<8x16x64xbf16>, vector<1x16x64xbf16> -> vector<10x16x64xbf16>
    %cst_22 = arith.constant 0.000000e+00 : bf16
    %37 = vector.broadcast %cst_22 : bf16 to vector<10x1x64xbf16>
    %38 = tpu.concatenate %37, %36, %37 in 1 : vector<10x1x64xbf16>, vector<10x16x64xbf16>, vector<10x1x64xbf16> -> vector<10x18x64xbf16>
    %39 = vector.extract_strided_slice %38 {offsets = [0, 0, 0], sizes = [8, 16, 64], strides = [1, 1, 1]} : vector<10x18x64xbf16> to vector<8x16x64xbf16>
    %40 = vector.extract_strided_slice %38 {offsets = [0, 1, 0], sizes = [8, 16, 64], strides = [1, 1, 1]} : vector<10x18x64xbf16> to vector<8x16x64xbf16>
    %41 = vector.extract_strided_slice %38 {offsets = [0, 2, 0], sizes = [8, 16, 64], strides = [1, 1, 1]} : vector<10x18x64xbf16> to vector<8x16x64xbf16>
    %42 = vector.extract_strided_slice %38 {offsets = [1, 0, 0], sizes = [8, 16, 64], strides = [1, 1, 1]} : vector<10x18x64xbf16> to vector<8x16x64xbf16>
    %43 = vector.extract_strided_slice %38 {offsets = [1, 1, 0], sizes = [8, 16, 64], strides = [1, 1, 1]} : vector<10x18x64xbf16> to vector<8x16x64xbf16>
    %44 = vector.extract_strided_slice %38 {offsets = [1, 2, 0], sizes = [8, 16, 64], strides = [1, 1, 1]} : vector<10x18x64xbf16> to vector<8x16x64xbf16>
    %45 = vector.extract_strided_slice %38 {offsets = [2, 0, 0], sizes = [8, 16, 64], strides = [1, 1, 1]} : vector<10x18x64xbf16> to vector<8x16x64xbf16>
    %46 = vector.extract_strided_slice %38 {offsets = [2, 1, 0], sizes = [8, 16, 64], strides = [1, 1, 1]} : vector<10x18x64xbf16> to vector<8x16x64xbf16>
    %47 = vector.extract_strided_slice %38 {offsets = [2, 2, 0], sizes = [8, 16, 64], strides = [1, 1, 1]} : vector<10x18x64xbf16> to vector<8x16x64xbf16>
    %48 = tpu.concatenate %39, %40, %41, %42, %43, %44, %45, %46, %47 in 2 : vector<8x16x64xbf16>, vector<8x16x64xbf16>, vector<8x16x64xbf16>, vector<8x16x64xbf16>, vector<8x16x64xbf16>, vector<8x16x64xbf16>, vector<8x16x64xbf16>, vector<8x16x64xbf16>, vector<8x16x64xbf16> -> vector<8x16x576xbf16>
    %49 = vector.shape_cast %48 : vector<8x16x576xbf16> to vector<128x576xbf16>
    %c0_23 = arith.constant 0 : index
    %c0_24 = arith.constant 0 : index
    %50 = vector.load %arg7[%c0_23, %c0_24] : memref<576x64xbf16, #tpu.memory_space<vmem>>, vector<576x64xbf16>
    %cst_25 = arith.constant dense<0.000000e+00> : vector<128x64xf32>
    %51 = tpu.matmul %49, %50, %cst_25 {dimension_numbers = #tpu.dot_dimension_numbers<[1], [0], [0], [1], [0, 0, 1, 1], [], []>} : vector<128x576xbf16>, vector<576x64xbf16>, vector<128x64xf32> -> vector<128x64xf32>
    %c0_26 = arith.constant 0 : index
    %c0_27 = arith.constant 0 : index
    %52 = vector.load %arg8[%c0_26, %c0_27] : memref<1x64xf32, #tpu.memory_space<vmem>>, vector<1x64xf32>
    %53 = vector.broadcast %52 : vector<1x64xf32> to vector<128x64xf32>
    %54 = arith.addf %51, %53 : vector<128x64xf32>
    %cst_28 = arith.constant 0.000000e+00 : f32
    %55 = vector.broadcast %cst_28 : f32 to vector<128x64xf32>
    %56 = arith.maximumf %54, %55 : vector<128x64xf32>
    %57 = arith.truncf %56 : vector<128x64xf32> to vector<128x64xbf16>
    %c0_29 = arith.constant 0 : index
    %c0_30 = arith.constant 0 : index
    %58 = vector.load %arg9[%c0_29, %c0_30] : memref<64x256xbf16, #tpu.memory_space<vmem>>, vector<64x256xbf16>
    %cst_31 = arith.constant dense<0.000000e+00> : vector<128x256xf32>
    %59 = tpu.matmul %57, %58, %cst_31 {dimension_numbers = #tpu.dot_dimension_numbers<[1], [0], [0], [1], [0, 0, 1, 1], [], []>} : vector<128x64xbf16>, vector<64x256xbf16>, vector<128x256xf32> -> vector<128x256xf32>
    %c0_32 = arith.constant 0 : index
    %c0_33 = arith.constant 0 : index
    %60 = vector.load %arg10[%c0_32, %c0_33] : memref<1x256xf32, #tpu.memory_space<vmem>>, vector<1x256xf32>
    %61 = vector.broadcast %60 : vector<1x256xf32> to vector<128x256xf32>
    %62 = arith.addf %59, %61 : vector<128x256xf32>
    %63 = vector.shape_cast %3 : vector<8x16x256xbf16> to vector<128x256xbf16>
    %64 = arith.extf %63 : vector<128x256xbf16> to vector<128x256xf32>
    %65 = arith.addf %62, %64 : vector<128x256xf32>
    %cst_34 = arith.constant 0.000000e+00 : f32
    %66 = vector.broadcast %cst_34 : f32 to vector<128x256xf32>
    %67 = arith.maximumf %65, %66 : vector<128x256xf32>
    %68 = vector.shape_cast %67 : vector<128x256xf32> to vector<8x16x256xf32>
    %69 = arith.truncf %68 : vector<8x16x256xf32> to vector<8x16x256xbf16>
    %c0_35 = arith.constant 0 : index
    %c0_36 = arith.constant 0 : index
    %c0_37 = arith.constant 0 : index
    %c0_38 = arith.constant 0 : index
    %70 = vector.load %arg11[%c0_35, %c0_36, %c0_37, %c0_38] : memref<1x8x16x256xbf16, #tpu.memory_space<vmem>>, vector<1x8x16x256xbf16>
    %71 = vector.shape_cast %70 : vector<1x8x16x256xbf16> to vector<8x16x256xbf16>
    %72 = vector.shape_cast %69 : vector<8x16x256xbf16> to vector<1x8x16x256xbf16>
    tpu.vector_store %arg11[%c0_35, %c0_36, %c0_37, %c0_38], %72 {strides = array<i32>} : memref<1x8x16x256xbf16, #tpu.memory_space<vmem>>, vector<1x8x16x256xbf16>,
    return
  }
  func.func @transform_0(%arg0: i32, %arg1: i32) -> (i32, i32, i32, i32) {
    %c8_i32 = arith.constant 8 : i32
    %0 = arith.muli %arg1, %c8_i32 : i32
    %c1_i32 = arith.constant 1 : i32
    %1 = arith.subi %0, %c1_i32 : i32
    %c0_i32 = arith.constant 0 : i32
    %2 = arith.maxsi %1, %c0_i32 : i32
    %c0_i32_0 = arith.constant 0 : i32
    %c0_i32_1 = arith.constant 0 : i32
    %c0_i32_2 = arith.constant 0 : i32
    return %arg0, %2, %c0_i32_0, %c0_i32_1 : i32, i32, i32, i32
  }
  func.func @transform_1(%arg0: i32, %arg1: i32) -> (i32, i32, i32, i32) {
    %c0_i32 = arith.constant 0 : i32
    %c0_i32_0 = arith.constant 0 : i32
    %c0_i32_1 = arith.constant 0 : i32
    return %arg0, %arg1, %c0_i32, %c0_i32_0 : i32, i32, i32, i32
  }
  func.func @transform_2(%arg0: i32, %arg1: i32) -> (i32, i32, i32, i32) {
    %c1_i32 = arith.constant 1 : i32
    %0 = arith.addi %arg1, %c1_i32 : i32
    %c8_i32 = arith.constant 8 : i32
    %1 = arith.muli %0, %c8_i32 : i32
    %c15_i32 = arith.constant 15 : i32
    %2 = arith.minsi %1, %c15_i32 : i32
    %c0_i32 = arith.constant 0 : i32
    %c0_i32_0 = arith.constant 0 : i32
    %c0_i32_1 = arith.constant 0 : i32
    return %arg0, %2, %c0_i32, %c0_i32_0 : i32, i32, i32, i32
  }
  func.func @transform_3(%arg0: i32, %arg1: i32) -> (i32, i32) {
    %c0_i32 = arith.constant 0 : i32
    %c0_i32_0 = arith.constant 0 : i32
    %c0_i32_1 = arith.constant 0 : i32
    return %c0_i32, %c0_i32_0 : i32, i32
  }
  func.func @transform_4(%arg0: i32, %arg1: i32) -> (i32, i32) {
    %c0_i32 = arith.constant 0 : i32
    %c0_i32_0 = arith.constant 0 : i32
    %c0_i32_1 = arith.constant 0 : i32
    return %c0_i32, %c0_i32_0 : i32, i32
  }
  func.func @transform_5(%arg0: i32, %arg1: i32) -> (i32, i32) {
    %c0_i32 = arith.constant 0 : i32
    %c0_i32_0 = arith.constant 0 : i32
    %c0_i32_1 = arith.constant 0 : i32
    return %c0_i32, %c0_i32_0 : i32, i32
  }
  func.func @transform_6(%arg0: i32, %arg1: i32) -> (i32, i32) {
    %c0_i32 = arith.constant 0 : i32
    %c0_i32_0 = arith.constant 0 : i32
    %c0_i32_1 = arith.constant 0 : i32
    return %c0_i32, %c0_i32_0 : i32, i32
  }
  func.func @transform_7(%arg0: i32, %arg1: i32) -> (i32, i32) {
    %c0_i32 = arith.constant 0 : i32
    %c0_i32_0 = arith.constant 0 : i32
    %c0_i32_1 = arith.constant 0 : i32
    return %c0_i32, %c0_i32_0 : i32, i32
  }
  func.func @transform_8(%arg0: i32, %arg1: i32) -> (i32, i32) {
    %c0_i32 = arith.constant 0 : i32
    %c0_i32_0 = arith.constant 0 : i32
    %c0_i32_1 = arith.constant 0 : i32
    return %c0_i32, %c0_i32_0 : i32, i32
  }
  func.func @transform_9(%arg0: i32, %arg1: i32) -> (i32, i32, i32, i32) {
    %c0_i32 = arith.constant 0 : i32
    %c0_i32_0 = arith.constant 0 : i32
    %c0_i32_1 = arith.constant 0 : i32
    return %arg0, %arg1, %c0_i32, %c0_i32_0 : i32, i32, i32, i32
  }
}

</mosaic_0001>

<llo_original>
// kernel: pallas_fwd.2
$region0: #{pallas_fwd.2}
  #allocation0 [shape = 'u32[]', space=smem, size = 0x4, offset = 0x4, fixed_abs, tag = 'smem constant byte address 0x4 - core index']
  #allocation1 [shape = 'u32[144,128]{1,0:T(1,128)}', space=vmem, size = 0x12000, scoped, tag = 'internal scratch']
  %s0 = inlined_call_operand.hbm [shape: bf16[2,16,16,256], index: 0, kind: input, shape index: {}, may-alias: {0,1,2}]
  %s1 = inlined_call_operand.hbm [shape: bf16[2,16,16,256], index: 1, kind: input, shape index: {}, may-alias: {0,1,2}]
  %s2 = inlined_call_operand.hbm [shape: bf16[2,16,16,256], index: 2, kind: input, shape index: {}, may-alias: {0,1,2}]
  %s3 = inlined_call_operand.hbm [shape: bf16[256,64], index: 3, kind: input, shape index: {}]
  %s4 = inlined_call_operand.vmem [shape: f32[1,64], index: 4, kind: input, shape index: {}]
  %s5 = inlined_call_operand.vmem [shape: bf16[576,64], index: 5, kind: input, shape index: {}]
  %s6 = inlined_call_operand.vmem [shape: f32[1,64], index: 6, kind: input, shape index: {}]
  %s7 = inlined_call_operand.vmem [shape: bf16[64,256], index: 7, kind: input, shape index: {}]
  %s8 = inlined_call_operand.vmem [shape: f32[1,256], index: 8, kind: input, shape index: {}]
  %s9 = inlined_call_operand.vmem [shape: bf16[2,16,16,256], index: 9, kind: output, shape index: {}]
  %s10 = sld [smem:[#allocation0]]
  $region85: #{pallas_fwd.2} parent=0
    _
  %s12 = ssub.s32 1, %s10
  %s13 = scalar_select 0, %s12, %s10
  $region1: #{pallas_fwd.2} parent=0
    #allocation2 [shape = 'u8[16384]{0}', space=vmem, size = 0x4000, scoped, tag = 'input window, operand 0']
    #allocation3 [shape = 's32[2]{0}', space=sflag, size = 0x8, scoped, tag = 'scoped memory for pallas_fwd.2']
    #allocation4 [shape = 'u8[131072]{0}', space=vmem, size = 0x20000, scoped, tag = 'input window, operand 1']
    #allocation5 [shape = 's32[2]{0}', space=sflag, size = 0x8, scoped, tag = 'scoped memory for pallas_fwd.2']
    #allocation6 [shape = 'u8[16384]{0}', space=vmem, size = 0x4000, scoped, tag = 'input window, operand 2']
    #allocation7 [shape = 'u8[65536]{0}', space=vmem, size = 0x10000, scoped, tag = 'input window, operand 3, single buffered']
    #allocation8 [shape = 's32[1]{0}', space=sflag, size = 0x4, scoped, tag = 'scoped memory for pallas_fwd.2']
    %14 = vsyncpa [#allocation3], 0
    %s15 = scalar_lea.sflag [#allocation3], 1
    %16 = vsyncpa %s15, 0
    %17 = vsyncpa [#allocation5], 0
    %s18 = scalar_lea.sflag [#allocation5], 1
    %19 = vsyncpa %s18, 0
    %20 = vsyncpa [#allocation8], 0
    loop: start=0, step=1, limit=6
    $region2: #{pallas_fwd.2} parent=1 // loop_pre_header
      _
    $region3: #{pallas_fwd.2} parent=1 // loop_header
      %s22 = sphi 0, %s26
      %p23 = scmp.ge.s32.totalorder %s22, 6
      %s29 = sphi 0, %s41
      %s30 = sphi 0, %s37
      %s31 = sphi 0, %s29
      %s32 = sphi 0, %s30
      %s33 = sphi 0, %s31
      %s34 = sphi 0, %s32
      %s54 = sphi 0, %s56
      %s57 = sphi 0, %s54
      %s58 = sphi 0, %s57
      %s74 = sphi 0, %s58
      %s82 = sphi 0, %s84
      %s85 = sphi 0, %s82
      %s86 = sphi 0, %s85
      %s102 = sphi 0, %s86
      %s118 = sphi 0, %s120
      %s121 = sphi 0, %s118
      %s122 = sphi 0, %s121
      %s138 = sphi 0, %s122
      %s142 = sphi 0, %s142
      %s144 = sphi 0, %s142
      %s145 = sphi 0, %s144
      %s159 = sphi 0, %s145
      %s163 = sphi 0, %s163
      %s165 = sphi 0, %s163
      %s166 = sphi 0, %s165
      %s180 = sphi 0, %s166
      %s184 = sphi 0, %s184
      %s186 = sphi 0, %s184
      %s187 = sphi 0, %s186
      %s201 = sphi 0, %s187
      %s205 = sphi 0, %s205
      %s207 = sphi 0, %s205
      %s208 = sphi 0, %s207
      %s222 = sphi 0, %s208
      %s226 = sphi 0, %s226
      %s228 = sphi 0, %s226
      %s229 = sphi 0, %s228
      %s243 = sphi 0, %s229
      %s247 = sphi 0, %s247
      %s249 = sphi 0, %s247
      %s250 = sphi 0, %s249
      %s264 = sphi 0, %s250
      %s272 = sphi 0, %s274
      %s275 = sphi 0, %s272
      %s276 = sphi 0, %s275
      %s292 = sphi 0, %s276
    $region4: #{pallas_fwd.2} parent=1 // loop_header_branch
      %25 = sbr.rel (%p23) target = $region8
    $region5: #{pallas_fwd.2} parent=1 // loop_body
      %s27 = ssub.s32 %s22, 1
      %s28 = ssub.s32 %s22, 2
      %s35 = sadd.s32 1, %s30
      %p36 = scmp.ge.s32.totalorder %s35, 2
      %s37 = scalar_select %p36, 0, %s35
      %s38 = sadd.s32 1, %s29
      %s39 = scalar_select %p36, %s38, %s29
      %p40 = scmp.ge.s32.totalorder %s39, 2
      %s41 = scalar_select %p40, 0, %s39
      %s42 = smul.u32 %s30, 8
      %s43 = ssub.s32 %s42, 1
      %p44 = scmp.gt.s32.totalorder %s43, 0
      %s45 = scalar_select %p44, %s43, 0
      %s46 = smul.u32 %s37, 8
      %s47 = ssub.s32 %s46, 1
      %p48 = scmp.gt.s32.totalorder %s47, 0
      %s49 = scalar_select %p48, %s47, 0
      %s50 = ssub.s32 %s29, %s41
      %s51 = ssub.s32 %s45, %s49
      %s52 = sor.u32 %s50, %s51
      %p53 = scmp.eq.s32.totalorder %s52, 0
      %s55 = sadd.s32 %s54, 1
      %s56 = scalar_select %p53, %s54, %s55
      %p59 = pneg %p53
      %p60 = scmp.eq.s32.totalorder %s22, 3
      %p61 = por %p59, %p60
      %p62 = scmp.ne.s32.totalorder %s54, %s57
      %p63 = scmp.eq.s32.totalorder %s22, 0
      %p64 = por %p62, %p63
      %p65 = scmp.ne.s32.totalorder %s54, %s57
      %p66 = scmp.eq.s32.totalorder %s27, 3
      %p67 = por %p65, %p66
      %p68 = scmp.ne.s32.totalorder %s57, %s58
      %p69 = scmp.eq.s32.totalorder %s27, 0
      %p70 = por %p68, %p69
      %p71 = scmp.ne.s32.totalorder %s57, %s58
      %p72 = scmp.eq.s32.totalorder %s28, 3
      %p73 = por %p71, %p72
      %p75 = scmp.ne.s32.totalorder %s58, %s74
      %p76 = scmp.eq.s32.totalorder %s28, 0
      %p77 = por %p75, %p76
      %s78 = ssub.s32 %s29, %s41
      %s79 = ssub.s32 %s30, %s37
      %s80 = sor.u32 %s78, %s79
      %p81 = scmp.eq.s32.totalorder %s80, 0
      %s83 = sadd.s32 %s82, 1
      %s84 = scalar_select %p81, %s82, %s83
      %p87 = pneg %p81
      %p88 = scmp.eq.s32.totalorder %s22, 3
      %p89 = por %p87, %p88
      %p90 = scmp.ne.s32.totalorder %s82, %s85
      %p91 = scmp.eq.s32.totalorder %s22, 0
      %p92 = por %p90, %p91
      %p93 = scmp.ne.s32.totalorder %s82, %s85
      %p94 = scmp.eq.s32.totalorder %s27, 3
      %p95 = por %p93, %p94
      %p96 = scmp.ne.s32.totalorder %s85, %s86
      %p97 = scmp.eq.s32.totalorder %s27, 0
      %p98 = por %p96, %p97
      %p99 = scmp.ne.s32.totalorder %s85, %s86
      %p100 = scmp.eq.s32.totalorder %s28, 3
      %p101 = por %p99, %p100
      %p103 = scmp.ne.s32.totalorder %s86, %s102
      %p104 = scmp.eq.s32.totalorder %s28, 0
      %p105 = por %p103, %p104
      %s106 = sadd.s32 %s30, 1
      %s107 = smul.u32 %s106, 8
      %p108 = scmp.lt.s32.totalorder %s107, 15
      %s109 = scalar_select %p108, %s107, 15
      %s110 = sadd.s32 %s37, 1
      %s111 = smul.u32 %s110, 8
      %p112 = scmp.lt.s32.totalorder %s111, 15
      %s113 = scalar_select %p112, %s111, 15
      %s114 = ssub.s32 %s29, %s41
      %s115 = ssub.s32 %s109, %s113
      %s116 = sor.u32 %s114, %s115
      %p117 = scmp.eq.s32.totalorder %s116, 0
      %s119 = sadd.s32 %s118, 1
      %s120 = scalar_select %p117, %s118, %s119
      %p123 = pneg %p117
      %p124 = scmp.eq.s32.totalorder %s22, 3
      %p125 = por %p123, %p124
      %p126 = scmp.ne.s32.totalorder %s118, %s121
      %p127 = scmp.eq.s32.totalorder %s22, 0
      %p128 = por %p126, %p127
      %p129 = scmp.ne.s32.totalorder %s118, %s121
      %p130 = scmp.eq.s32.totalorder %s27, 3
      %p131 = por %p129, %p130
      %p132 = scmp.ne.s32.totalorder %s121, %s122
      %p133 = scmp.eq.s32.totalorder %s27, 0
      %p134 = por %p132, %p133
      %p135 = scmp.ne.s32.totalorder %s121, %s122
      %p136 = scmp.eq.s32.totalorder %s28, 3
      %p137 = por %p135, %p136
      %p139 = scmp.ne.s32.totalorder %s122, %s138
      %p140 = scmp.eq.s32.totalorder %s28, 0
      %p141 = por %p139, %p140
      %s143 = sadd.s32 %s142, 1
      %p146 = scmp.eq.s32.totalorder %s22, 3
      %p147 = scmp.ne.s32.totalorder %s142, %s144
      %p148 = scmp.eq.s32.totalorder %s22, 0
      %p149 = por %p147, %p148
      %p150 = scmp.ne.s32.totalorder %s142, %s144
      %p151 = scmp.eq.s32.totalorder %s27, 3
      %p152 = por %p150, %p151
      %p153 = scmp.ne.s32.totalorder %s144, %s145
      %p154 = scmp.eq.s32.totalorder %s27, 0
      %p155 = por %p153, %p154
      %p156 = scmp.ne.s32.totalorder %s144, %s145
      %p157 = scmp.eq.s32.totalorder %s28, 3
      %p158 = por %p156, %p157
      %p160 = scmp.ne.s32.totalorder %s145, %s159
      %p161 = scmp.eq.s32.totalorder %s28, 0
      %p162 = por %p160, %p161
      %s164 = sadd.s32 %s163, 1
      %p167 = scmp.eq.s32.totalorder %s22, 3
      %p168 = scmp.ne.s32.totalorder %s163, %s165
      %p169 = scmp.eq.s32.totalorder %s22, 0
      %p170 = por %p168, %p169
      %p171 = scmp.ne.s32.totalorder %s163, %s165
      %p172 = scmp.eq.s32.totalorder %s27, 3
      %p173 = por %p171, %p172
      %p174 = scmp.ne.s32.totalorder %s165, %s166
      %p175 = scmp.eq.s32.totalorder %s27, 0
      %p176 = por %p174, %p175
      %p177 = scmp.ne.s32.totalorder %s165, %s166
      %p178 = scmp.eq.s32.totalorder %s28, 3
      %p179 = por %p177, %p178
      %p181 = scmp.ne.s32.totalorder %s166, %s180
      %p182 = scmp.eq.s32.totalorder %s28, 0
      %p183 = por %p181, %p182
      %s185 = sadd.s32 %s184, 1
      %p188 = scmp.eq.s32.totalorder %s22, 3
      %p189 = scmp.ne.s32.totalorder %s184, %s186
      %p190 = scmp.eq.s32.totalorder %s22, 0
      %p191 = por %p189, %p190
      %p192 = scmp.ne.s32.totalorder %s184, %s186
      %p193 = scmp.eq.s32.totalorder %s27, 3
      %p194 = por %p192, %p193
      %p195 = scmp.ne.s32.totalorder %s186, %s187
      %p196 = scmp.eq.s32.totalorder %s27, 0
      %p197 = por %p195, %p196
      %p198 = scmp.ne.s32.totalorder %s186, %s187
      %p199 = scmp.eq.s32.totalorder %s28, 3
      %p200 = por %p198, %p199
      %p202 = scmp.ne.s32.totalorder %s187, %s201
      %p203 = scmp.eq.s32.totalorder %s28, 0
      %p204 = por %p202, %p203
      %s206 = sadd.s32 %s205, 1
      %p209 = scmp.eq.s32.totalorder %s22, 3
      %p210 = scmp.ne.s32.totalorder %s205, %s207
      %p211 = scmp.eq.s32.totalorder %s22, 0
      %p212 = por %p210, %p211
      %p213 = scmp.ne.s32.totalorder %s205, %s207
      %p214 = scmp.eq.s32.totalorder %s27, 3
      %p215 = por %p213, %p214
      %p216 = scmp.ne.s32.totalorder %s207, %s208
      %p217 = scmp.eq.s32.totalorder %s27, 0
      %p218 = por %p216, %p217
      %p219 = scmp.ne.s32.totalorder %s207, %s208
      %p220 = scmp.eq.s32.totalorder %s28, 3
      %p221 = por %p219, %p220
      %p223 = scmp.ne.s32.totalorder %s208, %s222
      %p224 = scmp.eq.s32.totalorder %s28, 0
      %p225 = por %p223, %p224
      %s227 = sadd.s32 %s226, 1
      %p230 = scmp.eq.s32.totalorder %s22, 3
      %p231 = scmp.ne.s32.totalorder %s226, %s228
      %p232 = scmp.eq.s32.totalorder %s22, 0
      %p233 = por %p231, %p232
      %p234 = scmp.ne.s32.totalorder %s226, %s228
      %p235 = scmp.eq.s32.totalorder %s27, 3
      %p236 = por %p234, %p235
      %p237 = scmp.ne.s32.totalorder %s228, %s229
      %p238 = scmp.eq.s32.totalorder %s27, 0
      %p239 = por %p237, %p238
      %p240 = scmp.ne.s32.totalorder %s228, %s229
      %p241 = scmp.eq.s32.totalorder %s28, 3
      %p242 = por %p240, %p241
      %p244 = scmp.ne.s32.totalorder %s229, %s243
      %p245 = scmp.eq.s32.totalorder %s28, 0
      %p246 = por %p244, %p245
      %s248 = sadd.s32 %s247, 1
      %p251 = scmp.eq.s32.totalorder %s22, 3
      %p252 = scmp.ne.s32.totalorder %s247, %s249
      %p253 = scmp.eq.s32.totalorder %s22, 0
      %p254 = por %p252, %p253
      %p255 = scmp.ne.s32.totalorder %s247, %s249
      %p256 = scmp.eq.s32.totalorder %s27, 3
      %p257 = por %p255, %p256
      %p258 = scmp.ne.s32.totalorder %s249, %s250
      %p259 = scmp.eq.s32.totalorder %s27, 0
      %p260 = por %p258, %p259
      %p261 = scmp.ne.s32.totalorder %s249, %s250
      %p262 = scmp.eq.s32.totalorder %s28, 3
      %p263 = por %p261, %p262
      %p265 = scmp.ne.s32.totalorder %s250, %s264
      %p266 = scmp.eq.s32.totalorder %s28, 0
      %p267 = por %p265, %p266
      %s268 = ssub.s32 %s29, %s41
      %s269 = ssub.s32 %s30, %s37
      %s270 = sor.u32 %s268, %s269
      %p271 = scmp.eq.s32.totalorder %s270, 0
      %s273 = sadd.s32 %s272, 1
      %s274 = scalar_select %p271, %s272, %s273
      %p277 = pneg %p271
      %p278 = scmp.eq.s32.totalorder %s22, 3
      %p279 = por %p277, %p278
      %p280 = scmp.ne.s32.totalorder %s272, %s275
      %p281 = scmp.eq.s32.totalorder %s22, 0
      %p282 = por %p280, %p281
      %p283 = scmp.ne.s32.totalorder %s272, %s275
      %p284 = scmp.eq.s32.totalorder %s27, 3
      %p285 = por %p283, %p284
      %p286 = scmp.ne.s32.totalorder %s275, %s276
      %p287 = scmp.eq.s32.totalorder %s27, 0
      %p288 = por %p286, %p287
      %p289 = scmp.ne.s32.totalorder %s275, %s276
      %p290 = scmp.eq.s32.totalorder %s28, 3
      %p291 = por %p289, %p290
      %p293 = scmp.ne.s32.totalorder %s276, %s292
      %p294 = scmp.eq.s32.totalorder %s28, 0
      %p295 = por %p293, %p294
      %p296 = scmp.le.s32.totalorder 1, %s22
      %p297 = scmp.lt.s32.totalorder %s22, 5
      %p298 = pnand %p296, %p297
      %p299 = pneg %p298
      // Predicated region
      $region9: #{pallas_fwd.2} parent=5 // pred_check
        _
      $region10: #{pallas_fwd.2} parent=5 // pred_check_branch
        %301 = sbr.rel (%p298) target = $region12
      $region11: #{pallas_fwd.2} parent=5 // pred_region
        %s302 = ssub.s32 %s22, 1
        // Predicated region
        $region13: #{pallas_fwd.2} parent=11 // pred_check
          %p303 = pneg %p155
        $region14: #{pallas_fwd.2} parent=11 // pred_check_branch
          %305 = sbr.rel (%p303) target = $region16
        $region15: #{pallas_fwd.2} parent=11 // pred_region
          %s307 = ssub.s32 2048, 2048
          %308 = vsyncadd [#allocation8], %s307
          %s309 = sshll.u32 [#allocation7], 4
          %s310 = int_to_ptr.vmem [resolvable:$true] %s309
          %315 = dma.hbm_to_vmem [thread:$0]  %s3, 2048, %s310, [#allocation8], 64, 64, 4
        $region16: #{pallas_fwd.2} parent=11 // pred_fallthru
          _
        // Predicated region
        $region17: #{pallas_fwd.2} parent=11 // pred_check
          %p316 = pneg %p176
        $region18: #{pallas_fwd.2} parent=11 // pred_check_branch
          %318 = sbr.rel (%p316) target = $region20
        $region19: #{pallas_fwd.2} parent=11 // pred_region
          _
        $region20: #{pallas_fwd.2} parent=11 // pred_fallthru
          _
        // Predicated region
        $region21: #{pallas_fwd.2} parent=11 // pred_check
          %p319 = pneg %p197
        $region22: #{pallas_fwd.2} parent=11 // pred_check_branch
          %321 = sbr.rel (%p319) target = $region24
        $region23: #{pallas_fwd.2} parent=11 // pred_region
          _
        $region24: #{pallas_fwd.2} parent=11 // pred_fallthru
          _
        // Predicated region
        $region25: #{pallas_fwd.2} parent=11 // pred_check
          %p322 = pneg %p218
        $region26: #{pallas_fwd.2} parent=11 // pred_check_branch
          %324 = sbr.rel (%p322) target = $region28
        $region27: #{pallas_fwd.2} parent=11 // pred_region
          _
        $region28: #{pallas_fwd.2} parent=11 // pred_fallthru
          _
        // Predicated region
        $region29: #{pallas_fwd.2} parent=11 // pred_check
          %p325 = pneg %p239
        $region30: #{pallas_fwd.2} parent=11 // pred_check_branch
          %327 = sbr.rel (%p325) target = $region32
        $region31: #{pallas_fwd.2} parent=11 // pred_region
          _
        $region32: #{pallas_fwd.2} parent=11 // pred_fallthru
          _
        // Predicated region
        $region33: #{pallas_fwd.2} parent=11 // pred_check
          %p328 = pneg %p260
        $region34: #{pallas_fwd.2} parent=11 // pred_check_branch
          %330 = sbr.rel (%p328) target = $region36
        $region35: #{pallas_fwd.2} parent=11 // pred_region
          _
        $region36: #{pallas_fwd.2} parent=11 // pred_fallthru
          _
      $region12: #{pallas_fwd.2} parent=5 // pred_fallthru
        _
      %p331 = scmp.lt.s32.totalorder %s22, 4
      // Predicated region
      $region37: #{pallas_fwd.2} parent=5 // pred_check
        %p332 = pneg %p331
      $region38: #{pallas_fwd.2} parent=5 // pred_check_branch
        %334 = sbr.rel (%p332) target = $region40
      $region39: #{pallas_fwd.2} parent=5 // pred_region
        // Predicated region
        $region41: #{pallas_fwd.2} parent=39 // pred_check
          %p335 = pneg %p64
        $region42: #{pallas_fwd.2} parent=39 // pred_check_branch
          %337 = sbr.rel (%p335) target = $region44
        $region43: #{pallas_fwd.2} parent=39 // pred_region
          %s338 = sand.u32 %s54, 1
          %s339 = scalar_lea.sflag [#allocation3], %s338
          %s340 = sand.u32 %s54, 1
          %s341 = smul.addr %s340, 16
          %s342 = scalar_lea.vmem [#allocation2], %s341
          %s343 = smul.u32 %s30, 8
          %s344 = ssub.s32 %s343, 1
          %p345 = scmp.gt.s32.totalorder %s344, 0
          %s346 = scalar_select %p345, %s344, 0
          %s348 = ssub.s32 256, 256
          %349 = vsyncadd %s339, %s348
          %s350 = smul.addr %s346, 4
          %s351 = smul.addr %s29, 64
          %s352 = sadd.s32 %s350, %s351
          %s353 = smul.addr %s352, 64
          %s354 = scalar_lea.hbm %s0, %s353
          %s355 = sshll.u32 %s342, 4
          %s356 = int_to_ptr.vmem [resolvable:$true] %s355
          %361 = dma.hbm_to_vmem [thread:$0]  %s354, 256, %s356, %s339, 128, 128, 8
        $region44: #{pallas_fwd.2} parent=39 // pred_fallthru
          _
        // Predicated region
        $region45: #{pallas_fwd.2} parent=39 // pred_check
          %p362 = pneg %p92
        $region46: #{pallas_fwd.2} parent=39 // pred_check_branch
          %364 = sbr.rel (%p362) target = $region48
        $region47: #{pallas_fwd.2} parent=39 // pred_region
          %s365 = sand.u32 %s22, 1
          %s366 = scalar_lea.sflag [#allocation5], %s365
          %s367 = sand.u32 %s82, 1
          %s368 = smul.addr %s367, 128
          %s369 = scalar_lea.vmem [#allocation4], %s368
          %s370 = smul.u32 8, %s30
          %s372 = ssub.s32 2048, 2048
          %373 = vsyncadd %s366, %s372
          %s374 = smul.addr %s370, 4
          %s375 = smul.addr %s29, 64
          %s376 = sadd.s32 %s374, %s375
          %s377 = smul.addr %s376, 64
          %s378 = scalar_lea.hbm %s1, %s377
          %s379 = sshll.u32 %s369, 4
          %s380 = int_to_ptr.vmem [resolvable:$true] %s379
          %385 = dma.hbm_to_vmem [thread:$0]  %s378, 2048, %s380, %s366, 128, 128, 8
        $region48: #{pallas_fwd.2} parent=39 // pred_fallthru
          _
        // Predicated region
        $region49: #{pallas_fwd.2} parent=39 // pred_check
          %p386 = pneg %p128
        $region50: #{pallas_fwd.2} parent=39 // pred_check_branch
          %388 = sbr.rel (%p386) target = $region52
        $region51: #{pallas_fwd.2} parent=39 // pred_region
          %s389 = sand.u32 %s22, 1
          %s390 = scalar_lea.sflag [#allocation5], %s389
          %s391 = sand.u32 %s118, 1
          %s392 = smul.addr %s391, 16
          %s393 = scalar_lea.vmem [#allocation6], %s392
          %s394 = sadd.s32 %s30, 1
          %s395 = smul.u32 %s394, 8
          %p396 = scmp.lt.s32.totalorder %s395, 15
          %s397 = scalar_select %p396, %s395, 15
          %s399 = ssub.s32 256, 256
          %400 = vsyncadd %s390, %s399
          %s401 = smul.addr %s397, 4
          %s402 = smul.addr %s29, 64
          %s403 = sadd.s32 %s401, %s402
          %s404 = smul.addr %s403, 64
          %s405 = scalar_lea.hbm %s2, %s404
          %s406 = sshll.u32 %s393, 4
          %s407 = int_to_ptr.vmem [resolvable:$true] %s406
          %412 = dma.hbm_to_vmem [thread:$0]  %s405, 256, %s407, %s390, 128, 128, 8
        $region52: #{pallas_fwd.2} parent=39 // pred_fallthru
          _
      $region40: #{pallas_fwd.2} parent=5 // pred_fallthru
        _
      %p413 = scmp.le.s32.totalorder 1, %s22
      %p414 = scmp.lt.s32.totalorder %s22, 5
      %p415 = pnand %p413, %p414
      %p416 = pneg %p415
      // Predicated region
      $region53: #{pallas_fwd.2} parent=5 // pred_check
        _
      $region54: #{pallas_fwd.2} parent=5 // pred_check_branch
        %418 = sbr.rel (%p415) target = $region56
      $region55: #{pallas_fwd.2} parent=5 // pred_region
        %s419 = ssub.s32 %s22, 1
        %s420 = sand.u32 %s57, 1
        %s421 = scalar_lea.sflag [#allocation3], %s420
        %s422 = sand.u32 %s57, 1
        %s423 = smul.addr %s422, 16
        %s424 = scalar_lea.vmem [#allocation2], %s423
        // Predicated region
        $region57: #{pallas_fwd.2} parent=55 // pred_check
          %p425 = pneg %p70
        $region58: #{pallas_fwd.2} parent=55 // pred_check_branch
          %427 = sbr.rel (%p425) target = $region60
        $region59: #{pallas_fwd.2} parent=55 // pred_region
          %428 = dma.done %s421, 256
        $region60: #{pallas_fwd.2} parent=55 // pred_fallthru
          _
        %s429 = sand.u32 %s27, 1
        %s430 = scalar_lea.sflag [#allocation5], %s429
        %s431 = sand.u32 %s85, 1
        %s432 = smul.addr %s431, 128
        %s433 = scalar_lea.vmem [#allocation4], %s432
        // Predicated region
        $region61: #{pallas_fwd.2} parent=55 // pred_check
          %p434 = pneg %p98
        $region62: #{pallas_fwd.2} parent=55 // pred_check_branch
          %436 = sbr.rel (%p434) target = $region64
        $region63: #{pallas_fwd.2} parent=55 // pred_region
          %437 = dma.done %s430, 2048
        $region64: #{pallas_fwd.2} parent=55 // pred_fallthru
          _
        %s438 = sand.u32 %s27, 1
        %s439 = scalar_lea.sflag [#allocation5], %s438
        %s440 = sand.u32 %s121, 1
        %s441 = smul.addr %s440, 16
        %s442 = scalar_lea.vmem [#allocation6], %s441
        // Predicated region
        $region65: #{pallas_fwd.2} parent=55 // pred_check
          %p443 = pneg %p134
        $region66: #{pallas_fwd.2} parent=55 // pred_check_branch
          %445 = sbr.rel (%p443) target = $region68
        $region67: #{pallas_fwd.2} parent=55 // pred_region
          %446 = dma.done %s439, 256
        $region68: #{pallas_fwd.2} parent=55 // pred_fallthru
          _
        // Predicated region
        $region69: #{pallas_fwd.2} parent=55 // pred_check
          %p447 = pneg %p155
        $region70: #{pallas_fwd.2} parent=55 // pred_check_branch
          %449 = sbr.rel (%p447) target = $region72
        $region71: #{pallas_fwd.2} parent=55 // pred_region
          %450 = dma.done [#allocation8], 2048
        $region72: #{pallas_fwd.2} parent=55 // pred_fallthru
          _
        %s451 = sand.u32 %s57, 1
        %s452 = scalar_lea.sflag [#allocation3], %s451
        %s453 = sand.u32 %s57, 1
        %s454 = smul.addr %s453, 16
        %s455 = scalar_lea.vmem [#allocation2], %s454
        %p456 = pneg %p70
        %p457 = pneg %p67
        %s458 = sand.u32 %s27, 1
        %s459 = scalar_lea.sflag [#allocation5], %s458
        %s460 = sand.u32 %s85, 1
        %s461 = smul.addr %s460, 128
        %s462 = scalar_lea.vmem [#allocation4], %s461
        %p463 = pneg %p98
        %p464 = pneg %p95
        %s465 = sand.u32 %s27, 1
        %s466 = scalar_lea.sflag [#allocation5], %s465
        %s467 = sand.u32 %s121, 1
        %s468 = smul.addr %s467, 16
        %s469 = scalar_lea.vmem [#allocation6], %s468
        %p470 = pneg %p134
        %p471 = pneg %p131
        %p472 = pneg %p155
        %p473 = pneg %p152
        %p474 = pneg %p176
        %p475 = pneg %p173
        %p476 = pneg %p197
        %p477 = pneg %p194
        %p478 = pneg %p218
        %p479 = pneg %p215
        %p480 = pneg %p239
        %p481 = pneg %p236
        %p482 = pneg %p260
        %p483 = pneg %p257
        %p484 = pneg %p288
        %p485 = pneg %p285
        %s486 = smul.u32 8, %s32
        %p487 = scmp.lt.s32.totalorder %s31, 1
        %s488 = scalar_select %p487, %s31, 1
        %p489 = scmp.lt.s32.totalorder %s486, 15
        %s490 = scalar_select %p489, %s486, 15
        %s491 = smul.addr %s490, 4
        %s492 = smul.addr %s488, 64
        %s493 = sadd.s32 %s491, %s492
        %s494 = smul.addr %s493, 4
        %s495 = scalar_lea.vmem %s9, %s494
        %s496 = smul.u32 %s32, 8
        %s497 = ssub.s32 %s496, 1
        %p498 = scmp.gt.s32.totalorder %s497, 0
        %s499 = scalar_select %p498, %s497, 0
        %s500 = smul.u32 8, %s32
        %s501 = sadd.s32 %s32, 1
        %s502 = smul.u32 %s501, 8
        %p503 = scmp.lt.s32.totalorder %s502, 15
        %s504 = scalar_select %p503, %s502, 15
        %s505 = smul.u32 8, %s32
        %p506 = scmp.lt.s32.totalorder %s31, 1
        %s507 = scalar_select %p506, %s31, 1
        %p508 = scmp.lt.s32.totalorder %s505, 15
        %s509 = scalar_select %p508, %s505, 15
        %s510 = smul.addr %s509, 4
        %s511 = smul.addr %s507, 64
        %s512 = sadd.s32 %s510, %s511
        %s513 = smul.addr %s512, 4
        %s514 = scalar_lea.vmem %s9, %s513
        %s515 = smul.u32 8, %s32
        %v517 = vld [vmem:[#allocation7] sm:$0xf]
        %v518 = vld [vmem:[#allocation7 + $0x4] sm:$0xf]
        %v519 = vld [vmem:[#allocation7 + $0x8] sm:$0xf]
        %v520 = vld [vmem:[#allocation7 + $0xc] sm:$0xf]
        %v521 = vld [vmem:[#allocation7 + $0x10] sm:$0xf]
        %v522 = vld [vmem:[#allocation7 + $0x14] sm:$0xf]
        %v523 = vld [vmem:[#allocation7 + $0x18] sm:$0xf]
        %v524 = vld [vmem:[#allocation7 + $0x1c] sm:$0xf]
        %v525 = vld [vmem:[#allocation7 + $0x20] sm:$0xf]
        %v526 = vld [vmem:[#allocation7 + $0x24] sm:$0xf]
        %v527 = vld [vmem:[#allocation7 + $0x28] sm:$0xf]
        %v528 = vld [vmem:[#allocation7 + $0x2c] sm:$0xf]
        %v529 = vld [vmem:[#allocation7 + $0x30] sm:$0xf]
        %v530 = vld [vmem:[#allocation7 + $0x34] sm:$0xf]
        %v531 = vld [vmem:[#allocation7 + $0x38] sm:$0xf]
        %v532 = vld [vmem:[#allocation7 + $0x3c] sm:$0xf]
        %v533 = vld [vmem:[#allocation7 + $0x40] sm:$0xf]
        %v534 = vld [vmem:[#allocation7 + $0x44] sm:$0xf]
        %v535 = vld [vmem:[#allocation7 + $0x48] sm:$0xf]
        %v536 = vld [vmem:[#allocation7 + $0x4c] sm:$0xf]
        %v537 = vld [vmem:[#allocation7 + $0x50] sm:$0xf]
        %v538 = vld [vmem:[#allocation7 + $0x54] sm:$0xf]
        %v539 = vld [vmem:[#allocation7 + $0x58] sm:$0xf]
        %v540 = vld [vmem:[#allocation7 + $0x5c] sm:$0xf]
        %v541 = vld [vmem:[#allocation7 + $0x60] sm:$0xf]
        %v542 = vld [vmem:[#allocation7 + $0x64] sm:$0xf]
        %v543 = vld [vmem:[#allocation7 + $0x68] sm:$0xf]
        %v544 = vld [vmem:[#allocation7 + $0x6c] sm:$0xf]
        %v545 = vld [vmem:[#allocation7 + $0x70] sm:$0xf]
        %v546 = vld [vmem:[#allocation7 + $0x74] sm:$0xf]
        %v547 = vld [vmem:[#allocation7 + $0x78] sm:$0xf]
        %v548 = vld [vmem:[#allocation7 + $0x7c] sm:$0xf]
        %v549 = vld [vmem:[%s4] sm:$0x1]
        %v550 = vld [vmem:[%s433] sm:$0xff]
        %v551 = vld [vmem:[%s433 + $0x8] sm:$0xff]
        %v552 = vld [vmem:[%s433 + $0x10] sm:$0xff]
        %v553 = vld [vmem:[%s433 + $0x18] sm:$0xff]
        %v554 = vld [vmem:[%s433 + $0x20] sm:$0xff]
        %v555 = vld [vmem:[%s433 + $0x28] sm:$0xff]
        %v556 = vld [vmem:[%s433 + $0x30] sm:$0xff]
        %v557 = vld [vmem:[%s433 + $0x38] sm:$0xff]
        %v558 = vld [vmem:[%s433 + $0x40] sm:$0xff]
        %v559 = vld [vmem:[%s433 + $0x48] sm:$0xff]
        %v560 = vld [vmem:[%s433 + $0x50] sm:$0xff]
        %v561 = vld [vmem:[%s433 + $0x58] sm:$0xff]
        %v562 = vld [vmem:[%s433 + $0x60] sm:$0xff]
        %v563 = vld [vmem:[%s433 + $0x68] sm:$0xff]
        %v564 = vld [vmem:[%s433 + $0x70] sm:$0xff]
        %v565 = vld [vmem:[%s433 + $0x78] sm:$0xff]
        %v567 = vlaneseq
        %v568 = vshrl.u32 %v567, 7
        %v569 = vsub.s32 0, %v568
        %v570 = vrot.slane %v549, %v569
        %v588 = vunpack.c.l.b16 %v550
        %v589 = vunpack.c.h.b16 %v550
        %v590 = vunpack.c.l.b16 %v551
        %v591 = vunpack.c.h.b16 %v551
        %v592 = vunpack.c.l.b16 %v552
        %v593 = vunpack.c.h.b16 %v552
        %v594 = vunpack.c.l.b16 %v553
        %v595 = vunpack.c.h.b16 %v553
        %v596 = vunpack.c.l.b16 %v554
        %v597 = vunpack.c.h.b16 %v554
        %v598 = vunpack.c.l.b16 %v555
        %v599 = vunpack.c.h.b16 %v555
        %v600 = vunpack.c.l.b16 %v556
        %v601 = vunpack.c.h.b16 %v556
        %v602 = vunpack.c.l.b16 %v557
        %v603 = vunpack.c.h.b16 %v557
        %v604 = vunpack.c.l.b16 %v558
        %v605 = vunpack.c.h.b16 %v558
        %v606 = vunpack.c.l.b16 %v559
        %v607 = vunpack.c.h.b16 %v559
        %v608 = vunpack.c.l.b16 %v560
        %v609 = vunpack.c.h.b16 %v560
        %v610 = vunpack.c.l.b16 %v561
        %v611 = vunpack.c.h.b16 %v561
        %v612 = vunpack.c.l.b16 %v562
        %v613 = vunpack.c.h.b16 %v562
        %v614 = vunpack.c.l.b16 %v563
        %v615 = vunpack.c.h.b16 %v563
        %v616 = vunpack.c.l.b16 %v564
        %v617 = vunpack.c.h.b16 %v564
        %v618 = vunpack.c.l.b16 %v565
        %v619 = vunpack.c.h.b16 %v565
        %v620 = vpack.c.b16 %v590, %v588
        %v621 = vpack.c.b16 %v591, %v589
        %v622 = vpack.c.b16 %v594, %v592
        %v623 = vpack.c.b16 %v595, %v593
        %v624 = vpack.c.b16 %v598, %v596
        %v625 = vpack.c.b16 %v599, %v597
        %v626 = vpack.c.b16 %v602, %v600
        %v627 = vpack.c.b16 %v603, %v601
        %v628 = vpack.c.b16 %v606, %v604
        %v629 = vpack.c.b16 %v607, %v605
        %v630 = vpack.c.b16 %v610, %v608
        %v631 = vpack.c.b16 %v611, %v609
        %v632 = vpack.c.b16 %v614, %v612
        %v633 = vpack.c.b16 %v615, %v613
        %v634 = vpack.c.b16 %v618, %v616
        %v635 = vpack.c.b16 %v619, %v617
        %v684 = vunpack.c.l.b16 %v517
        %v685 = vunpack.c.l.b16 %v518
        %v686 = vunpack.c.l.b16 %v519
        %v687 = vunpack.c.l.b16 %v520
        %v688 = vunpack.c.l.b16 %v521
        %v689 = vunpack.c.l.b16 %v522
        %v690 = vunpack.c.l.b16 %v523
        %v691 = vunpack.c.l.b16 %v524
        %v692 = vunpack.c.l.b16 %v525
        %v693 = vunpack.c.l.b16 %v526
        %v694 = vunpack.c.l.b16 %v527
        %v695 = vunpack.c.l.b16 %v528
        %v696 = vunpack.c.l.b16 %v529
        %v697 = vunpack.c.l.b16 %v530
        %v698 = vunpack.c.l.b16 %v531
        %v699 = vunpack.c.l.b16 %v532
        %v700 = vunpack.c.l.b16 %v533
        %v701 = vunpack.c.l.b16 %v534
        %v702 = vunpack.c.l.b16 %v535
        %v703 = vunpack.c.l.b16 %v536
        %v704 = vunpack.c.l.b16 %v537
        %v705 = vunpack.c.l.b16 %v538
        %v706 = vunpack.c.l.b16 %v539
        %v707 = vunpack.c.l.b16 %v540
        %v708 = vunpack.c.l.b16 %v541
        %v709 = vunpack.c.l.b16 %v542
        %v710 = vunpack.c.l.b16 %v543
        %v711 = vunpack.c.l.b16 %v544
        %v712 = vunpack.c.l.b16 %v545
        %v713 = vunpack.c.l.b16 %v546
        %v714 = vunpack.c.l.b16 %v547
        %v715 = vunpack.c.l.b16 %v548
        %v716 = vpack.c.b16 %v685, %v684
        %v717 = vpack.c.b16 %v687, %v686
        %v718 = vpack.c.b16 %v689, %v688
        %v719 = vpack.c.b16 %v691, %v690
        %v720 = vpack.c.b16 %v693, %v692
        %v721 = vpack.c.b16 %v695, %v694
        %v722 = vpack.c.b16 %v697, %v696
        %v723 = vpack.c.b16 %v699, %v698
        %v724 = vpack.c.b16 %v701, %v700
        %v725 = vpack.c.b16 %v703, %v702
        %v726 = vpack.c.b16 %v705, %v704
        %v727 = vpack.c.b16 %v707, %v706
        %v728 = vpack.c.b16 %v709, %v708
        %v729 = vpack.c.b16 %v711, %v710
        %v730 = vpack.c.b16 %v713, %v712
        %v731 = vpack.c.b16 %v715, %v714
        %748 = vmatprep.subr.bf16.mxu0 0
        %749 = vmatpush1.bf16.msra.mxu0 %v716
        %750 = vmatprep.subr.bf16.mxu0 0
        %751 = vmatpush1.bf16.msra.mxu0 %v717
        %752 = vmatprep.subr.bf16.mxu0 0
        %753 = vmatpush1.bf16.msra.mxu0 %v718
        %754 = vmatprep.subr.bf16.mxu0 0
        %755 = vmatpush1.bf16.msra.mxu0 %v719
        %756 = vmatprep.subr.bf16.mxu0 0
        %757 = vmatpush1.bf16.msra.mxu0 %v720
        %758 = vmatprep.subr.bf16.mxu0 0
        %759 = vmatpush1.bf16.msra.mxu0 %v721
        %760 = vmatprep.subr.bf16.mxu0 0
        %761 = vmatpush1.bf16.msra.mxu0 %v722
        %762 = vmatprep.subr.bf16.mxu0 0
        %763 = vmatpush1.bf16.msra.mxu0 %v723
        %764 = vmatprep.subr.bf16.mxu0 0
        %765 = vmatpush1.bf16.msra.mxu0 %v724
        %766 = vmatprep.subr.bf16.mxu0 0
        %767 = vmatpush1.bf16.msra.mxu0 %v725
        %768 = vmatprep.subr.bf16.mxu0 0
        %769 = vmatpush1.bf16.msra.mxu0 %v726
        %770 = vmatprep.subr.bf16.mxu0 0
        %771 = vmatpush1.bf16.msra.mxu0 %v727
        %772 = vmatprep.subr.bf16.mxu0 0
        %773 = vmatpush1.bf16.msra.mxu0 %v728
        %774 = vmatprep.subr.bf16.mxu0 0
        %775 = vmatpush1.bf16.msra.mxu0 %v729
        %776 = vmatprep.subr.bf16.mxu0 0
        %777 = vmatpush1.bf16.msra.mxu0 %v730
        %778 = vmatprep.subr.bf16.mxu0 0
        %779 = vmatpush1.bf16.msra.mxu0 %v731
        %780 = vmatprep.mubr.bf16.mxu0 %v621
        %781 = vmatmul.mubr.bf16.gmra.mrb[0].mxu0 %v620
        %v782 = vpop.f32.mrb[0].mxu0
        %v783 = vadd.f32 %v570, %v782
        %v784 = vpop.f32.mrb[0].mxu0
        %v785 = vpop.f32.mrb[0].mxu0
        %v786 = vadd.f32 %v570, %v785
        %v787 = vpop.f32.mrb[0].mxu0
        %788 = vmatprep.mubr.bf16.mxu0 %v623
        %789 = vmatmul.mubr.bf16.gmra.mrb[0].mxu0 %v622
        %v790 = vpop.f32.mrb[0].mxu0
        %v791 = vadd.f32 %v570, %v790
        %v792 = vpop.f32.mrb[0].mxu0
        %v793 = vpop.f32.mrb[0].mxu0
        %v794 = vadd.f32 %v570, %v793
        %v795 = vpop.f32.mrb[0].mxu0
        %796 = vmatprep.mubr.bf16.mxu0 %v625
        %797 = vmatmul.mubr.bf16.gmra.mrb[0].mxu0 %v624
        %v798 = vpop.f32.mrb[0].mxu0
        %v799 = vadd.f32 %v570, %v798
        %v800 = vpop.f32.mrb[0].mxu0
        %v801 = vpop.f32.mrb[0].mxu0
        %v802 = vadd.f32 %v570, %v801
        %v803 = vpop.f32.mrb[0].mxu0
        %804 = vmatprep.mubr.bf16.mxu0 %v627
        %805 = vmatmul.mubr.bf16.gmra.mrb[0].mxu0 %v626
        %v806 = vpop.f32.mrb[0].mxu0
        %v807 = vadd.f32 %v570, %v806
        %v808 = vpop.f32.mrb[0].mxu0
        %v809 = vpop.f32.mrb[0].mxu0
        %v810 = vadd.f32 %v570, %v809
        %v811 = vpop.f32.mrb[0].mxu0
        %812 = vmatprep.mubr.bf16.mxu0 %v629
        %813 = vmatmul.mubr.bf16.gmra.mrb[0].mxu0 %v628
        %v814 = vpop.f32.mrb[0].mxu0
        %v815 = vadd.f32 %v570, %v814
        %v816 = vpop.f32.mrb[0].mxu0
        %v817 = vpop.f32.mrb[0].mxu0
        %v818 = vadd.f32 %v570, %v817
        %v819 = vpop.f32.mrb[0].mxu0
        %820 = vmatprep.mubr.bf16.mxu0 %v631
        %821 = vmatmul.mubr.bf16.gmra.mrb[0].mxu0 %v630
        %v822 = vpop.f32.mrb[0].mxu0
        %v823 = vadd.f32 %v570, %v822
        %v824 = vpop.f32.mrb[0].mxu0
        %v825 = vpop.f32.mrb[0].mxu0
        %v826 = vadd.f32 %v570, %v825
        %v827 = vpop.f32.mrb[0].mxu0
        %828 = vmatprep.mubr.bf16.mxu0 %v633
        %829 = vmatmul.mubr.bf16.gmra.mrb[0].mxu0 %v632
        %v830 = vpop.f32.mrb[0].mxu0
        %v831 = vadd.f32 %v570, %v830
        %v832 = vpop.f32.mrb[0].mxu0
        %v833 = vpop.f32.mrb[0].mxu0
        %v834 = vadd.f32 %v570, %v833
        %v835 = vpop.f32.mrb[0].mxu0
        %836 = vmatprep.mubr.bf16.mxu0 %v635
        %837 = vmatmul.mubr.bf16.gmra.mrb[0].mxu0 %v634
        %v838 = vpop.f32.mrb[0].mxu0
        %v839 = vadd.f32 %v570, %v838
        %v840 = vpop.f32.mrb[0].mxu0
        %v841 = vpop.f32.mrb[0].mxu0
        %v842 = vadd.f32 %v570, %v841
        %v843 = vpop.f32.mrb[0].mxu0
        %844 = vdwg.mxu0
        %v845 = vmax.f32 %v783, 0.0
        %v846 = vmax.f32 %v786, 0.0
        %v847 = vmax.f32 %v791, 0.0
        %v848 = vmax.f32 %v794, 0.0
        %v849 = vmax.f32 %v799, 0.0
        %v850 = vmax.f32 %v802, 0.0
        %v851 = vmax.f32 %v807, 0.0
        %v852 = vmax.f32 %v810, 0.0
        %v853 = vmax.f32 %v815, 0.0
        %v854 = vmax.f32 %v818, 0.0
        %v855 = vmax.f32 %v823, 0.0
        %v856 = vmax.f32 %v826, 0.0
        %v857 = vmax.f32 %v831, 0.0
        %v858 = vmax.f32 %v834, 0.0
        %v859 = vmax.f32 %v839, 0.0
        %v860 = vmax.f32 %v842, 0.0
        %p861 = scmp.gt.s32.totalorder %s32, 0
        %v862 = vld [vmem:[%s424] sm:$0xff]
        %v863 = vld [vmem:[%s424 + $0x8] sm:$0xff]
        %v866 = vunpack.c.l.b16 %v862
        %v867 = vunpack.c.h.b16 %v862
        %v868 = vunpack.c.l.b16 %v863
        %v869 = vunpack.c.h.b16 %v863
        %v870 = vpack.c.b16 %v868, %v866
        %v871 = vpack.c.b16 %v869, %v867
        %874 = vmatprep.subr.bf16.mxu0 0
        %875 = vmatpush1.bf16.msra.mxu0 %v716
        %876 = vmatprep.subr.bf16.mxu0 0
        %877 = vmatpush1.bf16.msra.mxu0 %v717
        %878 = vmatprep.subr.bf16.mxu0 0
        %879 = vmatpush1.bf16.msra.mxu0 %v718
        %880 = vmatprep.subr.bf16.mxu0 0
        %881 = vmatpush1.bf16.msra.mxu0 %v719
        %882 = vmatprep.subr.bf16.mxu0 0
        %883 = vmatpush1.bf16.msra.mxu0 %v720
        %884 = vmatprep.subr.bf16.mxu0 0
        %885 = vmatpush1.bf16.msra.mxu0 %v721
        %886 = vmatprep.subr.bf16.mxu0 0
        %887 = vmatpush1.bf16.msra.mxu0 %v722
        %888 = vmatprep.subr.bf16.mxu0 0
        %889 = vmatpush1.bf16.msra.mxu0 %v723
        %890 = vmatprep.subr.bf16.mxu0 0
        %891 = vmatpush1.bf16.msra.mxu0 %v724
        %892 = vmatprep.subr.bf16.mxu0 0
        %893 = vmatpush1.bf16.msra.mxu0 %v725
        %894 = vmatprep.subr.bf16.mxu0 0
        %895 = vmatpush1.bf16.msra.mxu0 %v726
        %896 = vmatprep.subr.bf16.mxu0 0
        %897 = vmatpush1.bf16.msra.mxu0 %v727
        %898 = vmatprep.subr.bf16.mxu0 0
        %899 = vmatpush1.bf16.msra.mxu0 %v728
        %900 = vmatprep.subr.bf16.mxu0 0
        %901 = vmatpush1.bf16.msra.mxu0 %v729
        %902 = vmatprep.subr.bf16.mxu0 0
        %903 = vmatpush1.bf16.msra.mxu0 %v730
        %904 = vmatprep.subr.bf16.mxu0 0
        %905 = vmatpush1.bf16.msra.mxu0 %v731
        %906 = vmatprep.mubr.bf16.mxu0 %v871
        %907 = vmatmul.mubr.bf16.gmra.mrb[0].mxu0 %v870
        %v908 = vpop.f32.mrb[0].mxu0
        %v909 = vadd.f32 %v570, %v908
        %v910 = vpop.f32.mrb[0].mxu0
        %v911 = vpop.f32.mrb[0].mxu0
        %v912 = vadd.f32 %v570, %v911
        %v913 = vpop.f32.mrb[0].mxu0
        %914 = vdwg.mxu0
        %v915 = vmax.f32 %v909, 0.0
        %v916 = vmax.f32 %v912, 0.0
        %s917 = scalar_select %p861, 1, 0
        %v918 = vstv %s917
        %vm919 = vcmp.eq.s32.totalorder %v918, 1
        %v920 = vsel %vm919, %v915, 0.0
        %v921 = vsel %vm919, %v916, 0.0
        %p922 = scmp.lt.s32.totalorder %s32, 1
        %v923 = vld [vmem:[%s442] sm:$0xff]
        %v924 = vld [vmem:[%s442 + $0x8] sm:$0xff]
        %v927 = vunpack.c.l.b16 %v923
        %v928 = vunpack.c.h.b16 %v923
        %v929 = vunpack.c.l.b16 %v924
        %v930 = vunpack.c.h.b16 %v924
        %v931 = vpack.c.b16 %v929, %v927
        %v932 = vpack.c.b16 %v930, %v928
        %935 = vmatprep.subr.bf16.mxu0 0
        %936 = vmatpush1.bf16.msra.mxu0 %v716
        %937 = vmatprep.subr.bf16.mxu0 0
        %938 = vmatpush1.bf16.msra.mxu0 %v717
        %939 = vmatprep.subr.bf16.mxu0 0
        %940 = vmatpush1.bf16.msra.mxu0 %v718
        %941 = vmatprep.subr.bf16.mxu0 0
        %942 = vmatpush1.bf16.msra.mxu0 %v719
        %943 = vmatprep.subr.bf16.mxu0 0
        %944 = vmatpush1.bf16.msra.mxu0 %v720
        %945 = vmatprep.subr.bf16.mxu0 0
        %946 = vmatpush1.bf16.msra.mxu0 %v721
        %947 = vmatprep.subr.bf16.mxu0 0
        %948 = vmatpush1.bf16.msra.mxu0 %v722
        %949 = vmatprep.subr.bf16.mxu0 0
        %950 = vmatpush1.bf16.msra.mxu0 %v723
        %951 = vmatprep.subr.bf16.mxu0 0
        %952 = vmatpush1.bf16.msra.mxu0 %v724
        %953 = vmatprep.subr.bf16.mxu0 0
        %954 = vmatpush1.bf16.msra.mxu0 %v725
        %955 = vmatprep.subr.bf16.mxu0 0
        %956 = vmatpush1.bf16.msra.mxu0 %v726
        %957 = vmatprep.subr.bf16.mxu0 0
        %958 = vmatpush1.bf16.msra.mxu0 %v727
        %959 = vmatprep.subr.bf16.mxu0 0
        %960 = vmatpush1.bf16.msra.mxu0 %v728
        %961 = vmatprep.subr.bf16.mxu0 0
        %962 = vmatpush1.bf16.msra.mxu0 %v729
        %963 = vmatprep.subr.bf16.mxu0 0
        %964 = vmatpush1.bf16.msra.mxu0 %v730
        %965 = vmatprep.subr.bf16.mxu0 0
        %966 = vmatpush1.bf16.msra.mxu0 %v731
        %967 = vmatprep.mubr.bf16.mxu0 %v932
        %968 = vmatmul.mubr.bf16.gmra.mrb[0].mxu0 %v931
        %v969 = vpop.f32.mrb[0].mxu0
        %v970 = vadd.f32 %v570, %v969
        %v971 = vpop.f32.mrb[0].mxu0
        %v972 = vpop.f32.mrb[0].mxu0
        %v973 = vadd.f32 %v570, %v972
        %v974 = vpop.f32.mrb[0].mxu0
        %975 = vdwg.mxu0
        %v976 = vmax.f32 %v970, 0.0
        %v977 = vmax.f32 %v973, 0.0
        %s978 = scalar_select %p922, 1, 0
        %v979 = vstv %s978
        %vm980 = vcmp.eq.s32.totalorder %v979, 1
        %v981 = vsel %vm980, %v976, 0.0
        %v982 = vsel %vm980, %v977, 0.0
        %v983 = vpack.c.bf16 %v921, %v920
        %v984 = vpack.c.bf16 %v846, %v845
        %v985 = vpack.c.bf16 %v848, %v847
        %v986 = vpack.c.bf16 %v850, %v849
        %v987 = vpack.c.bf16 %v852, %v851
        %v988 = vpack.c.bf16 %v854, %v853
        %v989 = vpack.c.bf16 %v856, %v855
        %v990 = vpack.c.bf16 %v858, %v857
        %v991 = vpack.c.bf16 %v860, %v859
        %v992 = vpack.c.bf16 %v982, %v981
        %v994 = vshrl.u32 %v983, 16
        %v996 = vrot.slane %v994, 7
        %v997 = vshll.u32 %v983, 16
        %v999 = vor.u32 %v996, %v997
        %v1001 = vshrl.u32 %v984, 16
        %v1003 = vrot.slane %v1001, 7
        %v1004 = vshll.u32 %v984, 16
        %v1006 = vor.u32 %v1003, %v1004
        %v1008 = vshrl.u32 %v985, 16
        %v1010 = vrot.slane %v1008, 7
        %v1011 = vshll.u32 %v985, 16
        %v1013 = vor.u32 %v1010, %v1011
        %v1015 = vshrl.u32 %v986, 16
        %v1017 = vrot.slane %v1015, 7
        %v1018 = vshll.u32 %v986, 16
        %v1020 = vor.u32 %v1017, %v1018
        %v1022 = vshrl.u32 %v987, 16
        %v1024 = vrot.slane %v1022, 7
        %v1025 = vshll.u32 %v987, 16
        %v1027 = vor.u32 %v1024, %v1025
        %v1029 = vshrl.u32 %v988, 16
        %v1031 = vrot.slane %v1029, 7
        %v1032 = vshll.u32 %v988, 16
        %v1034 = vor.u32 %v1031, %v1032
        %v1036 = vshrl.u32 %v989, 16
        %v1038 = vrot.slane %v1036, 7
        %v1039 = vshll.u32 %v989, 16
        %v1041 = vor.u32 %v1038, %v1039
        %v1043 = vshrl.u32 %v990, 16
        %v1045 = vrot.slane %v1043, 7
        %v1046 = vshll.u32 %v990, 16
        %v1048 = vor.u32 %v1045, %v1046
        %v1050 = vshrl.u32 %v991, 16
        %v1052 = vrot.slane %v1050, 7
        %v1053 = vshll.u32 %v991, 16
        %v1055 = vor.u32 %v1052, %v1053
        %v1057 = vshrl.u32 %v992, 16
        %v1059 = vrot.slane %v1057, 7
        %v1060 = vshll.u32 %v992, 16
        %v1062 = vor.u32 %v1059, %v1060
        %vm1083 = vcmask 1040384
        %vm1084 = vsmask.f32 256
        %vm1085 = vmand %vm1083, %vm1084
        %v1086 = vsel %vm1085, 0, %v999
        %v1087 = vsel %vm1085, 0, %v1006
        %v1088 = vsel %vm1085, 0, %v1013
        %v1089 = vsel %vm1085, 0, %v1020
        %v1090 = vsel %vm1085, 0, %v1027
        %v1091 = vsel %vm1085, 0, %v1034
        %v1092 = vsel %vm1085, 0, %v1041
        %v1093 = vsel %vm1085, 0, %v1048
        %v1094 = vsel %vm1085, 0, %v1055
        %v1095 = vsel %vm1085, 0, %v1062
        %v1096 = vsel %vm1085, %v996, 0
        %v1097 = vsel %vm1085, %v1003, 0
        %v1098 = vsel %vm1085, %v1010, 0
        %v1099 = vsel %vm1085, %v1017, 0
        %v1100 = vsel %vm1085, %v1024, 0
        %v1101 = vsel %vm1085, %v1031, 0
        %v1102 = vsel %vm1085, %v1038, 0
        %v1103 = vsel %vm1085, %v1045, 0
        %v1104 = vsel %vm1085, %v1052, 0
        %v1105 = vsel %vm1085, %v1059, 0
        %vm1106 = vsmask.f32 7424
        %v1108 = vshrl.u32 %v1086, 16
        %v1110 = vshll.u32 %v1086, 16
        %v1112 = vrot.slane %v1110, 1
        %v1113 = vor.u32 %v1108, %v1112
        %v1115 = vshll.u32 %v1096, 16
        %v1117 = vrot.slane %v1115, 1
        %v1118 = vsel %vm1106, %v1113, %v1117
        %v1120 = vshrl.u32 %v1087, 16
        %v1122 = vshll.u32 %v1087, 16
        %v1124 = vrot.slane %v1122, 1
        %v1125 = vor.u32 %v1120, %v1124
        %v1127 = vshll.u32 %v1097, 16
        %v1129 = vrot.slane %v1127, 1
        %v1130 = vsel %vm1106, %v1125, %v1129
        %v1132 = vshrl.u32 %v1088, 16
        %v1134 = vshll.u32 %v1088, 16
        %v1136 = vrot.slane %v1134, 1
        %v1137 = vor.u32 %v1132, %v1136
        %v1139 = vshll.u32 %v1098, 16
        %v1141 = vrot.slane %v1139, 1
        %v1142 = vsel %vm1106, %v1137, %v1141
        %v1144 = vshrl.u32 %v1089, 16
        %v1146 = vshll.u32 %v1089, 16
        %v1148 = vrot.slane %v1146, 1
        %v1149 = vor.u32 %v1144, %v1148
        %v1151 = vshll.u32 %v1099, 16
        %v1153 = vrot.slane %v1151, 1
        %v1154 = vsel %vm1106, %v1149, %v1153
        %v1156 = vshrl.u32 %v1090, 16
        %v1158 = vshll.u32 %v1090, 16
        %v1160 = vrot.slane %v1158, 1
        %v1161 = vor.u32 %v1156, %v1160
        %v1163 = vshll.u32 %v1100, 16
        %v1165 = vrot.slane %v1163, 1
        %v1166 = vsel %vm1106, %v1161, %v1165
        %v1168 = vshrl.u32 %v1091, 16
        %v1170 = vshll.u32 %v1091, 16
        %v1172 = vrot.slane %v1170, 1
        %v1173 = vor.u32 %v1168, %v1172
        %v1175 = vshll.u32 %v1101, 16
        %v1177 = vrot.slane %v1175, 1
        %v1178 = vsel %vm1106, %v1173, %v1177
        %v1180 = vshrl.u32 %v1092, 16
        %v1182 = vshll.u32 %v1092, 16
        %v1184 = vrot.slane %v1182, 1
        %v1185 = vor.u32 %v1180, %v1184
        %v1187 = vshll.u32 %v1102, 16
        %v1189 = vrot.slane %v1187, 1
        %v1190 = vsel %vm1106, %v1185, %v1189
        %v1192 = vshrl.u32 %v1093, 16
        %v1194 = vshll.u32 %v1093, 16
        %v1196 = vrot.slane %v1194, 1
        %v1197 = vor.u32 %v1192, %v1196
        %v1199 = vshll.u32 %v1103, 16
        %v1201 = vrot.slane %v1199, 1
        %v1202 = vsel %vm1106, %v1197, %v1201
        %1203 = vrot.lane.b32.xlu0 %v1118, 64
        %v1204 = vpop.permute.xlu0 %1203
        %1205 = vrot.lane.b32.xlu0 %v1130, 64
        %v1206 = vpop.permute.xlu0 %1205
        %1207 = vrot.lane.b32.xlu0 %v1142, 64
        %v1208 = vpop.permute.xlu0 %1207
        %1209 = vrot.lane.b32.xlu0 %v1154, 64
        %v1210 = vpop.permute.xlu0 %1209
        %1211 = vrot.lane.b32.xlu0 %v1166, 64
        %v1212 = vpop.permute.xlu0 %1211
        %1213 = vrot.lane.b32.xlu0 %v1178, 64
        %v1214 = vpop.permute.xlu0 %1213
        %1215 = vrot.lane.b32.xlu0 %v1190, 64
        %v1216 = vpop.permute.xlu0 %1215
        %1217 = vrot.lane.b32.xlu0 %v1202, 64
        %v1218 = vpop.permute.xlu0 %1217
        %vm1235 = vcmask 1046528
        %v1236 = vrot.slane %v1086, 1
        %v1237 = vrot.slane %v1096, 1
        %v1238 = vsel %vm1235, %v1236, %v1237
        %v1239 = vrot.slane %v1087, 1
        %v1240 = vrot.slane %v1097, 1
        %v1241 = vsel %vm1235, %v1239, %v1240
        %v1242 = vrot.slane %v1088, 1
        %v1243 = vrot.slane %v1098, 1
        %v1244 = vsel %vm1235, %v1242, %v1243
        %v1245 = vrot.slane %v1089, 1
        %v1246 = vrot.slane %v1099, 1
        %v1247 = vsel %vm1235, %v1245, %v1246
        %v1248 = vrot.slane %v1090, 1
        %v1249 = vrot.slane %v1100, 1
        %v1250 = vsel %vm1235, %v1248, %v1249
        %v1251 = vrot.slane %v1091, 1
        %v1252 = vrot.slane %v1101, 1
        %v1253 = vsel %vm1235, %v1251, %v1252
        %v1254 = vrot.slane %v1092, 1
        %v1255 = vrot.slane %v1102, 1
        %v1256 = vsel %vm1235, %v1254, %v1255
        %v1257 = vrot.slane %v1093, 1
        %v1258 = vrot.slane %v1103, 1
        %v1259 = vsel %vm1235, %v1257, %v1258
        %1261 = vrot.lane.b32.xlu0 %v1087, 64
        %v1262 = vpop.permute.xlu0 %1261
        %1263 = vrot.lane.b32.xlu0 %v1088, 64
        %v1264 = vpop.permute.xlu0 %1263
        %1265 = vrot.lane.b32.xlu0 %v1089, 64
        %v1266 = vpop.permute.xlu0 %1265
        %1267 = vrot.lane.b32.xlu0 %v1090, 64
        %v1268 = vpop.permute.xlu0 %1267
        %1269 = vrot.lane.b32.xlu0 %v1091, 64
        %v1270 = vpop.permute.xlu0 %1269
        %1271 = vrot.lane.b32.xlu0 %v1092, 64
        %v1272 = vpop.permute.xlu0 %1271
        %1273 = vrot.lane.b32.xlu0 %v1093, 64
        %v1274 = vpop.permute.xlu0 %1273
        %1275 = vrot.lane.b32.xlu0 %v1094, 64
        %v1276 = vpop.permute.xlu0 %1275
        %v1278 = vshrl.u32 %v1094, 16
        %v1280 = vshll.u32 %v1094, 16
        %v1282 = vrot.slane %v1280, 1
        %v1283 = vor.u32 %v1278, %v1282
        %v1285 = vshll.u32 %v1104, 16
        %v1287 = vrot.slane %v1285, 1
        %v1288 = vsel %vm1106, %v1283, %v1287
        %v1290 = vrot.slane %v1094, 1
        %v1291 = vrot.slane %v1104, 1
        %v1292 = vsel %vm1235, %v1290, %v1291
        %1293 = vrot.lane.b32.xlu0 %v1241, 64
        %v1294 = vpop.permute.xlu0 %1293
        %1295 = vrot.lane.b32.xlu0 %v1244, 64
        %v1296 = vpop.permute.xlu0 %1295
        %1297 = vrot.lane.b32.xlu0 %v1247, 64
        %v1298 = vpop.permute.xlu0 %1297
        %1299 = vrot.lane.b32.xlu0 %v1250, 64
        %v1300 = vpop.permute.xlu0 %1299
        %1301 = vrot.lane.b32.xlu0 %v1253, 64
        %v1302 = vpop.permute.xlu0 %1301
        %1303 = vrot.lane.b32.xlu0 %v1256, 64
        %v1304 = vpop.permute.xlu0 %1303
        %1305 = vrot.lane.b32.xlu0 %v1259, 64
        %v1306 = vpop.permute.xlu0 %1305
        %1307 = vrot.lane.b32.xlu0 %v1292, 64
        %v1308 = vpop.permute.xlu0 %1307
        %v1310 = vshrl.u32 %v1095, 16
        %v1312 = vshll.u32 %v1095, 16
        %v1314 = vrot.slane %v1312, 1
        %v1315 = vor.u32 %v1310, %v1314
        %v1317 = vshll.u32 %v1105, 16
        %v1319 = vrot.slane %v1317, 1
        %v1320 = vsel %vm1106, %v1315, %v1319
        %1321 = vrot.lane.b32.xlu0 %v1288, 64
        %v1322 = vpop.permute.xlu0 %1321
        %1323 = vrot.lane.b32.xlu0 %v1320, 64
        %v1324 = vpop.permute.xlu0 %1323
        %v1327 = vrot.slane %v1095, 1
        %v1328 = vrot.slane %v1105, 1
        %v1329 = vsel %vm1235, %v1327, %v1328
        %vm1330 = vcmask 523264
        %v1332 = vsel %vm1330, %v1086, %v1204
        %v1335 = vsel %vm1330, %v1087, %v1206
        %v1338 = vsel %vm1330, %v1088, %v1208
        %v1341 = vsel %vm1330, %v1089, %v1210
        %v1344 = vsel %vm1330, %v1090, %v1212
        %v1347 = vsel %vm1330, %v1091, %v1214
        %v1350 = vsel %vm1330, %v1092, %v1216
        %v1353 = vsel %vm1330, %v1093, %v1218
        %v1357 = vsel %vm1330, %v1238, %v1262
        %v1361 = vsel %vm1330, %v1241, %v1264
        %v1365 = vsel %vm1330, %v1244, %v1266
        %v1369 = vsel %vm1330, %v1247, %v1268
        %v1373 = vsel %vm1330, %v1250, %v1270
        %v1377 = vsel %vm1330, %v1253, %v1272
        %v1381 = vsel %vm1330, %v1256, %v1274
        %v1385 = vsel %vm1330, %v1259, %v1276
        %v1389 = vsel %vm1330, %v1130, %v1294
        %v1393 = vsel %vm1330, %v1142, %v1296
        %v1397 = vsel %vm1330, %v1154, %v1298
        %v1401 = vsel %vm1330, %v1166, %v1300
        %v1405 = vsel %vm1330, %v1178, %v1302
        %v1409 = vsel %vm1330, %v1190, %v1304
        %v1413 = vsel %vm1330, %v1202, %v1306
        %v1417 = vsel %vm1330, %v1288, %v1308
        %v1420 = vsel %vm1330, %v1094, %v1322
        %v1423 = vsel %vm1330, %v1095, %v1324
        %v1425 = vld [vmem:[%s5] sm:$0xf]
        %v1426 = vld [vmem:[%s5 + $0x4] sm:$0xf]
        %v1427 = vld [vmem:[%s5 + $0x8] sm:$0xf]
        %v1428 = vld [vmem:[%s5 + $0xc] sm:$0xf]
        %v1429 = vld [vmem:[%s5 + $0x10] sm:$0xf]
        %v1430 = vld [vmem:[%s5 + $0x14] sm:$0xf]
        %v1431 = vld [vmem:[%s5 + $0x18] sm:$0xf]
        %v1432 = vld [vmem:[%s5 + $0x1c] sm:$0xf]
        %v1433 = vld [vmem:[%s5 + $0x20] sm:$0xf]
        %v1434 = vld [vmem:[%s5 + $0x24] sm:$0xf]
        %v1435 = vld [vmem:[%s5 + $0x28] sm:$0xf]
        %v1436 = vld [vmem:[%s5 + $0x2c] sm:$0xf]
        %v1437 = vld [vmem:[%s5 + $0x30] sm:$0xf]
        %v1438 = vld [vmem:[%s5 + $0x34] sm:$0xf]
        %v1439 = vld [vmem:[%s5 + $0x38] sm:$0xf]
        %v1440 = vld [vmem:[%s5 + $0x3c] sm:$0xf]
        %v1441 = vld [vmem:[%s5 + $0x40] sm:$0xf]
        %v1442 = vld [vmem:[%s5 + $0x44] sm:$0xf]
        %v1443 = vld [vmem:[%s5 + $0x48] sm:$0xf]
        %v1444 = vld [vmem:[%s5 + $0x4c] sm:$0xf]
        %v1445 = vld [vmem:[%s5 + $0x50] sm:$0xf]
        %v1446 = vld [vmem:[%s5 + $0x54] sm:$0xf]
        %v1447 = vld [vmem:[%s5 + $0x58] sm:$0xf]
        %v1448 = vld [vmem:[%s5 + $0x5c] sm:$0xf]
        %v1449 = vld [vmem:[%s5 + $0x60] sm:$0xf]
        %v1450 = vld [vmem:[%s5 + $0x64] sm:$0xf]
        %v1451 = vld [vmem:[%s5 + $0x68] sm:$0xf]
        %v1452 = vld [vmem:[%s5 + $0x6c] sm:$0xf]
        %v1453 = vld [vmem:[%s5 + $0x70] sm:$0xf]
        %v1454 = vld [vmem:[%s5 + $0x74] sm:$0xf]
        %v1455 = vld [vmem:[%s5 + $0x78] sm:$0xf]
        %v1456 = vld [vmem:[%s5 + $0x7c] sm:$0xf]
        %v1457 = vld [vmem:[%s5 + $0x80] sm:$0xf]
        %v1458 = vld [vmem:[%s5 + $0x84] sm:$0xf]
        %v1459 = vld [vmem:[%s5 + $0x88] sm:$0xf]
        %v1460 = vld [vmem:[%s5 + $0x8c] sm:$0xf]
        %v1461 = vld [vmem:[%s5 + $0x90] sm:$0xf]
        %v1462 = vld [vmem:[%s5 + $0x94] sm:$0xf]
        %v1463 = vld [vmem:[%s5 + $0x98] sm:$0xf]
        %v1464 = vld [vmem:[%s5 + $0x9c] sm:$0xf]
        %v1465 = vld [vmem:[%s5 + $0xa0] sm:$0xf]
        %v1466 = vld [vmem:[%s5 + $0xa4] sm:$0xf]
        %v1467 = vld [vmem:[%s5 + $0xa8] sm:$0xf]
        %v1468 = vld [vmem:[%s5 + $0xac] sm:$0xf]
        %v1469 = vld [vmem:[%s5 + $0xb0] sm:$0xf]
        %v1470 = vld [vmem:[%s5 + $0xb4] sm:$0xf]
        %v1471 = vld [vmem:[%s5 + $0xb8] sm:$0xf]
        %v1472 = vld [vmem:[%s5 + $0xbc] sm:$0xf]
        %v1473 = vld [vmem:[%s5 + $0xc0] sm:$0xf]
        %v1474 = vld [vmem:[%s5 + $0xc4] sm:$0xf]
        %v1475 = vld [vmem:[%s5 + $0xc8] sm:$0xf]
        %v1476 = vld [vmem:[%s5 + $0xcc] sm:$0xf]
        %v1477 = vld [vmem:[%s5 + $0xd0] sm:$0xf]
        %v1478 = vld [vmem:[%s5 + $0xd4] sm:$0xf]
        %v1479 = vld [vmem:[%s5 + $0xd8] sm:$0xf]
        %v1480 = vld [vmem:[%s5 + $0xdc] sm:$0xf]
        %v1481 = vld [vmem:[%s5 + $0xe0] sm:$0xf]
        %v1482 = vld [vmem:[%s5 + $0xe4] sm:$0xf]
        %v1483 = vld [vmem:[%s5 + $0xe8] sm:$0xf]
        %v1484 = vld [vmem:[%s5 + $0xec] sm:$0xf]
        %v1485 = vld [vmem:[%s5 + $0xf0] sm:$0xf]
        %v1486 = vld [vmem:[%s5 + $0xf4] sm:$0xf]
        %v1487 = vld [vmem:[%s5 + $0xf8] sm:$0xf]
        %v1488 = vld [vmem:[%s5 + $0xfc] sm:$0xf]
        %v1489 = vld [vmem:[%s5 + $0x100] sm:$0xf]
        %v1490 = vld [vmem:[%s5 + $0x104] sm:$0xf]
        %v1491 = vld [vmem:[%s5 + $0x108] sm:$0xf]
        %v1492 = vld [vmem:[%s5 + $0x10c] sm:$0xf]
        %v1493 = vld [vmem:[%s5 + $0x110] sm:$0xf]
        %v1494 = vld [vmem:[%s5 + $0x114] sm:$0xf]
        %v1495 = vld [vmem:[%s5 + $0x118] sm:$0xf]
        %v1496 = vld [vmem:[%s5 + $0x11c] sm:$0xf]
        %v1497 = vld [vmem:[%s6] sm:$0x1]
        %v1499 = vlaneseq
        %v1500 = vshrl.u32 %v1499, 7
        %v1501 = vsub.s32 0, %v1500
        %v1502 = vrot.slane %v1497, %v1501
        %v1576 = vunpack.c.l.b16 %v1425
        %v1577 = vunpack.c.l.b16 %v1426
        %v1578 = vunpack.c.l.b16 %v1427
        %v1579 = vunpack.c.l.b16 %v1428
        %v1580 = vunpack.c.l.b16 %v1429
        %v1581 = vunpack.c.l.b16 %v1430
        %v1582 = vunpack.c.l.b16 %v1431
        %v1583 = vunpack.c.l.b16 %v1432
        %v1584 = vunpack.c.l.b16 %v1433
        %v1585 = vunpack.c.l.b16 %v1434
        %v1586 = vunpack.c.l.b16 %v1435
        %v1587 = vunpack.c.l.b16 %v1436
        %v1588 = vunpack.c.l.b16 %v1437
        %v1589 = vunpack.c.l.b16 %v1438
        %v1590 = vunpack.c.l.b16 %v1439
        %v1591 = vunpack.c.l.b16 %v1440
        %v1592 = vunpack.c.l.b16 %v1441
        %v1593 = vunpack.c.l.b16 %v1442
        %v1594 = vunpack.c.l.b16 %v1443
        %v1595 = vunpack.c.l.b16 %v1444
        %v1596 = vunpack.c.l.b16 %v1445
        %v1597 = vunpack.c.l.b16 %v1446
        %v1598 = vunpack.c.l.b16 %v1447
        %v1599 = vunpack.c.l.b16 %v1448
        %v1600 = vunpack.c.l.b16 %v1449
        %v1601 = vunpack.c.l.b16 %v1450
        %v1602 = vunpack.c.l.b16 %v1451
        %v1603 = vunpack.c.l.b16 %v1452
        %v1604 = vunpack.c.l.b16 %v1453
        %v1605 = vunpack.c.l.b16 %v1454
        %v1606 = vunpack.c.l.b16 %v1455
        %v1607 = vunpack.c.l.b16 %v1456
        %v1608 = vunpack.c.l.b16 %v1457
        %v1609 = vunpack.c.l.b16 %v1458
        %v1610 = vunpack.c.l.b16 %v1459
        %v1611 = vunpack.c.l.b16 %v1460
        %v1612 = vunpack.c.l.b16 %v1461
        %v1613 = vunpack.c.l.b16 %v1462
        %v1614 = vunpack.c.l.b16 %v1463
        %v1615 = vunpack.c.l.b16 %v1464
        %v1616 = vunpack.c.l.b16 %v1465
        %v1617 = vunpack.c.l.b16 %v1466
        %v1618 = vunpack.c.l.b16 %v1467
        %v1619 = vunpack.c.l.b16 %v1468
        %v1620 = vunpack.c.l.b16 %v1469
        %v1621 = vunpack.c.l.b16 %v1470
        %v1622 = vunpack.c.l.b16 %v1471
        %v1623 = vunpack.c.l.b16 %v1472
        %v1624 = vunpack.c.l.b16 %v1473
        %v1625 = vunpack.c.l.b16 %v1474
        %v1626 = vunpack.c.l.b16 %v1475
        %v1627 = vunpack.c.l.b16 %v1476
        %v1628 = vunpack.c.l.b16 %v1477
        %v1629 = vunpack.c.l.b16 %v1478
        %v1630 = vunpack.c.l.b16 %v1479
        %v1631 = vunpack.c.l.b16 %v1480
        %v1632 = vunpack.c.l.b16 %v1481
        %v1633 = vunpack.c.l.b16 %v1482
        %v1634 = vunpack.c.l.b16 %v1483
        %v1635 = vunpack.c.l.b16 %v1484
        %v1636 = vunpack.c.l.b16 %v1485
        %v1637 = vunpack.c.l.b16 %v1486
        %v1638 = vunpack.c.l.b16 %v1487
        %v1639 = vunpack.c.l.b16 %v1488
        %v1640 = vunpack.c.l.b16 %v1489
        %v1641 = vunpack.c.l.b16 %v1490
        %v1642 = vunpack.c.l.b16 %v1491
        %v1643 = vunpack.c.l.b16 %v1492
        %v1644 = vunpack.c.l.b16 %v1493
        %v1645 = vunpack.c.l.b16 %v1494
        %v1646 = vunpack.c.l.b16 %v1495
        %v1647 = vunpack.c.l.b16 %v1496
        %v1648 = vpack.c.b16 %v1577, %v1576
        %v1649 = vpack.c.b16 %v1579, %v1578
        %v1650 = vpack.c.b16 %v1581, %v1580
        %v1651 = vpack.c.b16 %v1583, %v1582
        %v1652 = vpack.c.b16 %v1585, %v1584
        %v1653 = vpack.c.b16 %v1587, %v1586
        %v1654 = vpack.c.b16 %v1589, %v1588
        %v1655 = vpack.c.b16 %v1591, %v1590
        %v1656 = vpack.c.b16 %v1593, %v1592
        %v1657 = vpack.c.b16 %v1595, %v1594
        %v1658 = vpack.c.b16 %v1597, %v1596
        %v1659 = vpack.c.b16 %v1599, %v1598
        %v1660 = vpack.c.b16 %v1601, %v1600
        %v1661 = vpack.c.b16 %v1603, %v1602
        %v1662 = vpack.c.b16 %v1605, %v1604
        %v1663 = vpack.c.b16 %v1607, %v1606
        %v1664 = vpack.c.b16 %v1609, %v1608
        %v1665 = vpack.c.b16 %v1611, %v1610
        %v1666 = vpack.c.b16 %v1613, %v1612
        %v1667 = vpack.c.b16 %v1615, %v1614
        %v1668 = vpack.c.b16 %v1617, %v1616
        %v1669 = vpack.c.b16 %v1619, %v1618
        %v1670 = vpack.c.b16 %v1621, %v1620
        %v1671 = vpack.c.b16 %v1623, %v1622
        %v1672 = vpack.c.b16 %v1625, %v1624
        %v1673 = vpack.c.b16 %v1627, %v1626
        %v1674 = vpack.c.b16 %v1629, %v1628
        %v1675 = vpack.c.b16 %v1631, %v1630
        %v1676 = vpack.c.b16 %v1633, %v1632
        %v1677 = vpack.c.b16 %v1635, %v1634
        %v1678 = vpack.c.b16 %v1637, %v1636
        %v1679 = vpack.c.b16 %v1639, %v1638
        %v1680 = vpack.c.b16 %v1641, %v1640
        %v1681 = vpack.c.b16 %v1643, %v1642
        %v1682 = vpack.c.b16 %v1645, %v1644
        %v1683 = vpack.c.b16 %v1647, %v1646
        %v1720 = vsel %vm1330, %v1244, 0
        %v1722 = vsel %vm1330, %v1247, 0
        %v1724 = vsel %vm1330, %v1250, 0
        %v1726 = vsel %vm1330, %v1253, 0
        %v1728 = vsel %vm1330, %v1256, 0
        %v1730 = vsel %vm1330, %v1259, 0
        %v1733 = vsel %vm1330, %v1292, 0
        %v1736 = vsel %vm1330, %v1329, 0
        %1738 = vmatprep.subr.bf16.mxu0 0
        %1739 = vmatpush1.bf16.msra.mxu0 %v1648
        %1740 = vmatprep.subr.bf16.mxu0 0
        %1741 = vmatpush1.bf16.msra.mxu0 %v1649
        %1742 = vmatprep.subr.bf16.mxu0 0
        %1743 = vmatpush1.bf16.msra.mxu0 %v1650
        %1744 = vmatprep.subr.bf16.mxu0 0
        %1745 = vmatpush1.bf16.msra.mxu0 %v1651
        %1746 = vmatprep.subr.bf16.mxu0 0
        %1747 = vmatpush1.bf16.msra.mxu0 %v1652
        %1748 = vmatprep.subr.bf16.mxu0 0
        %1749 = vmatpush1.bf16.msra.mxu0 %v1653
        %1750 = vmatprep.subr.bf16.mxu0 0
        %1751 = vmatpush1.bf16.msra.mxu0 %v1654
        %1752 = vmatprep.subr.bf16.mxu0 0
        %1753 = vmatpush1.bf16.msra.mxu0 %v1655
        %1754 = vmatprep.subr.bf16.mxu0 0
        %1755 = vmatpush1.bf16.msra.mxu0 %v1656
        %1756 = vmatprep.subr.bf16.mxu0 0
        %1757 = vmatpush1.bf16.msra.mxu0 %v1657
        %1758 = vmatprep.subr.bf16.mxu0 0
        %1759 = vmatpush1.bf16.msra.mxu0 %v1658
        %1760 = vmatprep.subr.bf16.mxu0 0
        %1761 = vmatpush1.bf16.msra.mxu0 %v1659
        %1762 = vmatprep.subr.bf16.mxu0 0
        %1763 = vmatpush1.bf16.msra.mxu0 %v1660
        %1764 = vmatprep.subr.bf16.mxu0 0
        %1765 = vmatpush1.bf16.msra.mxu0 %v1661
        %1766 = vmatprep.subr.bf16.mxu0 0
        %1767 = vmatpush1.bf16.msra.mxu0 %v1662
        %1768 = vmatprep.subr.bf16.mxu0 0
        %1769 = vmatpush1.bf16.msra.mxu0 %v1663
        %1770 = vmatprep.mubr.bf16.mxu0 %v1357
        %1771 = vmatmul.mubr.bf16.gmra.mrb[0].mxu0 %v1332
        %v1772 = vpop.f32.mrb[0].mxu0
        %v1773 = vadd.f32 %v1502, %v1772
        %v1774 = vpop.f32.mrb[0].mxu0
        %v1775 = vpop.f32.mrb[0].mxu0
        %v1776 = vadd.f32 %v1502, %v1775
        %v1777 = vpop.f32.mrb[0].mxu0
        %1778 = vmatprep.mubr.bf16.mxu0 %v1361
        %1779 = vmatmul.mubr.bf16.gmra.mrb[0].mxu0 %v1335
        %v1780 = vpop.f32.mrb[0].mxu0
        %v1781 = vadd.f32 %v1502, %v1780
        %v1782 = vpop.f32.mrb[0].mxu0
        %v1783 = vpop.f32.mrb[0].mxu0
        %v1784 = vadd.f32 %v1502, %v1783
        %v1785 = vpop.f32.mrb[0].mxu0
        %1786 = vmatprep.mubr.bf16.mxu0 %v1365
        %1787 = vmatmul.mubr.bf16.gmra.mrb[0].mxu0 %v1338
        %v1788 = vpop.f32.mrb[0].mxu0
        %v1789 = vadd.f32 %v1502, %v1788
        %v1790 = vpop.f32.mrb[0].mxu0
        %v1791 = vpop.f32.mrb[0].mxu0
        %v1792 = vadd.f32 %v1502, %v1791
        %v1793 = vpop.f32.mrb[0].mxu0
        %1794 = vmatprep.mubr.bf16.mxu0 %v1369
        %1795 = vmatmul.mubr.bf16.gmra.mrb[0].mxu0 %v1341
        %v1796 = vpop.f32.mrb[0].mxu0
        %v1797 = vadd.f32 %v1502, %v1796
        %v1798 = vpop.f32.mrb[0].mxu0
        %v1799 = vpop.f32.mrb[0].mxu0
        %v1800 = vadd.f32 %v1502, %v1799
        %v1801 = vpop.f32.mrb[0].mxu0
        %1802 = vmatprep.mubr.bf16.mxu0 %v1373
        %1803 = vmatmul.mubr.bf16.gmra.mrb[0].mxu0 %v1344
        %v1804 = vpop.f32.mrb[0].mxu0
        %v1805 = vadd.f32 %v1502, %v1804
        %v1806 = vpop.f32.mrb[0].mxu0
        %v1807 = vpop.f32.mrb[0].mxu0
        %v1808 = vadd.f32 %v1502, %v1807
        %v1809 = vpop.f32.mrb[0].mxu0
        %1810 = vmatprep.mubr.bf16.mxu0 %v1377
        %1811 = vmatmul.mubr.bf16.gmra.mrb[0].mxu0 %v1347
        %v1812 = vpop.f32.mrb[0].mxu0
        %v1813 = vadd.f32 %v1502, %v1812
        %v1814 = vpop.f32.mrb[0].mxu0
        %v1815 = vpop.f32.mrb[0].mxu0
        %v1816 = vadd.f32 %v1502, %v1815
        %v1817 = vpop.f32.mrb[0].mxu0
        %1818 = vmatprep.mubr.bf16.mxu0 %v1381
        %1819 = vmatmul.mubr.bf16.gmra.mrb[0].mxu0 %v1350
        %v1820 = vpop.f32.mrb[0].mxu0
        %v1821 = vadd.f32 %v1502, %v1820
        %v1822 = vpop.f32.mrb[0].mxu0
        %v1823 = vpop.f32.mrb[0].mxu0
        %v1824 = vadd.f32 %v1502, %v1823
        %v1825 = vpop.f32.mrb[0].mxu0
        %1826 = vmatprep.mubr.bf16.mxu0 %v1385
        %1827 = vmatmul.mubr.bf16.gmra.mrb[0].mxu0 %v1353
        %v1828 = vpop.f32.mrb[0].mxu0
        %v1829 = vadd.f32 %v1502, %v1828
        %v1830 = vpop.f32.mrb[0].mxu0
        %v1831 = vpop.f32.mrb[0].mxu0
        %v1832 = vadd.f32 %v1502, %v1831
        %v1833 = vpop.f32.mrb[0].mxu0
        %1834 = vdwg.mxu0
        %1835 = vmatprep.subr.bf16.mxu0 0
        %1836 = vmatpush1.bf16.msra.mxu0 %v1664
        %1837 = vmatprep.subr.bf16.mxu0 0
        %1838 = vmatpush1.bf16.msra.mxu0 %v1665
        %1839 = vmatprep.subr.bf16.mxu0 0
        %1840 = vmatpush1.bf16.msra.mxu0 %v1666
        %1841 = vmatprep.subr.bf16.mxu0 0
        %1842 = vmatpush1.bf16.msra.mxu0 %v1667
        %1843 = vmatprep.subr.bf16.mxu0 0
        %1844 = vmatpush1.bf16.msra.mxu0 %v1668
        %1845 = vmatprep.subr.bf16.mxu0 0
        %1846 = vmatpush1.bf16.msra.mxu0 %v1669
        %1847 = vmatprep.subr.bf16.mxu0 0
        %1848 = vmatpush1.bf16.msra.mxu0 %v1670
        %1849 = vmatprep.subr.bf16.mxu0 0
        %1850 = vmatpush1.bf16.msra.mxu0 %v1671
        %1851 = vmatprep.subr.bf16.mxu0 0
        %1852 = vmatpush1.bf16.msra.mxu0 %v1672
        %1853 = vmatprep.subr.bf16.mxu0 0
        %1854 = vmatpush1.bf16.msra.mxu0 %v1673
        %1855 = vmatprep.subr.bf16.mxu0 0
        %1856 = vmatpush1.bf16.msra.mxu0 %v1674
        %1857 = vmatprep.subr.bf16.mxu0 0
        %1858 = vmatpush1.bf16.msra.mxu0 %v1675
        %1859 = vmatprep.subr.bf16.mxu0 0
        %1860 = vmatpush1.bf16.msra.mxu0 %v1676
        %1861 = vmatprep.subr.bf16.mxu0 0
        %1862 = vmatpush1.bf16.msra.mxu0 %v1677
        %1863 = vmatprep.subr.bf16.mxu0 0
        %1864 = vmatpush1.bf16.msra.mxu0 %v1678
        %1865 = vmatprep.subr.bf16.mxu0 0
        %1866 = vmatpush1.bf16.msra.mxu0 %v1679
        %1867 = vmatprep.mubr.bf16.mxu0 %v1338
        %1868 = vmatmul.mubr.bf16.gmra.mrb[0].mxu0 %v1389
        %v1869 = vpop.f32.mrb[0].mxu0
        %v1870 = vadd.f32 %v1773, %v1869
        %v1871 = vpop.f32.mrb[0].mxu0
        %v1872 = vpop.f32.mrb[0].mxu0
        %v1873 = vadd.f32 %v1776, %v1872
        %v1874 = vpop.f32.mrb[0].mxu0
        %1875 = vmatprep.mubr.bf16.mxu0 %v1341
        %1876 = vmatmul.mubr.bf16.gmra.mrb[0].mxu0 %v1393
        %v1877 = vpop.f32.mrb[0].mxu0
        %v1878 = vadd.f32 %v1781, %v1877
        %v1879 = vpop.f32.mrb[0].mxu0
        %v1880 = vpop.f32.mrb[0].mxu0
        %v1881 = vadd.f32 %v1784, %v1880
        %v1882 = vpop.f32.mrb[0].mxu0
        %1883 = vmatprep.mubr.bf16.mxu0 %v1344
        %1884 = vmatmul.mubr.bf16.gmra.mrb[0].mxu0 %v1397
        %v1885 = vpop.f32.mrb[0].mxu0
        %v1886 = vadd.f32 %v1789, %v1885
        %v1887 = vpop.f32.mrb[0].mxu0
        %v1888 = vpop.f32.mrb[0].mxu0
        %v1889 = vadd.f32 %v1792, %v1888
        %v1890 = vpop.f32.mrb[0].mxu0
        %1891 = vmatprep.mubr.bf16.mxu0 %v1347
        %1892 = vmatmul.mubr.bf16.gmra.mrb[0].mxu0 %v1401
        %v1893 = vpop.f32.mrb[0].mxu0
        %v1894 = vadd.f32 %v1797, %v1893
        %v1895 = vpop.f32.mrb[0].mxu0
        %v1896 = vpop.f32.mrb[0].mxu0
        %v1897 = vadd.f32 %v1800, %v1896
        %v1898 = vpop.f32.mrb[0].mxu0
        %1899 = vmatprep.mubr.bf16.mxu0 %v1350
        %1900 = vmatmul.mubr.bf16.gmra.mrb[0].mxu0 %v1405
        %v1901 = vpop.f32.mrb[0].mxu0
        %v1902 = vadd.f32 %v1805, %v1901
        %v1903 = vpop.f32.mrb[0].mxu0
        %v1904 = vpop.f32.mrb[0].mxu0
        %v1905 = vadd.f32 %v1808, %v1904
        %v1906 = vpop.f32.mrb[0].mxu0
        %1907 = vmatprep.mubr.bf16.mxu0 %v1353
        %1908 = vmatmul.mubr.bf16.gmra.mrb[0].mxu0 %v1409
        %v1909 = vpop.f32.mrb[0].mxu0
        %v1910 = vadd.f32 %v1813, %v1909
        %v1911 = vpop.f32.mrb[0].mxu0
        %v1912 = vpop.f32.mrb[0].mxu0
        %v1913 = vadd.f32 %v1816, %v1912
        %v1914 = vpop.f32.mrb[0].mxu0
        %1915 = vmatprep.mubr.bf16.mxu0 %v1420
        %1916 = vmatmul.mubr.bf16.gmra.mrb[0].mxu0 %v1413
        %v1917 = vpop.f32.mrb[0].mxu0
        %v1918 = vadd.f32 %v1821, %v1917
        %v1919 = vpop.f32.mrb[0].mxu0
        %v1920 = vpop.f32.mrb[0].mxu0
        %v1921 = vadd.f32 %v1824, %v1920
        %v1922 = vpop.f32.mrb[0].mxu0
        %1923 = vmatprep.mubr.bf16.mxu0 %v1423
        %1924 = vmatmul.mubr.bf16.gmra.mrb[0].mxu0 %v1417
        %v1925 = vpop.f32.mrb[0].mxu0
        %v1926 = vadd.f32 %v1829, %v1925
        %v1927 = vpop.f32.mrb[0].mxu0
        %v1928 = vpop.f32.mrb[0].mxu0
        %v1929 = vadd.f32 %v1832, %v1928
        %v1930 = vpop.f32.mrb[0].mxu0
        %1931 = vdwg.mxu0
        %1932 = vmatprep.subr.bf16.mxu0 0
        %1933 = vmatpush1.bf16.msra.mxu0 %v1680
        %1934 = vmatprep.subr.bf16.mxu0 0
        %1935 = vmatpush1.bf16.msra.mxu0 %v1681
        %1936 = vmatprep.subr.bf16.mxu0 0
        %1937 = vmatpush1.bf16.msra.mxu0 %v1682
        %1938 = vmatprep.subr.bf16.mxu0 0
        %1939 = vmatpush1.bf16.msra.mxu0 %v1683
        %1940 = vmatprep.subr.bf16.mxu0 0
        %1941 = vmatpush1.bf16.msra.mxu0 0
        %1942 = vmatprep.subr.bf16.mxu0 0
        %1943 = vmatpush1.bf16.msra.mxu0 0
        %1944 = vmatprep.subr.bf16.mxu0 0
        %1945 = vmatpush1.bf16.msra.mxu0 0
        %1946 = vmatprep.subr.bf16.mxu0 0
        %1947 = vmatpush1.bf16.msra.mxu0 0
        %1948 = vmatprep.subr.bf16.mxu0 0
        %1949 = vmatpush1.bf16.msra.mxu0 0
        %1950 = vmatprep.subr.bf16.mxu0 0
        %1951 = vmatpush1.bf16.msra.mxu0 0
        %1952 = vmatprep.subr.bf16.mxu0 0
        %1953 = vmatpush1.bf16.msra.mxu0 0
        %1954 = vmatprep.subr.bf16.mxu0 0
        %1955 = vmatpush1.bf16.msra.mxu0 0
        %1956 = vmatprep.subr.bf16.mxu0 0
        %1957 = vmatpush1.bf16.msra.mxu0 0
        %1958 = vmatprep.subr.bf16.mxu0 0
        %1959 = vmatpush1.bf16.msra.mxu0 0
        %1960 = vmatprep.subr.bf16.mxu0 0
        %1961 = vmatpush1.bf16.msra.mxu0 0
        %1962 = vmatprep.subr.bf16.mxu0 0
        %1963 = vmatpush1.bf16.msra.mxu0 0
        %1964 = vmatprep.mubr.bf16.mxu0 0
        %1965 = vmatmul.mubr.bf16.gmra.mrb[0].mxu0 %v1720
        %v1966 = vpop.f32.mrb[0].mxu0
        %v1967 = vadd.f32 %v1870, %v1966
        %v1968 = vpop.f32.mrb[0].mxu0
        %v1969 = vpop.f32.mrb[0].mxu0
        %v1970 = vadd.f32 %v1873, %v1969
        %v1971 = vpop.f32.mrb[0].mxu0
        %1972 = vmatprep.mubr.bf16.mxu0 0
        %1973 = vmatmul.mubr.bf16.gmra.mrb[0].mxu0 %v1722
        %v1974 = vpop.f32.mrb[0].mxu0
        %v1975 = vadd.f32 %v1878, %v1974
        %v1976 = vpop.f32.mrb[0].mxu0
        %v1977 = vpop.f32.mrb[0].mxu0
        %v1978 = vadd.f32 %v1881, %v1977
        %v1979 = vpop.f32.mrb[0].mxu0
        %1980 = vmatprep.mubr.bf16.mxu0 0
        %1981 = vmatmul.mubr.bf16.gmra.mrb[0].mxu0 %v1724
        %v1982 = vpop.f32.mrb[0].mxu0
        %v1983 = vadd.f32 %v1886, %v1982
        %v1984 = vpop.f32.mrb[0].mxu0
        %v1985 = vpop.f32.mrb[0].mxu0
        %v1986 = vadd.f32 %v1889, %v1985
        %v1987 = vpop.f32.mrb[0].mxu0
        %1988 = vmatprep.mubr.bf16.mxu0 0
        %1989 = vmatmul.mubr.bf16.gmra.mrb[0].mxu0 %v1726
        %v1990 = vpop.f32.mrb[0].mxu0
        %v1991 = vadd.f32 %v1894, %v1990
        %v1992 = vpop.f32.mrb[0].mxu0
        %v1993 = vpop.f32.mrb[0].mxu0
        %v1994 = vadd.f32 %v1897, %v1993
        %v1995 = vpop.f32.mrb[0].mxu0
        %1996 = vmatprep.mubr.bf16.mxu0 0
        %1997 = vmatmul.mubr.bf16.gmra.mrb[0].mxu0 %v1728
        %v1998 = vpop.f32.mrb[0].mxu0
        %v1999 = vadd.f32 %v1902, %v1998
        %v2000 = vpop.f32.mrb[0].mxu0
        %v2001 = vpop.f32.mrb[0].mxu0
        %v2002 = vadd.f32 %v1905, %v2001
        %v2003 = vpop.f32.mrb[0].mxu0
        %2004 = vmatprep.mubr.bf16.mxu0 0
        %2005 = vmatmul.mubr.bf16.gmra.mrb[0].mxu0 %v1730
        %v2006 = vpop.f32.mrb[0].mxu0
        %v2007 = vadd.f32 %v1910, %v2006
        %v2008 = vpop.f32.mrb[0].mxu0
        %v2009 = vpop.f32.mrb[0].mxu0
        %v2010 = vadd.f32 %v1913, %v2009
        %v2011 = vpop.f32.mrb[0].mxu0
        %2012 = vmatprep.mubr.bf16.mxu0 0
        %2013 = vmatmul.mubr.bf16.gmra.mrb[0].mxu0 %v1733
        %v2014 = vpop.f32.mrb[0].mxu0
        %v2015 = vadd.f32 %v1918, %v2014
        %v2016 = vpop.f32.mrb[0].mxu0
        %v2017 = vpop.f32.mrb[0].mxu0
        %v2018 = vadd.f32 %v1921, %v2017
        %v2019 = vpop.f32.mrb[0].mxu0
        %2020 = vmatprep.mubr.bf16.mxu0 0
        %2021 = vmatmul.mubr.bf16.gmra.mrb[0].mxu0 %v1736
        %v2022 = vpop.f32.mrb[0].mxu0
        %v2023 = vadd.f32 %v1926, %v2022
        %v2024 = vpop.f32.mrb[0].mxu0
        %v2025 = vpop.f32.mrb[0].mxu0
        %v2026 = vadd.f32 %v1929, %v2025
        %v2027 = vpop.f32.mrb[0].mxu0
        %2028 = vdwg.mxu0
        %v2029 = vmax.f32 %v1967, 0.0
        %v2030 = vmax.f32 %v1970, 0.0
        %v2031 = vmax.f32 %v1975, 0.0
        %v2032 = vmax.f32 %v1978, 0.0
        %v2033 = vmax.f32 %v1983, 0.0
        %v2034 = vmax.f32 %v1986, 0.0
        %v2035 = vmax.f32 %v1991, 0.0
        %v2036 = vmax.f32 %v1994, 0.0
        %v2037 = vmax.f32 %v1999, 0.0
        %v2038 = vmax.f32 %v2002, 0.0
        %v2039 = vmax.f32 %v2007, 0.0
        %v2040 = vmax.f32 %v2010, 0.0
        %v2041 = vmax.f32 %v2015, 0.0
        %v2042 = vmax.f32 %v2018, 0.0
        %v2043 = vmax.f32 %v2023, 0.0
        %v2044 = vmax.f32 %v2026, 0.0
        %v2045 = vpack.c.bf16 %v2030, %v2029
        %v2046 = vpack.c.bf16 %v2032, %v2031
        %v2047 = vpack.c.bf16 %v2034, %v2033
        %v2048 = vpack.c.bf16 %v2036, %v2035
        %v2049 = vpack.c.bf16 %v2038, %v2037
        %v2050 = vpack.c.bf16 %v2040, %v2039
        %v2051 = vpack.c.bf16 %v2042, %v2041
        %v2052 = vpack.c.bf16 %v2044, %v2043
        %v2053 = vld [vmem:[%s7] sm:$0xff]
        %v2054 = vld [vmem:[%s7 + $0x8] sm:$0xff]
        %v2055 = vld [vmem:[%s7 + $0x10] sm:$0xff]
        %v2056 = vld [vmem:[%s7 + $0x18] sm:$0xff]
        %v2057 = vld [vmem:[%s7 + $0x20] sm:$0xff]
        %v2058 = vld [vmem:[%s7 + $0x28] sm:$0xff]
        %v2059 = vld [vmem:[%s7 + $0x30] sm:$0xff]
        %v2060 = vld [vmem:[%s7 + $0x38] sm:$0xff]
        %v2061 = vld [vmem:[%s8] sm:$0x3]
        %v2063 = vlaneseq
        %v2064 = vshrl.u32 %v2063, 7
        %v2065 = vsub.s32 0, %v2064
        %v2066 = vrot.slane %v2061, %v2065
        %v2067 = vlaneseq
        %v2068 = vshrl.u32 %v2067, 7
        %v2069 = vsub.s32 1, %v2068
        %v2070 = vrot.slane %v2061, %v2069
        %v2081 = vunpack.c.l.b16 %v2053
        %v2082 = vunpack.c.h.b16 %v2053
        %v2083 = vunpack.c.l.b16 %v2054
        %v2084 = vunpack.c.h.b16 %v2054
        %v2085 = vunpack.c.l.b16 %v2055
        %v2086 = vunpack.c.h.b16 %v2055
        %v2087 = vunpack.c.l.b16 %v2056
        %v2088 = vunpack.c.h.b16 %v2056
        %v2089 = vunpack.c.l.b16 %v2057
        %v2090 = vunpack.c.h.b16 %v2057
        %v2091 = vunpack.c.l.b16 %v2058
        %v2092 = vunpack.c.h.b16 %v2058
        %v2093 = vunpack.c.l.b16 %v2059
        %v2094 = vunpack.c.h.b16 %v2059
        %v2095 = vunpack.c.l.b16 %v2060
        %v2096 = vunpack.c.h.b16 %v2060
        %v2097 = vpack.c.b16 %v2083, %v2081
        %v2098 = vpack.c.b16 %v2084, %v2082
        %v2099 = vpack.c.b16 %v2087, %v2085
        %v2100 = vpack.c.b16 %v2088, %v2086
        %v2101 = vpack.c.b16 %v2091, %v2089
        %v2102 = vpack.c.b16 %v2092, %v2090
        %v2103 = vpack.c.b16 %v2095, %v2093
        %v2104 = vpack.c.b16 %v2096, %v2094
        %v2114 = vsel %vm1330, %v2045, 0
        %v2117 = vsel %vm1330, %v2046, 0
        %v2120 = vsel %vm1330, %v2047, 0
        %v2123 = vsel %vm1330, %v2048, 0
        %v2126 = vsel %vm1330, %v2049, 0
        %v2129 = vsel %vm1330, %v2050, 0
        %v2132 = vsel %vm1330, %v2051, 0
        %v2135 = vsel %vm1330, %v2052, 0
        %2137 = vmatprep.subr.bf16.mxu0 %v2098
        %2138 = vmatpush1.bf16.msra.mxu0 %v2097
        %2139 = vmatprep.subr.bf16.mxu0 %v2100
        %2140 = vmatpush1.bf16.msra.mxu0 %v2099
        %2141 = vmatprep.subr.bf16.mxu0 %v2102
        %2142 = vmatpush1.bf16.msra.mxu0 %v2101
        %2143 = vmatprep.subr.bf16.mxu0 %v2104
        %2144 = vmatpush1.bf16.msra.mxu0 %v2103
        %2145 = vmatprep.subr.bf16.mxu0 0
        %2146 = vmatpush1.bf16.msra.mxu0 0
        %2147 = vmatprep.subr.bf16.mxu0 0
        %2148 = vmatpush1.bf16.msra.mxu0 0
        %2149 = vmatprep.subr.bf16.mxu0 0
        %2150 = vmatpush1.bf16.msra.mxu0 0
        %2151 = vmatprep.subr.bf16.mxu0 0
        %2152 = vmatpush1.bf16.msra.mxu0 0
        %2153 = vmatprep.subr.bf16.mxu0 0
        %2154 = vmatpush1.bf16.msra.mxu0 0
        %2155 = vmatprep.subr.bf16.mxu0 0
        %2156 = vmatpush1.bf16.msra.mxu0 0
        %2157 = vmatprep.subr.bf16.mxu0 0
        %2158 = vmatpush1.bf16.msra.mxu0 0
        %2159 = vmatprep.subr.bf16.mxu0 0
        %2160 = vmatpush1.bf16.msra.mxu0 0
        %2161 = vmatprep.subr.bf16.mxu0 0
        %2162 = vmatpush1.bf16.msra.mxu0 0
        %2163 = vmatprep.subr.bf16.mxu0 0
        %2164 = vmatpush1.bf16.msra.mxu0 0
        %2165 = vmatprep.subr.bf16.mxu0 0
        %2166 = vmatpush1.bf16.msra.mxu0 0
        %2167 = vmatprep.subr.bf16.mxu0 0
        %2168 = vmatpush1.bf16.msra.mxu0 0
        %2169 = vmatprep.mubr.bf16.mxu0 0
        %2170 = vmatmul.mubr.bf16.gmra.mrb[0].mxu0 %v2114
        %v2171 = vpop.f32.mrb[0].mxu0
        %v2172 = vadd.f32 %v2066, %v2171
        %v2173 = vpop.f32.mrb[0].mxu0
        %v2174 = vadd.f32 %v2070, %v2173
        %v2175 = vpop.f32.mrb[0].mxu0
        %v2176 = vadd.f32 %v2066, %v2175
        %v2177 = vpop.f32.mrb[0].mxu0
        %v2178 = vadd.f32 %v2070, %v2177
        %2179 = vmatprep.mubr.bf16.mxu0 0
        %2180 = vmatmul.mubr.bf16.gmra.mrb[0].mxu0 %v2117
        %v2181 = vpop.f32.mrb[0].mxu0
        %v2182 = vadd.f32 %v2066, %v2181
        %v2183 = vpop.f32.mrb[0].mxu0
        %v2184 = vadd.f32 %v2070, %v2183
        %v2185 = vpop.f32.mrb[0].mxu0
        %v2186 = vadd.f32 %v2066, %v2185
        %v2187 = vpop.f32.mrb[0].mxu0
        %v2188 = vadd.f32 %v2070, %v2187
        %2189 = vmatprep.mubr.bf16.mxu0 0
        %2190 = vmatmul.mubr.bf16.gmra.mrb[0].mxu0 %v2120
        %v2191 = vpop.f32.mrb[0].mxu0
        %v2192 = vadd.f32 %v2066, %v2191
        %v2193 = vpop.f32.mrb[0].mxu0
        %v2194 = vadd.f32 %v2070, %v2193
        %v2195 = vpop.f32.mrb[0].mxu0
        %v2196 = vadd.f32 %v2066, %v2195
        %v2197 = vpop.f32.mrb[0].mxu0
        %v2198 = vadd.f32 %v2070, %v2197
        %2199 = vmatprep.mubr.bf16.mxu0 0
        %2200 = vmatmul.mubr.bf16.gmra.mrb[0].mxu0 %v2123
        %v2201 = vpop.f32.mrb[0].mxu0
        %v2202 = vadd.f32 %v2066, %v2201
        %v2203 = vpop.f32.mrb[0].mxu0
        %v2204 = vadd.f32 %v2070, %v2203
        %v2205 = vpop.f32.mrb[0].mxu0
        %v2206 = vadd.f32 %v2066, %v2205
        %v2207 = vpop.f32.mrb[0].mxu0
        %v2208 = vadd.f32 %v2070, %v2207
        %2209 = vmatprep.mubr.bf16.mxu0 0
        %2210 = vmatmul.mubr.bf16.gmra.mrb[0].mxu0 %v2126
        %v2211 = vpop.f32.mrb[0].mxu0
        %v2212 = vadd.f32 %v2066, %v2211
        %v2213 = vpop.f32.mrb[0].mxu0
        %v2214 = vadd.f32 %v2070, %v2213
        %v2215 = vpop.f32.mrb[0].mxu0
        %v2216 = vadd.f32 %v2066, %v2215
        %v2217 = vpop.f32.mrb[0].mxu0
        %v2218 = vadd.f32 %v2070, %v2217
        %2219 = vmatprep.mubr.bf16.mxu0 0
        %2220 = vmatmul.mubr.bf16.gmra.mrb[0].mxu0 %v2129
        %v2221 = vpop.f32.mrb[0].mxu0
        %v2222 = vadd.f32 %v2066, %v2221
        %v2223 = vpop.f32.mrb[0].mxu0
        %v2224 = vadd.f32 %v2070, %v2223
        %v2225 = vpop.f32.mrb[0].mxu0
        %v2226 = vadd.f32 %v2066, %v2225
        %v2227 = vpop.f32.mrb[0].mxu0
        %v2228 = vadd.f32 %v2070, %v2227
        %2229 = vmatprep.mubr.bf16.mxu0 0
        %2230 = vmatmul.mubr.bf16.gmra.mrb[0].mxu0 %v2132
        %v2231 = vpop.f32.mrb[0].mxu0
        %v2232 = vadd.f32 %v2066, %v2231
        %v2233 = vpop.f32.mrb[0].mxu0
        %v2234 = vadd.f32 %v2070, %v2233
        %v2235 = vpop.f32.mrb[0].mxu0
        %v2236 = vadd.f32 %v2066, %v2235
        %v2237 = vpop.f32.mrb[0].mxu0
        %v2238 = vadd.f32 %v2070, %v2237
        %2239 = vmatprep.mubr.bf16.mxu0 0
        %2240 = vmatmul.mubr.bf16.gmra.mrb[0].mxu0 %v2135
        %v2241 = vpop.f32.mrb[0].mxu0
        %v2242 = vadd.f32 %v2066, %v2241
        %v2243 = vpop.f32.mrb[0].mxu0
        %v2244 = vadd.f32 %v2070, %v2243
        %v2245 = vpop.f32.mrb[0].mxu0
        %v2246 = vadd.f32 %v2066, %v2245
        %v2247 = vpop.f32.mrb[0].mxu0
        %v2248 = vadd.f32 %v2070, %v2247
        %2249 = vdwg.mxu0
        %v2250 = vunpack.c.l.bf16 %v550
        %v2251 = vunpack.c.h.bf16 %v550
        %v2252 = vunpack.c.l.bf16 %v551
        %v2253 = vunpack.c.h.bf16 %v551
        %v2254 = vunpack.c.l.bf16 %v552
        %v2255 = vunpack.c.h.bf16 %v552
        %v2256 = vunpack.c.l.bf16 %v553
        %v2257 = vunpack.c.h.bf16 %v553
        %v2258 = vunpack.c.l.bf16 %v554
        %v2259 = vunpack.c.h.bf16 %v554
        %v2260 = vunpack.c.l.bf16 %v555
        %v2261 = vunpack.c.h.bf16 %v555
        %v2262 = vunpack.c.l.bf16 %v556
        %v2263 = vunpack.c.h.bf16 %v556
        %v2264 = vunpack.c.l.bf16 %v557
        %v2265 = vunpack.c.h.bf16 %v557
        %v2266 = vunpack.c.l.bf16 %v558
        %v2267 = vunpack.c.h.bf16 %v558
        %v2268 = vunpack.c.l.bf16 %v559
        %v2269 = vunpack.c.h.bf16 %v559
        %v2270 = vunpack.c.l.bf16 %v560
        %v2271 = vunpack.c.h.bf16 %v560
        %v2272 = vunpack.c.l.bf16 %v561
        %v2273 = vunpack.c.h.bf16 %v561
        %v2274 = vunpack.c.l.bf16 %v562
        %v2275 = vunpack.c.h.bf16 %v562
        %v2276 = vunpack.c.l.bf16 %v563
        %v2277 = vunpack.c.h.bf16 %v563
        %v2278 = vunpack.c.l.bf16 %v564
        %v2279 = vunpack.c.h.bf16 %v564
        %v2280 = vunpack.c.l.bf16 %v565
        %v2281 = vunpack.c.h.bf16 %v565
        %v2282 = vadd.f32 %v2172, %v2250
        %v2283 = vadd.f32 %v2174, %v2251
        %v2284 = vadd.f32 %v2176, %v2252
        %v2285 = vadd.f32 %v2178, %v2253
        %v2286 = vadd.f32 %v2182, %v2254
        %v2287 = vadd.f32 %v2184, %v2255
        %v2288 = vadd.f32 %v2186, %v2256
        %v2289 = vadd.f32 %v2188, %v2257
        %v2290 = vadd.f32 %v2192, %v2258
        %v2291 = vadd.f32 %v2194, %v2259
        %v2292 = vadd.f32 %v2196, %v2260
        %v2293 = vadd.f32 %v2198, %v2261
        %v2294 = vadd.f32 %v2202, %v2262
        %v2295 = vadd.f32 %v2204, %v2263
        %v2296 = vadd.f32 %v2206, %v2264
        %v2297 = vadd.f32 %v2208, %v2265
        %v2298 = vadd.f32 %v2212, %v2266
        %v2299 = vadd.f32 %v2214, %v2267
        %v2300 = vadd.f32 %v2216, %v2268
        %v2301 = vadd.f32 %v2218, %v2269
        %v2302 = vadd.f32 %v2222, %v2270
        %v2303 = vadd.f32 %v2224, %v2271
        %v2304 = vadd.f32 %v2226, %v2272
        %v2305 = vadd.f32 %v2228, %v2273
        %v2306 = vadd.f32 %v2232, %v2274
        %v2307 = vadd.f32 %v2234, %v2275
        %v2308 = vadd.f32 %v2236, %v2276
        %v2309 = vadd.f32 %v2238, %v2277
        %v2310 = vadd.f32 %v2242, %v2278
        %v2311 = vadd.f32 %v2244, %v2279
        %v2312 = vadd.f32 %v2246, %v2280
        %v2313 = vadd.f32 %v2248, %v2281
        %v2314 = vmax.f32 %v2282, 0.0
        %v2315 = vmax.f32 %v2283, 0.0
        %v2316 = vmax.f32 %v2284, 0.0
        %v2317 = vmax.f32 %v2285, 0.0
        %v2318 = vmax.f32 %v2286, 0.0
        %v2319 = vmax.f32 %v2287, 0.0
        %v2320 = vmax.f32 %v2288, 0.0
        %v2321 = vmax.f32 %v2289, 0.0
        %v2322 = vmax.f32 %v2290, 0.0
        %v2323 = vmax.f32 %v2291, 0.0
        %v2324 = vmax.f32 %v2292, 0.0
        %v2325 = vmax.f32 %v2293, 0.0
        %v2326 = vmax.f32 %v2294, 0.0
        %v2327 = vmax.f32 %v2295, 0.0
        %v2328 = vmax.f32 %v2296, 0.0
        %v2329 = vmax.f32 %v2297, 0.0
        %v2330 = vmax.f32 %v2298, 0.0
        %v2331 = vmax.f32 %v2299, 0.0
        %v2332 = vmax.f32 %v2300, 0.0
        %v2333 = vmax.f32 %v2301, 0.0
        %v2334 = vmax.f32 %v2302, 0.0
        %v2335 = vmax.f32 %v2303, 0.0
        %v2336 = vmax.f32 %v2304, 0.0
        %v2337 = vmax.f32 %v2305, 0.0
        %v2338 = vmax.f32 %v2306, 0.0
        %v2339 = vmax.f32 %v2307, 0.0
        %v2340 = vmax.f32 %v2308, 0.0
        %v2341 = vmax.f32 %v2309, 0.0
        %v2342 = vmax.f32 %v2310, 0.0
        %v2343 = vmax.f32 %v2311, 0.0
        %v2344 = vmax.f32 %v2312, 0.0
        %v2345 = vmax.f32 %v2313, 0.0
        %v2346 = vpack.c.bf16 %v2316, %v2314
        %v2347 = vpack.c.bf16 %v2317, %v2315
        %v2348 = vpack.c.bf16 %v2320, %v2318
        %v2349 = vpack.c.bf16 %v2321, %v2319
        %v2350 = vpack.c.bf16 %v2324, %v2322
        %v2351 = vpack.c.bf16 %v2325, %v2323
        %v2352 = vpack.c.bf16 %v2328, %v2326
        %v2353 = vpack.c.bf16 %v2329, %v2327
        %v2354 = vpack.c.bf16 %v2332, %v2330
        %v2355 = vpack.c.bf16 %v2333, %v2331
        %v2356 = vpack.c.bf16 %v2336, %v2334
        %v2357 = vpack.c.bf16 %v2337, %v2335
        %v2358 = vpack.c.bf16 %v2340, %v2338
        %v2359 = vpack.c.bf16 %v2341, %v2339
        %v2360 = vpack.c.bf16 %v2344, %v2342
        %v2361 = vpack.c.bf16 %v2345, %v2343
        %v2378 = vunpack.c.l.b16 %v2346
        %v2379 = vunpack.c.l.b16 %v2347
        %v2380 = vunpack.c.h.b16 %v2346
        %v2381 = vunpack.c.h.b16 %v2347
        %v2382 = vunpack.c.l.b16 %v2348
        %v2383 = vunpack.c.l.b16 %v2349
        %v2384 = vunpack.c.h.b16 %v2348
        %v2385 = vunpack.c.h.b16 %v2349
        %v2386 = vunpack.c.l.b16 %v2350
        %v2387 = vunpack.c.l.b16 %v2351
        %v2388 = vunpack.c.h.b16 %v2350
        %v2389 = vunpack.c.h.b16 %v2351
        %v2390 = vunpack.c.l.b16 %v2352
        %v2391 = vunpack.c.l.b16 %v2353
        %v2392 = vunpack.c.h.b16 %v2352
        %v2393 = vunpack.c.h.b16 %v2353
        %v2394 = vunpack.c.l.b16 %v2354
        %v2395 = vunpack.c.l.b16 %v2355
        %v2396 = vunpack.c.h.b16 %v2354
        %v2397 = vunpack.c.h.b16 %v2355
        %v2398 = vunpack.c.l.b16 %v2356
        %v2399 = vunpack.c.l.b16 %v2357
        %v2400 = vunpack.c.h.b16 %v2356
        %v2401 = vunpack.c.h.b16 %v2357
        %v2402 = vunpack.c.l.b16 %v2358
        %v2403 = vunpack.c.l.b16 %v2359
        %v2404 = vunpack.c.h.b16 %v2358
        %v2405 = vunpack.c.h.b16 %v2359
        %v2406 = vunpack.c.l.b16 %v2360
        %v2407 = vunpack.c.l.b16 %v2361
        %v2408 = vunpack.c.h.b16 %v2360
        %v2409 = vunpack.c.h.b16 %v2361
        %v2410 = vpack.c.b16 %v2379, %v2378
        %v2411 = vpack.c.b16 %v2381, %v2380
        %v2412 = vpack.c.b16 %v2383, %v2382
        %v2413 = vpack.c.b16 %v2385, %v2384
        %v2414 = vpack.c.b16 %v2387, %v2386
        %v2415 = vpack.c.b16 %v2389, %v2388
        %v2416 = vpack.c.b16 %v2391, %v2390
        %v2417 = vpack.c.b16 %v2393, %v2392
        %v2418 = vpack.c.b16 %v2395, %v2394
        %v2419 = vpack.c.b16 %v2397, %v2396
        %v2420 = vpack.c.b16 %v2399, %v2398
        %v2421 = vpack.c.b16 %v2401, %v2400
        %v2422 = vpack.c.b16 %v2403, %v2402
        %v2423 = vpack.c.b16 %v2405, %v2404
        %v2424 = vpack.c.b16 %v2407, %v2406
        %v2425 = vpack.c.b16 %v2409, %v2408
        %2442 = vst [vmem:[%s514] sm:$0xff] %v2410
        %2443 = vst [vmem:[%s514 + $0x8] sm:$0xff] %v2411
        %2444 = vst [vmem:[%s514 + $0x10] sm:$0xff] %v2412
        %2445 = vst [vmem:[%s514 + $0x18] sm:$0xff] %v2413
        %2446 = vst [vmem:[%s514 + $0x20] sm:$0xff] %v2414
        %2447 = vst [vmem:[%s514 + $0x28] sm:$0xff] %v2415
        %2448 = vst [vmem:[%s514 + $0x30] sm:$0xff] %v2416
        %2449 = vst [vmem:[%s514 + $0x38] sm:$0xff] %v2417
        %2450 = vst [vmem:[%s514 + $0x40] sm:$0xff] %v2418
        %2451 = vst [vmem:[%s514 + $0x48] sm:$0xff] %v2419
        %2452 = vst [vmem:[%s514 + $0x50] sm:$0xff] %v2420
        %2453 = vst [vmem:[%s514 + $0x58] sm:$0xff] %v2421
        %2454 = vst [vmem:[%s514 + $0x60] sm:$0xff] %v2422
        %2455 = vst [vmem:[%s514 + $0x68] sm:$0xff] %v2423
        %2456 = vst [vmem:[%s514 + $0x70] sm:$0xff] %v2424
        %2457 = vst [vmem:[%s514 + $0x78] sm:$0xff] %v2425
        %s2458 = smul.u32 8, %s32
        %p2459 = scmp.lt.s32.totalorder %s31, 1
        %s2460 = scalar_select %p2459, %s31, 1
        %p2461 = scmp.lt.s32.totalorder %s2458, 15
        %s2462 = scalar_select %p2461, %s2458, 15
        %s2463 = smul.addr %s2462, 4
        %s2464 = smul.addr %s2460, 64
        %s2465 = sadd.s32 %s2463, %s2464
        %s2466 = smul.addr %s2465, 4
        %s2467 = scalar_lea.vmem %s9, %s2466
        // Predicated region
        $region73: #{pallas_fwd.2} parent=55 // pred_check
          %p2468 = pneg %p285
        $region74: #{pallas_fwd.2} parent=55 // pred_check_branch
          %2470 = sbr.rel (%p2468) target = $region76
        $region75: #{pallas_fwd.2} parent=55 // pred_region
          %s2471 = smul.u32 8, %s32
        $region76: #{pallas_fwd.2} parent=55 // pred_fallthru
          _
      $region56: #{pallas_fwd.2} parent=5 // pred_fallthru
        _
      %p2472 = scmp.le.s32.totalorder 2, %s22
      // Predicated region
      $region77: #{pallas_fwd.2} parent=5 // pred_check
        %p2473 = pneg %p2472
      $region78: #{pallas_fwd.2} parent=5 // pred_check_branch
        %2475 = sbr.rel (%p2473) target = $region80
      $region79: #{pallas_fwd.2} parent=5 // pred_region
        %s2476 = ssub.s32 %s22, 2
        // Predicated region
        $region81: #{pallas_fwd.2} parent=79 // pred_check
          %p2477 = pneg %p291
        $region82: #{pallas_fwd.2} parent=79 // pred_check_branch
          %2479 = sbr.rel (%p2477) target = $region84
        $region83: #{pallas_fwd.2} parent=79 // pred_region
          %s2480 = smul.u32 8, %s34
          %p2481 = scmp.lt.s32.totalorder %s33, 1
          %s2482 = scalar_select %p2481, %s33, 1
          %p2483 = scmp.lt.s32.totalorder %s2480, 15
          %s2484 = scalar_select %p2483, %s2480, 15
          %s2485 = smul.addr %s2484, 4
          %s2486 = smul.addr %s2482, 64
          %s2487 = sadd.s32 %s2485, %s2486
          %s2488 = smul.addr %s2487, 4
          %s2489 = scalar_lea.vmem %s9, %s2488
        $region84: #{pallas_fwd.2} parent=79 // pred_fallthru
          _
      $region80: #{pallas_fwd.2} parent=5 // pred_fallthru
        _
    $region6: #{pallas_fwd.2} parent=1 // loop_footer
      %s26 = sadd.s32 1, %s22
    $region7: #{pallas_fwd.2} parent=1 // loop_footer_branch
      %21 = sbr.rel target = $region3
    $region8: #{pallas_fwd.2} parent=1 // loop_exit
      _
    %2490 = vsyncpa [#allocation3], 1
    %s2491 = scalar_lea.sflag [#allocation3], 1
    %2492 = vsyncpa %s2491, 1
    %2493 = vsyncpa [#allocation5], 1
    %s2494 = scalar_lea.sflag [#allocation5], 1
    %2495 = vsyncpa %s2494, 1
    %2496 = vsyncpa [#allocation8], 1

// kernel: pallas_fwd.3
$region0: #{pallas_fwd.3}
  #allocation0 [shape = 'u32[]', space=smem, size = 0x4, offset = 0x4, fixed_abs, tag = 'smem constant byte address 0x4 - core index']
  #allocation1 [shape = 'u32[144,128]{1,0:T(1,128)}', space=vmem, size = 0x12000, scoped, tag = 'internal scratch']
  %s0 = inlined_call_operand.vmem [shape: bf16[2,16,16,256], index: 0, kind: input, shape index: {}, may-alias: {0,1,2}]
  %s1 = inlined_call_operand.vmem [shape: bf16[2,16,16,256], index: 1, kind: input, shape index: {}, may-alias: {0,1,2}]
  %s2 = inlined_call_operand.vmem [shape: bf16[2,16,16,256], index: 2, kind: input, shape index: {}, may-alias: {0,1,2}]
  %s3 = inlined_call_operand.vmem [shape: bf16[256,64], index: 3, kind: input, shape index: {}]
  %s4 = inlined_call_operand.vmem [shape: f32[1,64], index: 4, kind: input, shape index: {}]
  %s5 = inlined_call_operand.vmem [shape: bf16[576,64], index: 5, kind: input, shape index: {}]
  %s6 = inlined_call_operand.vmem [shape: f32[1,64], index: 6, kind: input, shape index: {}]
  %s7 = inlined_call_operand.vmem [shape: bf16[64,256], index: 7, kind: input, shape index: {}]
  %s8 = inlined_call_operand.vmem [shape: f32[1,256], index: 8, kind: input, shape index: {}]
  %s9 = inlined_call_operand.hbm [shape: bf16[2,16,16,256], index: 9, kind: output, shape index: {}]
  %s10 = sld [smem:[#allocation0]]
  $region69: #{pallas_fwd.3} parent=0
    _
  %s12 = ssub.s32 1, %s10
  %s13 = scalar_select 0, %s12, %s10
  $region1: #{pallas_fwd.3} parent=0
    #allocation2 [shape = 'u8[131072]{0}', space=vmem, size = 0x20000, scoped, tag = 'output window, operand 0']
    #allocation3 [shape = 's32[2]{0}', space=sflag, size = 0x8, scoped, tag = 'scoped memory for pallas_fwd.3']
    %14 = vsyncpa [#allocation3], 0
    %s15 = scalar_lea.sflag [#allocation3], 1
    %16 = vsyncpa %s15, 0
    loop: start=0, step=1, limit=6
    $region2: #{pallas_fwd.3} parent=1 // loop_pre_header
      _
    $region3: #{pallas_fwd.3} parent=1 // loop_header
      %s18 = sphi 0, %s22
      %p19 = scmp.ge.s32.totalorder %s18, 6
      %s25 = sphi 0, %s37
      %s26 = sphi 0, %s33
      %s27 = sphi 0, %s25
      %s28 = sphi 0, %s26
      %s29 = sphi 0, %s27
      %s30 = sphi 0, %s28
      %s50 = sphi 0, %s52
      %s53 = sphi 0, %s50
      %s54 = sphi 0, %s53
      %s70 = sphi 0, %s54
      %s78 = sphi 0, %s80
      %s81 = sphi 0, %s78
      %s82 = sphi 0, %s81
      %s98 = sphi 0, %s82
      %s114 = sphi 0, %s116
      %s117 = sphi 0, %s114
      %s118 = sphi 0, %s117
      %s134 = sphi 0, %s118
      %s138 = sphi 0, %s138
      %s140 = sphi 0, %s138
      %s141 = sphi 0, %s140
      %s155 = sphi 0, %s141
      %s159 = sphi 0, %s159
      %s161 = sphi 0, %s159
      %s162 = sphi 0, %s161
      %s176 = sphi 0, %s162
      %s180 = sphi 0, %s180
      %s182 = sphi 0, %s180
      %s183 = sphi 0, %s182
      %s197 = sphi 0, %s183
      %s201 = sphi 0, %s201
      %s203 = sphi 0, %s201
      %s204 = sphi 0, %s203
      %s218 = sphi 0, %s204
      %s222 = sphi 0, %s222
      %s224 = sphi 0, %s222
      %s225 = sphi 0, %s224
      %s239 = sphi 0, %s225
      %s243 = sphi 0, %s243
      %s245 = sphi 0, %s243
      %s246 = sphi 0, %s245
      %s260 = sphi 0, %s246
      %s268 = sphi 0, %s270
      %s271 = sphi 0, %s268
      %s272 = sphi 0, %s271
      %s288 = sphi 0, %s272
    $region4: #{pallas_fwd.3} parent=1 // loop_header_branch
      %21 = sbr.rel (%p19) target = $region8
    $region5: #{pallas_fwd.3} parent=1 // loop_body
      %s23 = ssub.s32 %s18, 1
      %s24 = ssub.s32 %s18, 2
      %s31 = sadd.s32 1, %s26
      %p32 = scmp.ge.s32.totalorder %s31, 2
      %s33 = scalar_select %p32, 0, %s31
      %s34 = sadd.s32 1, %s25
      %s35 = scalar_select %p32, %s34, %s25
      %p36 = scmp.ge.s32.totalorder %s35, 2
      %s37 = scalar_select %p36, 0, %s35
      %s38 = smul.u32 %s26, 8
      %s39 = ssub.s32 %s38, 1
      %p40 = scmp.gt.s32.totalorder %s39, 0
      %s41 = scalar_select %p40, %s39, 0
      %s42 = smul.u32 %s33, 8
      %s43 = ssub.s32 %s42, 1
      %p44 = scmp.gt.s32.totalorder %s43, 0
      %s45 = scalar_select %p44, %s43, 0
      %s46 = ssub.s32 %s25, %s37
      %s47 = ssub.s32 %s41, %s45
      %s48 = sor.u32 %s46, %s47
      %p49 = scmp.eq.s32.totalorder %s48, 0
      %s51 = sadd.s32 %s50, 1
      %s52 = scalar_select %p49, %s50, %s51
      %p55 = pneg %p49
      %p56 = scmp.eq.s32.totalorder %s18, 3
      %p57 = por %p55, %p56
      %p58 = scmp.ne.s32.totalorder %s50, %s53
      %p59 = scmp.eq.s32.totalorder %s18, 0
      %p60 = por %p58, %p59
      %p61 = scmp.ne.s32.totalorder %s50, %s53
      %p62 = scmp.eq.s32.totalorder %s23, 3
      %p63 = por %p61, %p62
      %p64 = scmp.ne.s32.totalorder %s53, %s54
      %p65 = scmp.eq.s32.totalorder %s23, 0
      %p66 = por %p64, %p65
      %p67 = scmp.ne.s32.totalorder %s53, %s54
      %p68 = scmp.eq.s32.totalorder %s24, 3
      %p69 = por %p67, %p68
      %p71 = scmp.ne.s32.totalorder %s54, %s70
      %p72 = scmp.eq.s32.totalorder %s24, 0
      %p73 = por %p71, %p72
      %s74 = ssub.s32 %s25, %s37
      %s75 = ssub.s32 %s26, %s33
      %s76 = sor.u32 %s74, %s75
      %p77 = scmp.eq.s32.totalorder %s76, 0
      %s79 = sadd.s32 %s78, 1
      %s80 = scalar_select %p77, %s78, %s79
      %p83 = pneg %p77
      %p84 = scmp.eq.s32.totalorder %s18, 3
      %p85 = por %p83, %p84
      %p86 = scmp.ne.s32.totalorder %s78, %s81
      %p87 = scmp.eq.s32.totalorder %s18, 0
      %p88 = por %p86, %p87
      %p89 = scmp.ne.s32.totalorder %s78, %s81
      %p90 = scmp.eq.s32.totalorder %s23, 3
      %p91 = por %p89, %p90
      %p92 = scmp.ne.s32.totalorder %s81, %s82
      %p93 = scmp.eq.s32.totalorder %s23, 0
      %p94 = por %p92, %p93
      %p95 = scmp.ne.s32.totalorder %s81, %s82
      %p96 = scmp.eq.s32.totalorder %s24, 3
      %p97 = por %p95, %p96
      %p99 = scmp.ne.s32.totalorder %s82, %s98
      %p100 = scmp.eq.s32.totalorder %s24, 0
      %p101 = por %p99, %p100
      %s102 = sadd.s32 %s26, 1
      %s103 = smul.u32 %s102, 8
      %p104 = scmp.lt.s32.totalorder %s103, 15
      %s105 = scalar_select %p104, %s103, 15
      %s106 = sadd.s32 %s33, 1
      %s107 = smul.u32 %s106, 8
      %p108 = scmp.lt.s32.totalorder %s107, 15
      %s109 = scalar_select %p108, %s107, 15
      %s110 = ssub.s32 %s25, %s37
      %s111 = ssub.s32 %s105, %s109
      %s112 = sor.u32 %s110, %s111
      %p113 = scmp.eq.s32.totalorder %s112, 0
      %s115 = sadd.s32 %s114, 1
      %s116 = scalar_select %p113, %s114, %s115
      %p119 = pneg %p113
      %p120 = scmp.eq.s32.totalorder %s18, 3
      %p121 = por %p119, %p120
      %p122 = scmp.ne.s32.totalorder %s114, %s117
      %p123 = scmp.eq.s32.totalorder %s18, 0
      %p124 = por %p122, %p123
      %p125 = scmp.ne.s32.totalorder %s114, %s117
      %p126 = scmp.eq.s32.totalorder %s23, 3
      %p127 = por %p125, %p126
      %p128 = scmp.ne.s32.totalorder %s117, %s118
      %p129 = scmp.eq.s32.totalorder %s23, 0
      %p130 = por %p128, %p129
      %p131 = scmp.ne.s32.totalorder %s117, %s118
      %p132 = scmp.eq.s32.totalorder %s24, 3
      %p133 = por %p131, %p132
      %p135 = scmp.ne.s32.totalorder %s118, %s134
      %p136 = scmp.eq.s32.totalorder %s24, 0
      %p137 = por %p135, %p136
      %s139 = sadd.s32 %s138, 1
      %p142 = scmp.eq.s32.totalorder %s18, 3
      %p143 = scmp.ne.s32.totalorder %s138, %s140
      %p144 = scmp.eq.s32.totalorder %s18, 0
      %p145 = por %p143, %p144
      %p146 = scmp.ne.s32.totalorder %s138, %s140
      %p147 = scmp.eq.s32.totalorder %s23, 3
      %p148 = por %p146, %p147
      %p149 = scmp.ne.s32.totalorder %s140, %s141
      %p150 = scmp.eq.s32.totalorder %s23, 0
      %p151 = por %p149, %p150
      %p152 = scmp.ne.s32.totalorder %s140, %s141
      %p153 = scmp.eq.s32.totalorder %s24, 3
      %p154 = por %p152, %p153
      %p156 = scmp.ne.s32.totalorder %s141, %s155
      %p157 = scmp.eq.s32.totalorder %s24, 0
      %p158 = por %p156, %p157
      %s160 = sadd.s32 %s159, 1
      %p163 = scmp.eq.s32.totalorder %s18, 3
      %p164 = scmp.ne.s32.totalorder %s159, %s161
      %p165 = scmp.eq.s32.totalorder %s18, 0
      %p166 = por %p164, %p165
      %p167 = scmp.ne.s32.totalorder %s159, %s161
      %p168 = scmp.eq.s32.totalorder %s23, 3
      %p169 = por %p167, %p168
      %p170 = scmp.ne.s32.totalorder %s161, %s162
      %p171 = scmp.eq.s32.totalorder %s23, 0
      %p172 = por %p170, %p171
      %p173 = scmp.ne.s32.totalorder %s161, %s162
      %p174 = scmp.eq.s32.totalorder %s24, 3
      %p175 = por %p173, %p174
      %p177 = scmp.ne.s32.totalorder %s162, %s176
      %p178 = scmp.eq.s32.totalorder %s24, 0
      %p179 = por %p177, %p178
      %s181 = sadd.s32 %s180, 1
      %p184 = scmp.eq.s32.totalorder %s18, 3
      %p185 = scmp.ne.s32.totalorder %s180, %s182
      %p186 = scmp.eq.s32.totalorder %s18, 0
      %p187 = por %p185, %p186
      %p188 = scmp.ne.s32.totalorder %s180, %s182
      %p189 = scmp.eq.s32.totalorder %s23, 3
      %p190 = por %p188, %p189
      %p191 = scmp.ne.s32.totalorder %s182, %s183
      %p192 = scmp.eq.s32.totalorder %s23, 0
      %p193 = por %p191, %p192
      %p194 = scmp.ne.s32.totalorder %s182, %s183
      %p195 = scmp.eq.s32.totalorder %s24, 3
      %p196 = por %p194, %p195
      %p198 = scmp.ne.s32.totalorder %s183, %s197
      %p199 = scmp.eq.s32.totalorder %s24, 0
      %p200 = por %p198, %p199
      %s202 = sadd.s32 %s201, 1
      %p205 = scmp.eq.s32.totalorder %s18, 3
      %p206 = scmp.ne.s32.totalorder %s201, %s203
      %p207 = scmp.eq.s32.totalorder %s18, 0
      %p208 = por %p206, %p207
      %p209 = scmp.ne.s32.totalorder %s201, %s203
      %p210 = scmp.eq.s32.totalorder %s23, 3
      %p211 = por %p209, %p210
      %p212 = scmp.ne.s32.totalorder %s203, %s204
      %p213 = scmp.eq.s32.totalorder %s23, 0
      %p214 = por %p212, %p213
      %p215 = scmp.ne.s32.totalorder %s203, %s204
      %p216 = scmp.eq.s32.totalorder %s24, 3
      %p217 = por %p215, %p216
      %p219 = scmp.ne.s32.totalorder %s204, %s218
      %p220 = scmp.eq.s32.totalorder %s24, 0
      %p221 = por %p219, %p220
      %s223 = sadd.s32 %s222, 1
      %p226 = scmp.eq.s32.totalorder %s18, 3
      %p227 = scmp.ne.s32.totalorder %s222, %s224
      %p228 = scmp.eq.s32.totalorder %s18, 0
      %p229 = por %p227, %p228
      %p230 = scmp.ne.s32.totalorder %s222, %s224
      %p231 = scmp.eq.s32.totalorder %s23, 3
      %p232 = por %p230, %p231
      %p233 = scmp.ne.s32.totalorder %s224, %s225
      %p234 = scmp.eq.s32.totalorder %s23, 0
      %p235 = por %p233, %p234
      %p236 = scmp.ne.s32.totalorder %s224, %s225
      %p237 = scmp.eq.s32.totalorder %s24, 3
      %p238 = por %p236, %p237
      %p240 = scmp.ne.s32.totalorder %s225, %s239
      %p241 = scmp.eq.s32.totalorder %s24, 0
      %p242 = por %p240, %p241
      %s244 = sadd.s32 %s243, 1
      %p247 = scmp.eq.s32.totalorder %s18, 3
      %p248 = scmp.ne.s32.totalorder %s243, %s245
      %p249 = scmp.eq.s32.totalorder %s18, 0
      %p250 = por %p248, %p249
      %p251 = scmp.ne.s32.totalorder %s243, %s245
      %p252 = scmp.eq.s32.totalorder %s23, 3
      %p253 = por %p251, %p252
      %p254 = scmp.ne.s32.totalorder %s245, %s246
      %p255 = scmp.eq.s32.totalorder %s23, 0
      %p256 = por %p254, %p255
      %p257 = scmp.ne.s32.totalorder %s245, %s246
      %p258 = scmp.eq.s32.totalorder %s24, 3
      %p259 = por %p257, %p258
      %p261 = scmp.ne.s32.totalorder %s246, %s260
      %p262 = scmp.eq.s32.totalorder %s24, 0
      %p263 = por %p261, %p262
      %s264 = ssub.s32 %s25, %s37
      %s265 = ssub.s32 %s26, %s33
      %s266 = sor.u32 %s264, %s265
      %p267 = scmp.eq.s32.totalorder %s266, 0
      %s269 = sadd.s32 %s268, 1
      %s270 = scalar_select %p267, %s268, %s269
      %p273 = pneg %p267
      %p274 = scmp.eq.s32.totalorder %s18, 3
      %p275 = por %p273, %p274
      %p276 = scmp.ne.s32.totalorder %s268, %s271
      %p277 = scmp.eq.s32.totalorder %s18, 0
      %p278 = por %p276, %p277
      %p279 = scmp.ne.s32.totalorder %s268, %s271
      %p280 = scmp.eq.s32.totalorder %s23, 3
      %p281 = por %p279, %p280
      %p282 = scmp.ne.s32.totalorder %s271, %s272
      %p283 = scmp.eq.s32.totalorder %s23, 0
      %p284 = por %p282, %p283
      %p285 = scmp.ne.s32.totalorder %s271, %s272
      %p286 = scmp.eq.s32.totalorder %s24, 3
      %p287 = por %p285, %p286
      %p289 = scmp.ne.s32.totalorder %s272, %s288
      %p290 = scmp.eq.s32.totalorder %s24, 0
      %p291 = por %p289, %p290
      %p292 = scmp.le.s32.totalorder 1, %s18
      %p293 = scmp.lt.s32.totalorder %s18, 5
      %p294 = pnand %p292, %p293
      %p295 = pneg %p294
      // Predicated region
      $region9: #{pallas_fwd.3} parent=5 // pred_check
        _
      $region10: #{pallas_fwd.3} parent=5 // pred_check_branch
        %297 = sbr.rel (%p294) target = $region12
      $region11: #{pallas_fwd.3} parent=5 // pred_region
        %s298 = ssub.s32 %s18, 1
        // Predicated region
        $region13: #{pallas_fwd.3} parent=11 // pred_check
          %p299 = pneg %p151
        $region14: #{pallas_fwd.3} parent=11 // pred_check_branch
          %301 = sbr.rel (%p299) target = $region16
        $region15: #{pallas_fwd.3} parent=11 // pred_region
          _
        $region16: #{pallas_fwd.3} parent=11 // pred_fallthru
          _
        // Predicated region
        $region17: #{pallas_fwd.3} parent=11 // pred_check
          %p302 = pneg %p172
        $region18: #{pallas_fwd.3} parent=11 // pred_check_branch
          %304 = sbr.rel (%p302) target = $region20
        $region19: #{pallas_fwd.3} parent=11 // pred_region
          _
        $region20: #{pallas_fwd.3} parent=11 // pred_fallthru
          _
        // Predicated region
        $region21: #{pallas_fwd.3} parent=11 // pred_check
          %p305 = pneg %p193
        $region22: #{pallas_fwd.3} parent=11 // pred_check_branch
          %307 = sbr.rel (%p305) target = $region24
        $region23: #{pallas_fwd.3} parent=11 // pred_region
          _
        $region24: #{pallas_fwd.3} parent=11 // pred_fallthru
          _
        // Predicated region
        $region25: #{pallas_fwd.3} parent=11 // pred_check
          %p308 = pneg %p214
        $region26: #{pallas_fwd.3} parent=11 // pred_check_branch
          %310 = sbr.rel (%p308) target = $region28
        $region27: #{pallas_fwd.3} parent=11 // pred_region
          _
        $region28: #{pallas_fwd.3} parent=11 // pred_fallthru
          _
        // Predicated region
        $region29: #{pallas_fwd.3} parent=11 // pred_check
          %p311 = pneg %p235
        $region30: #{pallas_fwd.3} parent=11 // pred_check_branch
          %313 = sbr.rel (%p311) target = $region32
        $region31: #{pallas_fwd.3} parent=11 // pred_region
          _
        $region32: #{pallas_fwd.3} parent=11 // pred_fallthru
          _
        // Predicated region
        $region33: #{pallas_fwd.3} parent=11 // pred_check
          %p314 = pneg %p256
        $region34: #{pallas_fwd.3} parent=11 // pred_check_branch
          %316 = sbr.rel (%p314) target = $region36
        $region35: #{pallas_fwd.3} parent=11 // pred_region
          _
        $region36: #{pallas_fwd.3} parent=11 // pred_fallthru
          _
      $region12: #{pallas_fwd.3} parent=5 // pred_fallthru
        _
      %p317 = scmp.lt.s32.totalorder %s18, 4
      // Predicated region
      $region37: #{pallas_fwd.3} parent=5 // pred_check
        %p318 = pneg %p317
      $region38: #{pallas_fwd.3} parent=5 // pred_check_branch
        %320 = sbr.rel (%p318) target = $region40
      $region39: #{pallas_fwd.3} parent=5 // pred_region
        // Predicated region
        $region41: #{pallas_fwd.3} parent=39 // pred_check
          %p321 = pneg %p60
        $region42: #{pallas_fwd.3} parent=39 // pred_check_branch
          %323 = sbr.rel (%p321) target = $region44
        $region43: #{pallas_fwd.3} parent=39 // pred_region
          %s324 = smul.u32 %s26, 8
          %s325 = ssub.s32 %s324, 1
          %p326 = scmp.gt.s32.totalorder %s325, 0
          %s327 = scalar_select %p326, %s325, 0
          %p328 = scmp.lt.s32.totalorder %s25, 1
          %s329 = scalar_select %p328, %s25, 1
          %p330 = scmp.lt.s32.totalorder %s327, 15
          %s331 = scalar_select %p330, %s327, 15
          %s332 = smul.addr %s331, 4
          %s333 = smul.addr %s329, 64
          %s334 = sadd.s32 %s332, %s333
          %s335 = smul.addr %s334, 4
          %s336 = scalar_lea.vmem %s0, %s335
          %s337 = smul.u32 %s26, 8
          %s338 = ssub.s32 %s337, 1
          %p339 = scmp.gt.s32.totalorder %s338, 0
          %s340 = scalar_select %p339, %s338, 0
        $region44: #{pallas_fwd.3} parent=39 // pred_fallthru
          _
        // Predicated region
        $region45: #{pallas_fwd.3} parent=39 // pred_check
          %p341 = pneg %p88
        $region46: #{pallas_fwd.3} parent=39 // pred_check_branch
          %343 = sbr.rel (%p341) target = $region48
        $region47: #{pallas_fwd.3} parent=39 // pred_region
          %s344 = smul.u32 8, %s26
          %p345 = scmp.lt.s32.totalorder %s25, 1
          %s346 = scalar_select %p345, %s25, 1
          %p347 = scmp.lt.s32.totalorder %s344, 15
          %s348 = scalar_select %p347, %s344, 15
          %s349 = smul.addr %s348, 4
          %s350 = smul.addr %s346, 64
          %s351 = sadd.s32 %s349, %s350
          %s352 = smul.addr %s351, 4
          %s353 = scalar_lea.vmem %s1, %s352
          %s354 = smul.u32 8, %s26
        $region48: #{pallas_fwd.3} parent=39 // pred_fallthru
          _
        // Predicated region
        $region49: #{pallas_fwd.3} parent=39 // pred_check
          %p355 = pneg %p124
        $region50: #{pallas_fwd.3} parent=39 // pred_check_branch
          %357 = sbr.rel (%p355) target = $region52
        $region51: #{pallas_fwd.3} parent=39 // pred_region
          %s358 = sadd.s32 %s26, 1
          %s359 = smul.u32 %s358, 8
          %p360 = scmp.lt.s32.totalorder %s359, 15
          %s361 = scalar_select %p360, %s359, 15
          %p362 = scmp.lt.s32.totalorder %s25, 1
          %s363 = scalar_select %p362, %s25, 1
          %p364 = scmp.lt.s32.totalorder %s361, 15
          %s365 = scalar_select %p364, %s361, 15
          %s366 = smul.addr %s365, 4
          %s367 = smul.addr %s363, 64
          %s368 = sadd.s32 %s366, %s367
          %s369 = smul.addr %s368, 4
          %s370 = scalar_lea.vmem %s2, %s369
          %s371 = sadd.s32 %s26, 1
          %s372 = smul.u32 %s371, 8
          %p373 = scmp.lt.s32.totalorder %s372, 15
          %s374 = scalar_select %p373, %s372, 15
        $region52: #{pallas_fwd.3} parent=39 // pred_fallthru
          _
      $region40: #{pallas_fwd.3} parent=5 // pred_fallthru
        _
      %p375 = scmp.le.s32.totalorder 1, %s18
      %p376 = scmp.lt.s32.totalorder %s18, 5
      %p377 = pnand %p375, %p376
      %p378 = pneg %p377
      // Predicated region
      $region53: #{pallas_fwd.3} parent=5 // pred_check
        _
      $region54: #{pallas_fwd.3} parent=5 // pred_check_branch
        %380 = sbr.rel (%p377) target = $region56
      $region55: #{pallas_fwd.3} parent=5 // pred_region
        %s381 = ssub.s32 %s18, 1
        %s382 = smul.u32 %s28, 8
        %s383 = ssub.s32 %s382, 1
        %p384 = scmp.gt.s32.totalorder %s383, 0
        %s385 = scalar_select %p384, %s383, 0
        %p386 = scmp.lt.s32.totalorder %s27, 1
        %s387 = scalar_select %p386, %s27, 1
        %p388 = scmp.lt.s32.totalorder %s385, 15
        %s389 = scalar_select %p388, %s385, 15
        %s390 = smul.addr %s389, 4
        %s391 = smul.addr %s387, 64
        %s392 = sadd.s32 %s390, %s391
        %s393 = smul.addr %s392, 4
        %s394 = scalar_lea.vmem %s0, %s393
        %p395 = pneg %p66
        %p396 = pneg %p63
        %s397 = smul.u32 8, %s28
        %p398 = scmp.lt.s32.totalorder %s27, 1
        %s399 = scalar_select %p398, %s27, 1
        %p400 = scmp.lt.s32.totalorder %s397, 15
        %s401 = scalar_select %p400, %s397, 15
        %s402 = smul.addr %s401, 4
        %s403 = smul.addr %s399, 64
        %s404 = sadd.s32 %s402, %s403
        %s405 = smul.addr %s404, 4
        %s406 = scalar_lea.vmem %s1, %s405
        %p407 = pneg %p94
        %p408 = pneg %p91
        %s409 = sadd.s32 %s28, 1
        %s410 = smul.u32 %s409, 8
        %p411 = scmp.lt.s32.totalorder %s410, 15
        %s412 = scalar_select %p411, %s410, 15
        %p413 = scmp.lt.s32.totalorder %s27, 1
        %s414 = scalar_select %p413, %s27, 1
        %p415 = scmp.lt.s32.totalorder %s412, 15
        %s416 = scalar_select %p415, %s412, 15
        %s417 = smul.addr %s416, 4
        %s418 = smul.addr %s414, 64
        %s419 = sadd.s32 %s417, %s418
        %s420 = smul.addr %s419, 4
        %s421 = scalar_lea.vmem %s2, %s420
        %p422 = pneg %p130
        %p423 = pneg %p127
        %p424 = pneg %p151
        %p425 = pneg %p148
        %p426 = pneg %p172
        %p427 = pneg %p169
        %p428 = pneg %p193
        %p429 = pneg %p190
        %p430 = pneg %p214
        %p431 = pneg %p211
        %p432 = pneg %p235
        %p433 = pneg %p232
        %p434 = pneg %p256
        %p435 = pneg %p253
        %p436 = pneg %p284
        %p437 = pneg %p281
        %s438 = sand.u32 %s271, 1
        %s439 = scalar_lea.sflag [#allocation3], %s438
        %s440 = sand.u32 %s271, 1
        %s441 = smul.addr %s440, 128
        %s442 = scalar_lea.vmem [#allocation2], %s441
        %s443 = smul.u32 %s28, 8
        %s444 = ssub.s32 %s443, 1
        %p445 = scmp.gt.s32.totalorder %s444, 0
        %s446 = scalar_select %p445, %s444, 0
        %p447 = scmp.lt.s32.totalorder %s27, 1
        %s448 = scalar_select %p447, %s27, 1
        %p449 = scmp.lt.s32.totalorder %s446, 15
        %s450 = scalar_select %p449, %s446, 15
        %s451 = smul.addr %s450, 4
        %s452 = smul.addr %s448, 64
        %s453 = sadd.s32 %s451, %s452
        %s454 = smul.addr %s453, 4
        %s455 = scalar_lea.vmem %s0, %s454
        %s456 = smul.u32 %s28, 8
        %s457 = ssub.s32 %s456, 1
        %p458 = scmp.gt.s32.totalorder %s457, 0
        %s459 = scalar_select %p458, %s457, 0
        %s460 = smul.u32 8, %s28
        %p461 = scmp.lt.s32.totalorder %s27, 1
        %s462 = scalar_select %p461, %s27, 1
        %p463 = scmp.lt.s32.totalorder %s460, 15
        %s464 = scalar_select %p463, %s460, 15
        %s465 = smul.addr %s464, 4
        %s466 = smul.addr %s462, 64
        %s467 = sadd.s32 %s465, %s466
        %s468 = smul.addr %s467, 4
        %s469 = scalar_lea.vmem %s1, %s468
        %s470 = smul.u32 8, %s28
        %s471 = sadd.s32 %s28, 1
        %s472 = smul.u32 %s471, 8
        %p473 = scmp.lt.s32.totalorder %s472, 15
        %s474 = scalar_select %p473, %s472, 15
        %p475 = scmp.lt.s32.totalorder %s27, 1
        %s476 = scalar_select %p475, %s27, 1
        %p477 = scmp.lt.s32.totalorder %s474, 15
        %s478 = scalar_select %p477, %s474, 15
        %s479 = smul.addr %s478, 4
        %s480 = smul.addr %s476, 64
        %s481 = sadd.s32 %s479, %s480
        %s482 = smul.addr %s481, 4
        %s483 = scalar_lea.vmem %s2, %s482
        %s484 = sadd.s32 %s28, 1
        %s485 = smul.u32 %s484, 8
        %p486 = scmp.lt.s32.totalorder %s485, 15
        %s487 = scalar_select %p486, %s485, 15
        %s488 = smul.u32 8, %s28
        %v490 = vld [vmem:[%s3] sm:$0xf]
        %v491 = vld [vmem:[%s3 + $0x4] sm:$0xf]
        %v492 = vld [vmem:[%s3 + $0x8] sm:$0xf]
        %v493 = vld [vmem:[%s3 + $0xc] sm:$0xf]
        %v494 = vld [vmem:[%s3 + $0x10] sm:$0xf]
        %v495 = vld [vmem:[%s3 + $0x14] sm:$0xf]
        %v496 = vld [vmem:[%s3 + $0x18] sm:$0xf]
        %v497 = vld [vmem:[%s3 + $0x1c] sm:$0xf]
        %v498 = vld [vmem:[%s3 + $0x20] sm:$0xf]
        %v499 = vld [vmem:[%s3 + $0x24] sm:$0xf]
        %v500 = vld [vmem:[%s3 + $0x28] sm:$0xf]
        %v501 = vld [vmem:[%s3 + $0x2c] sm:$0xf]
        %v502 = vld [vmem:[%s3 + $0x30] sm:$0xf]
        %v503 = vld [vmem:[%s3 + $0x34] sm:$0xf]
        %v504 = vld [vmem:[%s3 + $0x38] sm:$0xf]
        %v505 = vld [vmem:[%s3 + $0x3c] sm:$0xf]
        %v506 = vld [vmem:[%s3 + $0x40] sm:$0xf]
        %v507 = vld [vmem:[%s3 + $0x44] sm:$0xf]
        %v508 = vld [vmem:[%s3 + $0x48] sm:$0xf]
        %v509 = vld [vmem:[%s3 + $0x4c] sm:$0xf]
        %v510 = vld [vmem:[%s3 + $0x50] sm:$0xf]
        %v511 = vld [vmem:[%s3 + $0x54] sm:$0xf]
        %v512 = vld [vmem:[%s3 + $0x58] sm:$0xf]
        %v513 = vld [vmem:[%s3 + $0x5c] sm:$0xf]
        %v514 = vld [vmem:[%s3 + $0x60] sm:$0xf]
        %v515 = vld [vmem:[%s3 + $0x64] sm:$0xf]
        %v516 = vld [vmem:[%s3 + $0x68] sm:$0xf]
        %v517 = vld [vmem:[%s3 + $0x6c] sm:$0xf]
        %v518 = vld [vmem:[%s3 + $0x70] sm:$0xf]
        %v519 = vld [vmem:[%s3 + $0x74] sm:$0xf]
        %v520 = vld [vmem:[%s3 + $0x78] sm:$0xf]
        %v521 = vld [vmem:[%s3 + $0x7c] sm:$0xf]
        %v522 = vld [vmem:[%s4] sm:$0x1]
        %v523 = vld [vmem:[%s469] sm:$0xff]
        %v524 = vld [vmem:[%s469 + $0x8] sm:$0xff]
        %v525 = vld [vmem:[%s469 + $0x10] sm:$0xff]
        %v526 = vld [vmem:[%s469 + $0x18] sm:$0xff]
        %v527 = vld [vmem:[%s469 + $0x20] sm:$0xff]
        %v528 = vld [vmem:[%s469 + $0x28] sm:$0xff]
        %v529 = vld [vmem:[%s469 + $0x30] sm:$0xff]
        %v530 = vld [vmem:[%s469 + $0x38] sm:$0xff]
        %v531 = vld [vmem:[%s469 + $0x40] sm:$0xff]
        %v532 = vld [vmem:[%s469 + $0x48] sm:$0xff]
        %v533 = vld [vmem:[%s469 + $0x50] sm:$0xff]
        %v534 = vld [vmem:[%s469 + $0x58] sm:$0xff]
        %v535 = vld [vmem:[%s469 + $0x60] sm:$0xff]
        %v536 = vld [vmem:[%s469 + $0x68] sm:$0xff]
        %v537 = vld [vmem:[%s469 + $0x70] sm:$0xff]
        %v538 = vld [vmem:[%s469 + $0x78] sm:$0xff]
        %v540 = vlaneseq
        %v541 = vshrl.u32 %v540, 7
        %v542 = vsub.s32 0, %v541
        %v543 = vrot.slane %v522, %v542
        %v561 = vunpack.c.l.b16 %v523
        %v562 = vunpack.c.h.b16 %v523
        %v563 = vunpack.c.l.b16 %v524
        %v564 = vunpack.c.h.b16 %v524
        %v565 = vunpack.c.l.b16 %v525
        %v566 = vunpack.c.h.b16 %v525
        %v567 = vunpack.c.l.b16 %v526
        %v568 = vunpack.c.h.b16 %v526
        %v569 = vunpack.c.l.b16 %v527
        %v570 = vunpack.c.h.b16 %v527
        %v571 = vunpack.c.l.b16 %v528
        %v572 = vunpack.c.h.b16 %v528
        %v573 = vunpack.c.l.b16 %v529
        %v574 = vunpack.c.h.b16 %v529
        %v575 = vunpack.c.l.b16 %v530
        %v576 = vunpack.c.h.b16 %v530
        %v577 = vunpack.c.l.b16 %v531
        %v578 = vunpack.c.h.b16 %v531
        %v579 = vunpack.c.l.b16 %v532
        %v580 = vunpack.c.h.b16 %v532
        %v581 = vunpack.c.l.b16 %v533
        %v582 = vunpack.c.h.b16 %v533
        %v583 = vunpack.c.l.b16 %v534
        %v584 = vunpack.c.h.b16 %v534
        %v585 = vunpack.c.l.b16 %v535
        %v586 = vunpack.c.h.b16 %v535
        %v587 = vunpack.c.l.b16 %v536
        %v588 = vunpack.c.h.b16 %v536
        %v589 = vunpack.c.l.b16 %v537
        %v590 = vunpack.c.h.b16 %v537
        %v591 = vunpack.c.l.b16 %v538
        %v592 = vunpack.c.h.b16 %v538
        %v593 = vpack.c.b16 %v563, %v561
        %v594 = vpack.c.b16 %v564, %v562
        %v595 = vpack.c.b16 %v567, %v565
        %v596 = vpack.c.b16 %v568, %v566
        %v597 = vpack.c.b16 %v571, %v569
        %v598 = vpack.c.b16 %v572, %v570
        %v599 = vpack.c.b16 %v575, %v573
        %v600 = vpack.c.b16 %v576, %v574
        %v601 = vpack.c.b16 %v579, %v577
        %v602 = vpack.c.b16 %v580, %v578
        %v603 = vpack.c.b16 %v583, %v581
        %v604 = vpack.c.b16 %v584, %v582
        %v605 = vpack.c.b16 %v587, %v585
        %v606 = vpack.c.b16 %v588, %v586
        %v607 = vpack.c.b16 %v591, %v589
        %v608 = vpack.c.b16 %v592, %v590
        %v657 = vunpack.c.l.b16 %v490
        %v658 = vunpack.c.l.b16 %v491
        %v659 = vunpack.c.l.b16 %v492
        %v660 = vunpack.c.l.b16 %v493
        %v661 = vunpack.c.l.b16 %v494
        %v662 = vunpack.c.l.b16 %v495
        %v663 = vunpack.c.l.b16 %v496
        %v664 = vunpack.c.l.b16 %v497
        %v665 = vunpack.c.l.b16 %v498
        %v666 = vunpack.c.l.b16 %v499
        %v667 = vunpack.c.l.b16 %v500
        %v668 = vunpack.c.l.b16 %v501
        %v669 = vunpack.c.l.b16 %v502
        %v670 = vunpack.c.l.b16 %v503
        %v671 = vunpack.c.l.b16 %v504
        %v672 = vunpack.c.l.b16 %v505
        %v673 = vunpack.c.l.b16 %v506
        %v674 = vunpack.c.l.b16 %v507
        %v675 = vunpack.c.l.b16 %v508
        %v676 = vunpack.c.l.b16 %v509
        %v677 = vunpack.c.l.b16 %v510
        %v678 = vunpack.c.l.b16 %v511
        %v679 = vunpack.c.l.b16 %v512
        %v680 = vunpack.c.l.b16 %v513
        %v681 = vunpack.c.l.b16 %v514
        %v682 = vunpack.c.l.b16 %v515
        %v683 = vunpack.c.l.b16 %v516
        %v684 = vunpack.c.l.b16 %v517
        %v685 = vunpack.c.l.b16 %v518
        %v686 = vunpack.c.l.b16 %v519
        %v687 = vunpack.c.l.b16 %v520
        %v688 = vunpack.c.l.b16 %v521
        %v689 = vpack.c.b16 %v658, %v657
        %v690 = vpack.c.b16 %v660, %v659
        %v691 = vpack.c.b16 %v662, %v661
        %v692 = vpack.c.b16 %v664, %v663
        %v693 = vpack.c.b16 %v666, %v665
        %v694 = vpack.c.b16 %v668, %v667
        %v695 = vpack.c.b16 %v670, %v669
        %v696 = vpack.c.b16 %v672, %v671
        %v697 = vpack.c.b16 %v674, %v673
        %v698 = vpack.c.b16 %v676, %v675
        %v699 = vpack.c.b16 %v678, %v677
        %v700 = vpack.c.b16 %v680, %v679
        %v701 = vpack.c.b16 %v682, %v681
        %v702 = vpack.c.b16 %v684, %v683
        %v703 = vpack.c.b16 %v686, %v685
        %v704 = vpack.c.b16 %v688, %v687
        %721 = vmatprep.subr.bf16.mxu0 0
        %722 = vmatpush1.bf16.msra.mxu0 %v689
        %723 = vmatprep.subr.bf16.mxu0 0
        %724 = vmatpush1.bf16.msra.mxu0 %v690
        %725 = vmatprep.subr.bf16.mxu0 0
        %726 = vmatpush1.bf16.msra.mxu0 %v691
        %727 = vmatprep.subr.bf16.mxu0 0
        %728 = vmatpush1.bf16.msra.mxu0 %v692
        %729 = vmatprep.subr.bf16.mxu0 0
        %730 = vmatpush1.bf16.msra.mxu0 %v693
        %731 = vmatprep.subr.bf16.mxu0 0
        %732 = vmatpush1.bf16.msra.mxu0 %v694
        %733 = vmatprep.subr.bf16.mxu0 0
        %734 = vmatpush1.bf16.msra.mxu0 %v695
        %735 = vmatprep.subr.bf16.mxu0 0
        %736 = vmatpush1.bf16.msra.mxu0 %v696
        %737 = vmatprep.subr.bf16.mxu0 0
        %738 = vmatpush1.bf16.msra.mxu0 %v697
        %739 = vmatprep.subr.bf16.mxu0 0
        %740 = vmatpush1.bf16.msra.mxu0 %v698
        %741 = vmatprep.subr.bf16.mxu0 0
        %742 = vmatpush1.bf16.msra.mxu0 %v699
        %743 = vmatprep.subr.bf16.mxu0 0
        %744 = vmatpush1.bf16.msra.mxu0 %v700
        %745 = vmatprep.subr.bf16.mxu0 0
        %746 = vmatpush1.bf16.msra.mxu0 %v701
        %747 = vmatprep.subr.bf16.mxu0 0
        %748 = vmatpush1.bf16.msra.mxu0 %v702
        %749 = vmatprep.subr.bf16.mxu0 0
        %750 = vmatpush1.bf16.msra.mxu0 %v703
        %751 = vmatprep.subr.bf16.mxu0 0
        %752 = vmatpush1.bf16.msra.mxu0 %v704
        %753 = vmatprep.mubr.bf16.mxu0 %v594
        %754 = vmatmul.mubr.bf16.gmra.mrb[0].mxu0 %v593
        %v755 = vpop.f32.mrb[0].mxu0
        %v756 = vadd.f32 %v543, %v755
        %v757 = vpop.f32.mrb[0].mxu0
        %v758 = vpop.f32.mrb[0].mxu0
        %v759 = vadd.f32 %v543, %v758
        %v760 = vpop.f32.mrb[0].mxu0
        %761 = vmatprep.mubr.bf16.mxu0 %v596
        %762 = vmatmul.mubr.bf16.gmra.mrb[0].mxu0 %v595
        %v763 = vpop.f32.mrb[0].mxu0
        %v764 = vadd.f32 %v543, %v763
        %v765 = vpop.f32.mrb[0].mxu0
        %v766 = vpop.f32.mrb[0].mxu0
        %v767 = vadd.f32 %v543, %v766
        %v768 = vpop.f32.mrb[0].mxu0
        %769 = vmatprep.mubr.bf16.mxu0 %v598
        %770 = vmatmul.mubr.bf16.gmra.mrb[0].mxu0 %v597
        %v771 = vpop.f32.mrb[0].mxu0
        %v772 = vadd.f32 %v543, %v771
        %v773 = vpop.f32.mrb[0].mxu0
        %v774 = vpop.f32.mrb[0].mxu0
        %v775 = vadd.f32 %v543, %v774
        %v776 = vpop.f32.mrb[0].mxu0
        %777 = vmatprep.mubr.bf16.mxu0 %v600
        %778 = vmatmul.mubr.bf16.gmra.mrb[0].mxu0 %v599
        %v779 = vpop.f32.mrb[0].mxu0
        %v780 = vadd.f32 %v543, %v779
        %v781 = vpop.f32.mrb[0].mxu0
        %v782 = vpop.f32.mrb[0].mxu0
        %v783 = vadd.f32 %v543, %v782
        %v784 = vpop.f32.mrb[0].mxu0
        %785 = vmatprep.mubr.bf16.mxu0 %v602
        %786 = vmatmul.mubr.bf16.gmra.mrb[0].mxu0 %v601
        %v787 = vpop.f32.mrb[0].mxu0
        %v788 = vadd.f32 %v543, %v787
        %v789 = vpop.f32.mrb[0].mxu0
        %v790 = vpop.f32.mrb[0].mxu0
        %v791 = vadd.f32 %v543, %v790
        %v792 = vpop.f32.mrb[0].mxu0
        %793 = vmatprep.mubr.bf16.mxu0 %v604
        %794 = vmatmul.mubr.bf16.gmra.mrb[0].mxu0 %v603
        %v795 = vpop.f32.mrb[0].mxu0
        %v796 = vadd.f32 %v543, %v795
        %v797 = vpop.f32.mrb[0].mxu0
        %v798 = vpop.f32.mrb[0].mxu0
        %v799 = vadd.f32 %v543, %v798
        %v800 = vpop.f32.mrb[0].mxu0
        %801 = vmatprep.mubr.bf16.mxu0 %v606
        %802 = vmatmul.mubr.bf16.gmra.mrb[0].mxu0 %v605
        %v803 = vpop.f32.mrb[0].mxu0
        %v804 = vadd.f32 %v543, %v803
        %v805 = vpop.f32.mrb[0].mxu0
        %v806 = vpop.f32.mrb[0].mxu0
        %v807 = vadd.f32 %v543, %v806
        %v808 = vpop.f32.mrb[0].mxu0
        %809 = vmatprep.mubr.bf16.mxu0 %v608
        %810 = vmatmul.mubr.bf16.gmra.mrb[0].mxu0 %v607
        %v811 = vpop.f32.mrb[0].mxu0
        %v812 = vadd.f32 %v543, %v811
        %v813 = vpop.f32.mrb[0].mxu0
        %v814 = vpop.f32.mrb[0].mxu0
        %v815 = vadd.f32 %v543, %v814
        %v816 = vpop.f32.mrb[0].mxu0
        %817 = vdwg.mxu0
        %v818 = vmax.f32 %v756, 0.0
        %v819 = vmax.f32 %v759, 0.0
        %v820 = vmax.f32 %v764, 0.0
        %v821 = vmax.f32 %v767, 0.0
        %v822 = vmax.f32 %v772, 0.0
        %v823 = vmax.f32 %v775, 0.0
        %v824 = vmax.f32 %v780, 0.0
        %v825 = vmax.f32 %v783, 0.0
        %v826 = vmax.f32 %v788, 0.0
        %v827 = vmax.f32 %v791, 0.0
        %v828 = vmax.f32 %v796, 0.0
        %v829 = vmax.f32 %v799, 0.0
        %v830 = vmax.f32 %v804, 0.0
        %v831 = vmax.f32 %v807, 0.0
        %v832 = vmax.f32 %v812, 0.0
        %v833 = vmax.f32 %v815, 0.0
        %p834 = scmp.gt.s32.totalorder %s28, 0
        %v835 = vld [vmem:[%s455] sm:$0xff]
        %v836 = vld [vmem:[%s455 + $0x8] sm:$0xff]
        %v839 = vunpack.c.l.b16 %v835
        %v840 = vunpack.c.h.b16 %v835
        %v841 = vunpack.c.l.b16 %v836
        %v842 = vunpack.c.h.b16 %v836
        %v843 = vpack.c.b16 %v841, %v839
        %v844 = vpack.c.b16 %v842, %v840
        %847 = vmatprep.subr.bf16.mxu0 0
        %848 = vmatpush1.bf16.msra.mxu0 %v689
        %849 = vmatprep.subr.bf16.mxu0 0
        %850 = vmatpush1.bf16.msra.mxu0 %v690
        %851 = vmatprep.subr.bf16.mxu0 0
        %852 = vmatpush1.bf16.msra.mxu0 %v691
        %853 = vmatprep.subr.bf16.mxu0 0
        %854 = vmatpush1.bf16.msra.mxu0 %v692
        %855 = vmatprep.subr.bf16.mxu0 0
        %856 = vmatpush1.bf16.msra.mxu0 %v693
        %857 = vmatprep.subr.bf16.mxu0 0
        %858 = vmatpush1.bf16.msra.mxu0 %v694
        %859 = vmatprep.subr.bf16.mxu0 0
        %860 = vmatpush1.bf16.msra.mxu0 %v695
        %861 = vmatprep.subr.bf16.mxu0 0
        %862 = vmatpush1.bf16.msra.mxu0 %v696
        %863 = vmatprep.subr.bf16.mxu0 0
        %864 = vmatpush1.bf16.msra.mxu0 %v697
        %865 = vmatprep.subr.bf16.mxu0 0
        %866 = vmatpush1.bf16.msra.mxu0 %v698
        %867 = vmatprep.subr.bf16.mxu0 0
        %868 = vmatpush1.bf16.msra.mxu0 %v699
        %869 = vmatprep.subr.bf16.mxu0 0
        %870 = vmatpush1.bf16.msra.mxu0 %v700
        %871 = vmatprep.subr.bf16.mxu0 0
        %872 = vmatpush1.bf16.msra.mxu0 %v701
        %873 = vmatprep.subr.bf16.mxu0 0
        %874 = vmatpush1.bf16.msra.mxu0 %v702
        %875 = vmatprep.subr.bf16.mxu0 0
        %876 = vmatpush1.bf16.msra.mxu0 %v703
        %877 = vmatprep.subr.bf16.mxu0 0
        %878 = vmatpush1.bf16.msra.mxu0 %v704
        %879 = vmatprep.mubr.bf16.mxu0 %v844
        %880 = vmatmul.mubr.bf16.gmra.mrb[0].mxu0 %v843
        %v881 = vpop.f32.mrb[0].mxu0
        %v882 = vadd.f32 %v543, %v881
        %v883 = vpop.f32.mrb[0].mxu0
        %v884 = vpop.f32.mrb[0].mxu0
        %v885 = vadd.f32 %v543, %v884
        %v886 = vpop.f32.mrb[0].mxu0
        %887 = vdwg.mxu0
        %v888 = vmax.f32 %v882, 0.0
        %v889 = vmax.f32 %v885, 0.0
        %s890 = scalar_select %p834, 1, 0
        %v891 = vstv %s890
        %vm892 = vcmp.eq.s32.totalorder %v891, 1
        %v893 = vsel %vm892, %v888, 0.0
        %v894 = vsel %vm892, %v889, 0.0
        %p895 = scmp.lt.s32.totalorder %s28, 1
        %v896 = vld [vmem:[%s483] sm:$0xff]
        %v897 = vld [vmem:[%s483 + $0x8] sm:$0xff]
        %v900 = vunpack.c.l.b16 %v896
        %v901 = vunpack.c.h.b16 %v896
        %v902 = vunpack.c.l.b16 %v897
        %v903 = vunpack.c.h.b16 %v897
        %v904 = vpack.c.b16 %v902, %v900
        %v905 = vpack.c.b16 %v903, %v901
        %908 = vmatprep.subr.bf16.mxu0 0
        %909 = vmatpush1.bf16.msra.mxu0 %v689
        %910 = vmatprep.subr.bf16.mxu0 0
        %911 = vmatpush1.bf16.msra.mxu0 %v690
        %912 = vmatprep.subr.bf16.mxu0 0
        %913 = vmatpush1.bf16.msra.mxu0 %v691
        %914 = vmatprep.subr.bf16.mxu0 0
        %915 = vmatpush1.bf16.msra.mxu0 %v692
        %916 = vmatprep.subr.bf16.mxu0 0
        %917 = vmatpush1.bf16.msra.mxu0 %v693
        %918 = vmatprep.subr.bf16.mxu0 0
        %919 = vmatpush1.bf16.msra.mxu0 %v694
        %920 = vmatprep.subr.bf16.mxu0 0
        %921 = vmatpush1.bf16.msra.mxu0 %v695
        %922 = vmatprep.subr.bf16.mxu0 0
        %923 = vmatpush1.bf16.msra.mxu0 %v696
        %924 = vmatprep.subr.bf16.mxu0 0
        %925 = vmatpush1.bf16.msra.mxu0 %v697
        %926 = vmatprep.subr.bf16.mxu0 0
        %927 = vmatpush1.bf16.msra.mxu0 %v698
        %928 = vmatprep.subr.bf16.mxu0 0
        %929 = vmatpush1.bf16.msra.mxu0 %v699
        %930 = vmatprep.subr.bf16.mxu0 0
        %931 = vmatpush1.bf16.msra.mxu0 %v700
        %932 = vmatprep.subr.bf16.mxu0 0
        %933 = vmatpush1.bf16.msra.mxu0 %v701
        %934 = vmatprep.subr.bf16.mxu0 0
        %935 = vmatpush1.bf16.msra.mxu0 %v702
        %936 = vmatprep.subr.bf16.mxu0 0
        %937 = vmatpush1.bf16.msra.mxu0 %v703
        %938 = vmatprep.subr.bf16.mxu0 0
        %939 = vmatpush1.bf16.msra.mxu0 %v704
        %940 = vmatprep.mubr.bf16.mxu0 %v905
        %941 = vmatmul.mubr.bf16.gmra.mrb[0].mxu0 %v904
        %v942 = vpop.f32.mrb[0].mxu0
        %v943 = vadd.f32 %v543, %v942
        %v944 = vpop.f32.mrb[0].mxu0
        %v945 = vpop.f32.mrb[0].mxu0
        %v946 = vadd.f32 %v543, %v945
        %v947 = vpop.f32.mrb[0].mxu0
        %948 = vdwg.mxu0
        %v949 = vmax.f32 %v943, 0.0
        %v950 = vmax.f32 %v946, 0.0
        %s951 = scalar_select %p895, 1, 0
        %v952 = vstv %s951
        %vm953 = vcmp.eq.s32.totalorder %v952, 1
        %v954 = vsel %vm953, %v949, 0.0
        %v955 = vsel %vm953, %v950, 0.0
        %v956 = vpack.c.bf16 %v894, %v893
        %v957 = vpack.c.bf16 %v819, %v818
        %v958 = vpack.c.bf16 %v821, %v820
        %v959 = vpack.c.bf16 %v823, %v822
        %v960 = vpack.c.bf16 %v825, %v824
        %v961 = vpack.c.bf16 %v827, %v826
        %v962 = vpack.c.bf16 %v829, %v828
        %v963 = vpack.c.bf16 %v831, %v830
        %v964 = vpack.c.bf16 %v833, %v832
        %v965 = vpack.c.bf16 %v955, %v954
        %v967 = vshrl.u32 %v956, 16
        %v969 = vrot.slane %v967, 7
        %v970 = vshll.u32 %v956, 16
        %v972 = vor.u32 %v969, %v970
        %v974 = vshrl.u32 %v957, 16
        %v976 = vrot.slane %v974, 7
        %v977 = vshll.u32 %v957, 16
        %v979 = vor.u32 %v976, %v977
        %v981 = vshrl.u32 %v958, 16
        %v983 = vrot.slane %v981, 7
        %v984 = vshll.u32 %v958, 16
        %v986 = vor.u32 %v983, %v984
        %v988 = vshrl.u32 %v959, 16
        %v990 = vrot.slane %v988, 7
        %v991 = vshll.u32 %v959, 16
        %v993 = vor.u32 %v990, %v991
        %v995 = vshrl.u32 %v960, 16
        %v997 = vrot.slane %v995, 7
        %v998 = vshll.u32 %v960, 16
        %v1000 = vor.u32 %v997, %v998
        %v1002 = vshrl.u32 %v961, 16
        %v1004 = vrot.slane %v1002, 7
        %v1005 = vshll.u32 %v961, 16
        %v1007 = vor.u32 %v1004, %v1005
        %v1009 = vshrl.u32 %v962, 16
        %v1011 = vrot.slane %v1009, 7
        %v1012 = vshll.u32 %v962, 16
        %v1014 = vor.u32 %v1011, %v1012
        %v1016 = vshrl.u32 %v963, 16
        %v1018 = vrot.slane %v1016, 7
        %v1019 = vshll.u32 %v963, 16
        %v1021 = vor.u32 %v1018, %v1019
        %v1023 = vshrl.u32 %v964, 16
        %v1025 = vrot.slane %v1023, 7
        %v1026 = vshll.u32 %v964, 16
        %v1028 = vor.u32 %v1025, %v1026
        %v1030 = vshrl.u32 %v965, 16
        %v1032 = vrot.slane %v1030, 7
        %v1033 = vshll.u32 %v965, 16
        %v1035 = vor.u32 %v1032, %v1033
        %vm1056 = vcmask 1040384
        %vm1057 = vsmask.f32 256
        %vm1058 = vmand %vm1056, %vm1057
        %v1059 = vsel %vm1058, 0, %v972
        %v1060 = vsel %vm1058, 0, %v979
        %v1061 = vsel %vm1058, 0, %v986
        %v1062 = vsel %vm1058, 0, %v993
        %v1063 = vsel %vm1058, 0, %v1000
        %v1064 = vsel %vm1058, 0, %v1007
        %v1065 = vsel %vm1058, 0, %v1014
        %v1066 = vsel %vm1058, 0, %v1021
        %v1067 = vsel %vm1058, 0, %v1028
        %v1068 = vsel %vm1058, 0, %v1035
        %v1069 = vsel %vm1058, %v969, 0
        %v1070 = vsel %vm1058, %v976, 0
        %v1071 = vsel %vm1058, %v983, 0
        %v1072 = vsel %vm1058, %v990, 0
        %v1073 = vsel %vm1058, %v997, 0
        %v1074 = vsel %vm1058, %v1004, 0
        %v1075 = vsel %vm1058, %v1011, 0
        %v1076 = vsel %vm1058, %v1018, 0
        %v1077 = vsel %vm1058, %v1025, 0
        %v1078 = vsel %vm1058, %v1032, 0
        %vm1079 = vsmask.f32 7424
        %v1081 = vshrl.u32 %v1059, 16
        %v1083 = vshll.u32 %v1059, 16
        %v1085 = vrot.slane %v1083, 1
        %v1086 = vor.u32 %v1081, %v1085
        %v1088 = vshll.u32 %v1069, 16
        %v1090 = vrot.slane %v1088, 1
        %v1091 = vsel %vm1079, %v1086, %v1090
        %v1093 = vshrl.u32 %v1060, 16
        %v1095 = vshll.u32 %v1060, 16
        %v1097 = vrot.slane %v1095, 1
        %v1098 = vor.u32 %v1093, %v1097
        %v1100 = vshll.u32 %v1070, 16
        %v1102 = vrot.slane %v1100, 1
        %v1103 = vsel %vm1079, %v1098, %v1102
        %v1105 = vshrl.u32 %v1061, 16
        %v1107 = vshll.u32 %v1061, 16
        %v1109 = vrot.slane %v1107, 1
        %v1110 = vor.u32 %v1105, %v1109
        %v1112 = vshll.u32 %v1071, 16
        %v1114 = vrot.slane %v1112, 1
        %v1115 = vsel %vm1079, %v1110, %v1114
        %v1117 = vshrl.u32 %v1062, 16
        %v1119 = vshll.u32 %v1062, 16
        %v1121 = vrot.slane %v1119, 1
        %v1122 = vor.u32 %v1117, %v1121
        %v1124 = vshll.u32 %v1072, 16
        %v1126 = vrot.slane %v1124, 1
        %v1127 = vsel %vm1079, %v1122, %v1126
        %v1129 = vshrl.u32 %v1063, 16
        %v1131 = vshll.u32 %v1063, 16
        %v1133 = vrot.slane %v1131, 1
        %v1134 = vor.u32 %v1129, %v1133
        %v1136 = vshll.u32 %v1073, 16
        %v1138 = vrot.slane %v1136, 1
        %v1139 = vsel %vm1079, %v1134, %v1138
        %v1141 = vshrl.u32 %v1064, 16
        %v1143 = vshll.u32 %v1064, 16
        %v1145 = vrot.slane %v1143, 1
        %v1146 = vor.u32 %v1141, %v1145
        %v1148 = vshll.u32 %v1074, 16
        %v1150 = vrot.slane %v1148, 1
        %v1151 = vsel %vm1079, %v1146, %v1150
        %v1153 = vshrl.u32 %v1065, 16
        %v1155 = vshll.u32 %v1065, 16
        %v1157 = vrot.slane %v1155, 1
        %v1158 = vor.u32 %v1153, %v1157
        %v1160 = vshll.u32 %v1075, 16
        %v1162 = vrot.slane %v1160, 1
        %v1163 = vsel %vm1079, %v1158, %v1162
        %v1165 = vshrl.u32 %v1066, 16
        %v1167 = vshll.u32 %v1066, 16
        %v1169 = vrot.slane %v1167, 1
        %v1170 = vor.u32 %v1165, %v1169
        %v1172 = vshll.u32 %v1076, 16
        %v1174 = vrot.slane %v1172, 1
        %v1175 = vsel %vm1079, %v1170, %v1174
        %1176 = vrot.lane.b32.xlu0 %v1091, 64
        %v1177 = vpop.permute.xlu0 %1176
        %1178 = vrot.lane.b32.xlu0 %v1103, 64
        %v1179 = vpop.permute.xlu0 %1178
        %1180 = vrot.lane.b32.xlu0 %v1115, 64
        %v1181 = vpop.permute.xlu0 %1180
        %1182 = vrot.lane.b32.xlu0 %v1127, 64
        %v1183 = vpop.permute.xlu0 %1182
        %1184 = vrot.lane.b32.xlu0 %v1139, 64
        %v1185 = vpop.permute.xlu0 %1184
        %1186 = vrot.lane.b32.xlu0 %v1151, 64
        %v1187 = vpop.permute.xlu0 %1186
        %1188 = vrot.lane.b32.xlu0 %v1163, 64
        %v1189 = vpop.permute.xlu0 %1188
        %1190 = vrot.lane.b32.xlu0 %v1175, 64
        %v1191 = vpop.permute.xlu0 %1190
        %vm1208 = vcmask 1046528
        %v1209 = vrot.slane %v1059, 1
        %v1210 = vrot.slane %v1069, 1
        %v1211 = vsel %vm1208, %v1209, %v1210
        %v1212 = vrot.slane %v1060, 1
        %v1213 = vrot.slane %v1070, 1
        %v1214 = vsel %vm1208, %v1212, %v1213
        %v1215 = vrot.slane %v1061, 1
        %v1216 = vrot.slane %v1071, 1
        %v1217 = vsel %vm1208, %v1215, %v1216
        %v1218 = vrot.slane %v1062, 1
        %v1219 = vrot.slane %v1072, 1
        %v1220 = vsel %vm1208, %v1218, %v1219
        %v1221 = vrot.slane %v1063, 1
        %v1222 = vrot.slane %v1073, 1
        %v1223 = vsel %vm1208, %v1221, %v1222
        %v1224 = vrot.slane %v1064, 1
        %v1225 = vrot.slane %v1074, 1
        %v1226 = vsel %vm1208, %v1224, %v1225
        %v1227 = vrot.slane %v1065, 1
        %v1228 = vrot.slane %v1075, 1
        %v1229 = vsel %vm1208, %v1227, %v1228
        %v1230 = vrot.slane %v1066, 1
        %v1231 = vrot.slane %v1076, 1
        %v1232 = vsel %vm1208, %v1230, %v1231
        %1234 = vrot.lane.b32.xlu0 %v1060, 64
        %v1235 = vpop.permute.xlu0 %1234
        %1236 = vrot.lane.b32.xlu0 %v1061, 64
        %v1237 = vpop.permute.xlu0 %1236
        %1238 = vrot.lane.b32.xlu0 %v1062, 64
        %v1239 = vpop.permute.xlu0 %1238
        %1240 = vrot.lane.b32.xlu0 %v1063, 64
        %v1241 = vpop.permute.xlu0 %1240
        %1242 = vrot.lane.b32.xlu0 %v1064, 64
        %v1243 = vpop.permute.xlu0 %1242
        %1244 = vrot.lane.b32.xlu0 %v1065, 64
        %v1245 = vpop.permute.xlu0 %1244
        %1246 = vrot.lane.b32.xlu0 %v1066, 64
        %v1247 = vpop.permute.xlu0 %1246
        %1248 = vrot.lane.b32.xlu0 %v1067, 64
        %v1249 = vpop.permute.xlu0 %1248
        %v1251 = vshrl.u32 %v1067, 16
        %v1253 = vshll.u32 %v1067, 16
        %v1255 = vrot.slane %v1253, 1
        %v1256 = vor.u32 %v1251, %v1255
        %v1258 = vshll.u32 %v1077, 16
        %v1260 = vrot.slane %v1258, 1
        %v1261 = vsel %vm1079, %v1256, %v1260
        %v1263 = vrot.slane %v1067, 1
        %v1264 = vrot.slane %v1077, 1
        %v1265 = vsel %vm1208, %v1263, %v1264
        %1266 = vrot.lane.b32.xlu0 %v1214, 64
        %v1267 = vpop.permute.xlu0 %1266
        %1268 = vrot.lane.b32.xlu0 %v1217, 64
        %v1269 = vpop.permute.xlu0 %1268
        %1270 = vrot.lane.b32.xlu0 %v1220, 64
        %v1271 = vpop.permute.xlu0 %1270
        %1272 = vrot.lane.b32.xlu0 %v1223, 64
        %v1273 = vpop.permute.xlu0 %1272
        %1274 = vrot.lane.b32.xlu0 %v1226, 64
        %v1275 = vpop.permute.xlu0 %1274
        %1276 = vrot.lane.b32.xlu0 %v1229, 64
        %v1277 = vpop.permute.xlu0 %1276
        %1278 = vrot.lane.b32.xlu0 %v1232, 64
        %v1279 = vpop.permute.xlu0 %1278
        %1280 = vrot.lane.b32.xlu0 %v1265, 64
        %v1281 = vpop.permute.xlu0 %1280
        %v1283 = vshrl.u32 %v1068, 16
        %v1285 = vshll.u32 %v1068, 16
        %v1287 = vrot.slane %v1285, 1
        %v1288 = vor.u32 %v1283, %v1287
        %v1290 = vshll.u32 %v1078, 16
        %v1292 = vrot.slane %v1290, 1
        %v1293 = vsel %vm1079, %v1288, %v1292
        %1294 = vrot.lane.b32.xlu0 %v1261, 64
        %v1295 = vpop.permute.xlu0 %1294
        %1296 = vrot.lane.b32.xlu0 %v1293, 64
        %v1297 = vpop.permute.xlu0 %1296
        %v1300 = vrot.slane %v1068, 1
        %v1301 = vrot.slane %v1078, 1
        %v1302 = vsel %vm1208, %v1300, %v1301
        %vm1303 = vcmask 523264
        %v1305 = vsel %vm1303, %v1059, %v1177
        %v1308 = vsel %vm1303, %v1060, %v1179
        %v1311 = vsel %vm1303, %v1061, %v1181
        %v1314 = vsel %vm1303, %v1062, %v1183
        %v1317 = vsel %vm1303, %v1063, %v1185
        %v1320 = vsel %vm1303, %v1064, %v1187
        %v1323 = vsel %vm1303, %v1065, %v1189
        %v1326 = vsel %vm1303, %v1066, %v1191
        %v1330 = vsel %vm1303, %v1211, %v1235
        %v1334 = vsel %vm1303, %v1214, %v1237
        %v1338 = vsel %vm1303, %v1217, %v1239
        %v1342 = vsel %vm1303, %v1220, %v1241
        %v1346 = vsel %vm1303, %v1223, %v1243
        %v1350 = vsel %vm1303, %v1226, %v1245
        %v1354 = vsel %vm1303, %v1229, %v1247
        %v1358 = vsel %vm1303, %v1232, %v1249
        %v1362 = vsel %vm1303, %v1103, %v1267
        %v1366 = vsel %vm1303, %v1115, %v1269
        %v1370 = vsel %vm1303, %v1127, %v1271
        %v1374 = vsel %vm1303, %v1139, %v1273
        %v1378 = vsel %vm1303, %v1151, %v1275
        %v1382 = vsel %vm1303, %v1163, %v1277
        %v1386 = vsel %vm1303, %v1175, %v1279
        %v1390 = vsel %vm1303, %v1261, %v1281
        %v1393 = vsel %vm1303, %v1067, %v1295
        %v1396 = vsel %vm1303, %v1068, %v1297
        %v1398 = vld [vmem:[%s5] sm:$0xf]
        %v1399 = vld [vmem:[%s5 + $0x4] sm:$0xf]
        %v1400 = vld [vmem:[%s5 + $0x8] sm:$0xf]
        %v1401 = vld [vmem:[%s5 + $0xc] sm:$0xf]
        %v1402 = vld [vmem:[%s5 + $0x10] sm:$0xf]
        %v1403 = vld [vmem:[%s5 + $0x14] sm:$0xf]
        %v1404 = vld [vmem:[%s5 + $0x18] sm:$0xf]
        %v1405 = vld [vmem:[%s5 + $0x1c] sm:$0xf]
        %v1406 = vld [vmem:[%s5 + $0x20] sm:$0xf]
        %v1407 = vld [vmem:[%s5 + $0x24] sm:$0xf]
        %v1408 = vld [vmem:[%s5 + $0x28] sm:$0xf]
        %v1409 = vld [vmem:[%s5 + $0x2c] sm:$0xf]
        %v1410 = vld [vmem:[%s5 + $0x30] sm:$0xf]
        %v1411 = vld [vmem:[%s5 + $0x34] sm:$0xf]
        %v1412 = vld [vmem:[%s5 + $0x38] sm:$0xf]
        %v1413 = vld [vmem:[%s5 + $0x3c] sm:$0xf]
        %v1414 = vld [vmem:[%s5 + $0x40] sm:$0xf]
        %v1415 = vld [vmem:[%s5 + $0x44] sm:$0xf]
        %v1416 = vld [vmem:[%s5 + $0x48] sm:$0xf]
        %v1417 = vld [vmem:[%s5 + $0x4c] sm:$0xf]
        %v1418 = vld [vmem:[%s5 + $0x50] sm:$0xf]
        %v1419 = vld [vmem:[%s5 + $0x54] sm:$0xf]
        %v1420 = vld [vmem:[%s5 + $0x58] sm:$0xf]
        %v1421 = vld [vmem:[%s5 + $0x5c] sm:$0xf]
        %v1422 = vld [vmem:[%s5 + $0x60] sm:$0xf]
        %v1423 = vld [vmem:[%s5 + $0x64] sm:$0xf]
        %v1424 = vld [vmem:[%s5 + $0x68] sm:$0xf]
        %v1425 = vld [vmem:[%s5 + $0x6c] sm:$0xf]
        %v1426 = vld [vmem:[%s5 + $0x70] sm:$0xf]
        %v1427 = vld [vmem:[%s5 + $0x74] sm:$0xf]
        %v1428 = vld [vmem:[%s5 + $0x78] sm:$0xf]
        %v1429 = vld [vmem:[%s5 + $0x7c] sm:$0xf]
        %v1430 = vld [vmem:[%s5 + $0x80] sm:$0xf]
        %v1431 = vld [vmem:[%s5 + $0x84] sm:$0xf]
        %v1432 = vld [vmem:[%s5 + $0x88] sm:$0xf]
        %v1433 = vld [vmem:[%s5 + $0x8c] sm:$0xf]
        %v1434 = vld [vmem:[%s5 + $0x90] sm:$0xf]
        %v1435 = vld [vmem:[%s5 + $0x94] sm:$0xf]
        %v1436 = vld [vmem:[%s5 + $0x98] sm:$0xf]
        %v1437 = vld [vmem:[%s5 + $0x9c] sm:$0xf]
        %v1438 = vld [vmem:[%s5 + $0xa0] sm:$0xf]
        %v1439 = vld [vmem:[%s5 + $0xa4] sm:$0xf]
        %v1440 = vld [vmem:[%s5 + $0xa8] sm:$0xf]
        %v1441 = vld [vmem:[%s5 + $0xac] sm:$0xf]
        %v1442 = vld [vmem:[%s5 + $0xb0] sm:$0xf]
        %v1443 = vld [vmem:[%s5 + $0xb4] sm:$0xf]
        %v1444 = vld [vmem:[%s5 + $0xb8] sm:$0xf]
        %v1445 = vld [vmem:[%s5 + $0xbc] sm:$0xf]
        %v1446 = vld [vmem:[%s5 + $0xc0] sm:$0xf]
        %v1447 = vld [vmem:[%s5 + $0xc4] sm:$0xf]
        %v1448 = vld [vmem:[%s5 + $0xc8] sm:$0xf]
        %v1449 = vld [vmem:[%s5 + $0xcc] sm:$0xf]
        %v1450 = vld [vmem:[%s5 + $0xd0] sm:$0xf]
        %v1451 = vld [vmem:[%s5 + $0xd4] sm:$0xf]
        %v1452 = vld [vmem:[%s5 + $0xd8] sm:$0xf]
        %v1453 = vld [vmem:[%s5 + $0xdc] sm:$0xf]
        %v1454 = vld [vmem:[%s5 + $0xe0] sm:$0xf]
        %v1455 = vld [vmem:[%s5 + $0xe4] sm:$0xf]
        %v1456 = vld [vmem:[%s5 + $0xe8] sm:$0xf]
        %v1457 = vld [vmem:[%s5 + $0xec] sm:$0xf]
        %v1458 = vld [vmem:[%s5 + $0xf0] sm:$0xf]
        %v1459 = vld [vmem:[%s5 + $0xf4] sm:$0xf]
        %v1460 = vld [vmem:[%s5 + $0xf8] sm:$0xf]
        %v1461 = vld [vmem:[%s5 + $0xfc] sm:$0xf]
        %v1462 = vld [vmem:[%s5 + $0x100] sm:$0xf]
        %v1463 = vld [vmem:[%s5 + $0x104] sm:$0xf]
        %v1464 = vld [vmem:[%s5 + $0x108] sm:$0xf]
        %v1465 = vld [vmem:[%s5 + $0x10c] sm:$0xf]
        %v1466 = vld [vmem:[%s5 + $0x110] sm:$0xf]
        %v1467 = vld [vmem:[%s5 + $0x114] sm:$0xf]
        %v1468 = vld [vmem:[%s5 + $0x118] sm:$0xf]
        %v1469 = vld [vmem:[%s5 + $0x11c] sm:$0xf]
        %v1470 = vld [vmem:[%s6] sm:$0x1]
        %v1472 = vlaneseq
        %v1473 = vshrl.u32 %v1472, 7
        %v1474 = vsub.s32 0, %v1473
        %v1475 = vrot.slane %v1470, %v1474
        %v1549 = vunpack.c.l.b16 %v1398
        %v1550 = vunpack.c.l.b16 %v1399
        %v1551 = vunpack.c.l.b16 %v1400
        %v1552 = vunpack.c.l.b16 %v1401
        %v1553 = vunpack.c.l.b16 %v1402
        %v1554 = vunpack.c.l.b16 %v1403
        %v1555 = vunpack.c.l.b16 %v1404
        %v1556 = vunpack.c.l.b16 %v1405
        %v1557 = vunpack.c.l.b16 %v1406
        %v1558 = vunpack.c.l.b16 %v1407
        %v1559 = vunpack.c.l.b16 %v1408
        %v1560 = vunpack.c.l.b16 %v1409
        %v1561 = vunpack.c.l.b16 %v1410
        %v1562 = vunpack.c.l.b16 %v1411
        %v1563 = vunpack.c.l.b16 %v1412
        %v1564 = vunpack.c.l.b16 %v1413
        %v1565 = vunpack.c.l.b16 %v1414
        %v1566 = vunpack.c.l.b16 %v1415
        %v1567 = vunpack.c.l.b16 %v1416
        %v1568 = vunpack.c.l.b16 %v1417
        %v1569 = vunpack.c.l.b16 %v1418
        %v1570 = vunpack.c.l.b16 %v1419
        %v1571 = vunpack.c.l.b16 %v1420
        %v1572 = vunpack.c.l.b16 %v1421
        %v1573 = vunpack.c.l.b16 %v1422
        %v1574 = vunpack.c.l.b16 %v1423
        %v1575 = vunpack.c.l.b16 %v1424
        %v1576 = vunpack.c.l.b16 %v1425
        %v1577 = vunpack.c.l.b16 %v1426
        %v1578 = vunpack.c.l.b16 %v1427
        %v1579 = vunpack.c.l.b16 %v1428
        %v1580 = vunpack.c.l.b16 %v1429
        %v1581 = vunpack.c.l.b16 %v1430
        %v1582 = vunpack.c.l.b16 %v1431
        %v1583 = vunpack.c.l.b16 %v1432
        %v1584 = vunpack.c.l.b16 %v1433
        %v1585 = vunpack.c.l.b16 %v1434
        %v1586 = vunpack.c.l.b16 %v1435
        %v1587 = vunpack.c.l.b16 %v1436
        %v1588 = vunpack.c.l.b16 %v1437
        %v1589 = vunpack.c.l.b16 %v1438
        %v1590 = vunpack.c.l.b16 %v1439
        %v1591 = vunpack.c.l.b16 %v1440
        %v1592 = vunpack.c.l.b16 %v1441
        %v1593 = vunpack.c.l.b16 %v1442
        %v1594 = vunpack.c.l.b16 %v1443
        %v1595 = vunpack.c.l.b16 %v1444
        %v1596 = vunpack.c.l.b16 %v1445
        %v1597 = vunpack.c.l.b16 %v1446
        %v1598 = vunpack.c.l.b16 %v1447
        %v1599 = vunpack.c.l.b16 %v1448
        %v1600 = vunpack.c.l.b16 %v1449
        %v1601 = vunpack.c.l.b16 %v1450
        %v1602 = vunpack.c.l.b16 %v1451
        %v1603 = vunpack.c.l.b16 %v1452
        %v1604 = vunpack.c.l.b16 %v1453
        %v1605 = vunpack.c.l.b16 %v1454
        %v1606 = vunpack.c.l.b16 %v1455
        %v1607 = vunpack.c.l.b16 %v1456
        %v1608 = vunpack.c.l.b16 %v1457
        %v1609 = vunpack.c.l.b16 %v1458
        %v1610 = vunpack.c.l.b16 %v1459
        %v1611 = vunpack.c.l.b16 %v1460
        %v1612 = vunpack.c.l.b16 %v1461
        %v1613 = vunpack.c.l.b16 %v1462
        %v1614 = vunpack.c.l.b16 %v1463
        %v1615 = vunpack.c.l.b16 %v1464
        %v1616 = vunpack.c.l.b16 %v1465
        %v1617 = vunpack.c.l.b16 %v1466
        %v1618 = vunpack.c.l.b16 %v1467
        %v1619 = vunpack.c.l.b16 %v1468
        %v1620 = vunpack.c.l.b16 %v1469
        %v1621 = vpack.c.b16 %v1550, %v1549
        %v1622 = vpack.c.b16 %v1552, %v1551
        %v1623 = vpack.c.b16 %v1554, %v1553
        %v1624 = vpack.c.b16 %v1556, %v1555
        %v1625 = vpack.c.b16 %v1558, %v1557
        %v1626 = vpack.c.b16 %v1560, %v1559
        %v1627 = vpack.c.b16 %v1562, %v1561
        %v1628 = vpack.c.b16 %v1564, %v1563
        %v1629 = vpack.c.b16 %v1566, %v1565
        %v1630 = vpack.c.b16 %v1568, %v1567
        %v1631 = vpack.c.b16 %v1570, %v1569
        %v1632 = vpack.c.b16 %v1572, %v1571
        %v1633 = vpack.c.b16 %v1574, %v1573
        %v1634 = vpack.c.b16 %v1576, %v1575
        %v1635 = vpack.c.b16 %v1578, %v1577
        %v1636 = vpack.c.b16 %v1580, %v1579
        %v1637 = vpack.c.b16 %v1582, %v1581
        %v1638 = vpack.c.b16 %v1584, %v1583
        %v1639 = vpack.c.b16 %v1586, %v1585
        %v1640 = vpack.c.b16 %v1588, %v1587
        %v1641 = vpack.c.b16 %v1590, %v1589
        %v1642 = vpack.c.b16 %v1592, %v1591
        %v1643 = vpack.c.b16 %v1594, %v1593
        %v1644 = vpack.c.b16 %v1596, %v1595
        %v1645 = vpack.c.b16 %v1598, %v1597
        %v1646 = vpack.c.b16 %v1600, %v1599
        %v1647 = vpack.c.b16 %v1602, %v1601
        %v1648 = vpack.c.b16 %v1604, %v1603
        %v1649 = vpack.c.b16 %v1606, %v1605
        %v1650 = vpack.c.b16 %v1608, %v1607
        %v1651 = vpack.c.b16 %v1610, %v1609
        %v1652 = vpack.c.b16 %v1612, %v1611
        %v1653 = vpack.c.b16 %v1614, %v1613
        %v1654 = vpack.c.b16 %v1616, %v1615
        %v1655 = vpack.c.b16 %v1618, %v1617
        %v1656 = vpack.c.b16 %v1620, %v1619
        %v1693 = vsel %vm1303, %v1217, 0
        %v1695 = vsel %vm1303, %v1220, 0
        %v1697 = vsel %vm1303, %v1223, 0
        %v1699 = vsel %vm1303, %v1226, 0
        %v1701 = vsel %vm1303, %v1229, 0
        %v1703 = vsel %vm1303, %v1232, 0
        %v1706 = vsel %vm1303, %v1265, 0
        %v1709 = vsel %vm1303, %v1302, 0
        %1711 = vmatprep.subr.bf16.mxu0 0
        %1712 = vmatpush1.bf16.msra.mxu0 %v1621
        %1713 = vmatprep.subr.bf16.mxu0 0
        %1714 = vmatpush1.bf16.msra.mxu0 %v1622
        %1715 = vmatprep.subr.bf16.mxu0 0
        %1716 = vmatpush1.bf16.msra.mxu0 %v1623
        %1717 = vmatprep.subr.bf16.mxu0 0
        %1718 = vmatpush1.bf16.msra.mxu0 %v1624
        %1719 = vmatprep.subr.bf16.mxu0 0
        %1720 = vmatpush1.bf16.msra.mxu0 %v1625
        %1721 = vmatprep.subr.bf16.mxu0 0
        %1722 = vmatpush1.bf16.msra.mxu0 %v1626
        %1723 = vmatprep.subr.bf16.mxu0 0
        %1724 = vmatpush1.bf16.msra.mxu0 %v1627
        %1725 = vmatprep.subr.bf16.mxu0 0
        %1726 = vmatpush1.bf16.msra.mxu0 %v1628
        %1727 = vmatprep.subr.bf16.mxu0 0
        %1728 = vmatpush1.bf16.msra.mxu0 %v1629
        %1729 = vmatprep.subr.bf16.mxu0 0
        %1730 = vmatpush1.bf16.msra.mxu0 %v1630
        %1731 = vmatprep.subr.bf16.mxu0 0
        %1732 = vmatpush1.bf16.msra.mxu0 %v1631
        %1733 = vmatprep.subr.bf16.mxu0 0
        %1734 = vmatpush1.bf16.msra.mxu0 %v1632
        %1735 = vmatprep.subr.bf16.mxu0 0
        %1736 = vmatpush1.bf16.msra.mxu0 %v1633
        %1737 = vmatprep.subr.bf16.mxu0 0
        %1738 = vmatpush1.bf16.msra.mxu0 %v1634
        %1739 = vmatprep.subr.bf16.mxu0 0
        %1740 = vmatpush1.bf16.msra.mxu0 %v1635
        %1741 = vmatprep.subr.bf16.mxu0 0
        %1742 = vmatpush1.bf16.msra.mxu0 %v1636
        %1743 = vmatprep.mubr.bf16.mxu0 %v1330
        %1744 = vmatmul.mubr.bf16.gmra.mrb[0].mxu0 %v1305
        %v1745 = vpop.f32.mrb[0].mxu0
        %v1746 = vadd.f32 %v1475, %v1745
        %v1747 = vpop.f32.mrb[0].mxu0
        %v1748 = vpop.f32.mrb[0].mxu0
        %v1749 = vadd.f32 %v1475, %v1748
        %v1750 = vpop.f32.mrb[0].mxu0
        %1751 = vmatprep.mubr.bf16.mxu0 %v1334
        %1752 = vmatmul.mubr.bf16.gmra.mrb[0].mxu0 %v1308
        %v1753 = vpop.f32.mrb[0].mxu0
        %v1754 = vadd.f32 %v1475, %v1753
        %v1755 = vpop.f32.mrb[0].mxu0
        %v1756 = vpop.f32.mrb[0].mxu0
        %v1757 = vadd.f32 %v1475, %v1756
        %v1758 = vpop.f32.mrb[0].mxu0
        %1759 = vmatprep.mubr.bf16.mxu0 %v1338
        %1760 = vmatmul.mubr.bf16.gmra.mrb[0].mxu0 %v1311
        %v1761 = vpop.f32.mrb[0].mxu0
        %v1762 = vadd.f32 %v1475, %v1761
        %v1763 = vpop.f32.mrb[0].mxu0
        %v1764 = vpop.f32.mrb[0].mxu0
        %v1765 = vadd.f32 %v1475, %v1764
        %v1766 = vpop.f32.mrb[0].mxu0
        %1767 = vmatprep.mubr.bf16.mxu0 %v1342
        %1768 = vmatmul.mubr.bf16.gmra.mrb[0].mxu0 %v1314
        %v1769 = vpop.f32.mrb[0].mxu0
        %v1770 = vadd.f32 %v1475, %v1769
        %v1771 = vpop.f32.mrb[0].mxu0
        %v1772 = vpop.f32.mrb[0].mxu0
        %v1773 = vadd.f32 %v1475, %v1772
        %v1774 = vpop.f32.mrb[0].mxu0
        %1775 = vmatprep.mubr.bf16.mxu0 %v1346
        %1776 = vmatmul.mubr.bf16.gmra.mrb[0].mxu0 %v1317
        %v1777 = vpop.f32.mrb[0].mxu0
        %v1778 = vadd.f32 %v1475, %v1777
        %v1779 = vpop.f32.mrb[0].mxu0
        %v1780 = vpop.f32.mrb[0].mxu0
        %v1781 = vadd.f32 %v1475, %v1780
        %v1782 = vpop.f32.mrb[0].mxu0
        %1783 = vmatprep.mubr.bf16.mxu0 %v1350
        %1784 = vmatmul.mubr.bf16.gmra.mrb[0].mxu0 %v1320
        %v1785 = vpop.f32.mrb[0].mxu0
        %v1786 = vadd.f32 %v1475, %v1785
        %v1787 = vpop.f32.mrb[0].mxu0
        %v1788 = vpop.f32.mrb[0].mxu0
        %v1789 = vadd.f32 %v1475, %v1788
        %v1790 = vpop.f32.mrb[0].mxu0
        %1791 = vmatprep.mubr.bf16.mxu0 %v1354
        %1792 = vmatmul.mubr.bf16.gmra.mrb[0].mxu0 %v1323
        %v1793 = vpop.f32.mrb[0].mxu0
        %v1794 = vadd.f32 %v1475, %v1793
        %v1795 = vpop.f32.mrb[0].mxu0
        %v1796 = vpop.f32.mrb[0].mxu0
        %v1797 = vadd.f32 %v1475, %v1796
        %v1798 = vpop.f32.mrb[0].mxu0
        %1799 = vmatprep.mubr.bf16.mxu0 %v1358
        %1800 = vmatmul.mubr.bf16.gmra.mrb[0].mxu0 %v1326
        %v1801 = vpop.f32.mrb[0].mxu0
        %v1802 = vadd.f32 %v1475, %v1801
        %v1803 = vpop.f32.mrb[0].mxu0
        %v1804 = vpop.f32.mrb[0].mxu0
        %v1805 = vadd.f32 %v1475, %v1804
        %v1806 = vpop.f32.mrb[0].mxu0
        %1807 = vdwg.mxu0
        %1808 = vmatprep.subr.bf16.mxu0 0
        %1809 = vmatpush1.bf16.msra.mxu0 %v1637
        %1810 = vmatprep.subr.bf16.mxu0 0
        %1811 = vmatpush1.bf16.msra.mxu0 %v1638
        %1812 = vmatprep.subr.bf16.mxu0 0
        %1813 = vmatpush1.bf16.msra.mxu0 %v1639
        %1814 = vmatprep.subr.bf16.mxu0 0
        %1815 = vmatpush1.bf16.msra.mxu0 %v1640
        %1816 = vmatprep.subr.bf16.mxu0 0
        %1817 = vmatpush1.bf16.msra.mxu0 %v1641
        %1818 = vmatprep.subr.bf16.mxu0 0
        %1819 = vmatpush1.bf16.msra.mxu0 %v1642
        %1820 = vmatprep.subr.bf16.mxu0 0
        %1821 = vmatpush1.bf16.msra.mxu0 %v1643
        %1822 = vmatprep.subr.bf16.mxu0 0
        %1823 = vmatpush1.bf16.msra.mxu0 %v1644
        %1824 = vmatprep.subr.bf16.mxu0 0
        %1825 = vmatpush1.bf16.msra.mxu0 %v1645
        %1826 = vmatprep.subr.bf16.mxu0 0
        %1827 = vmatpush1.bf16.msra.mxu0 %v1646
        %1828 = vmatprep.subr.bf16.mxu0 0
        %1829 = vmatpush1.bf16.msra.mxu0 %v1647
        %1830 = vmatprep.subr.bf16.mxu0 0
        %1831 = vmatpush1.bf16.msra.mxu0 %v1648
        %1832 = vmatprep.subr.bf16.mxu0 0
        %1833 = vmatpush1.bf16.msra.mxu0 %v1649
        %1834 = vmatprep.subr.bf16.mxu0 0
        %1835 = vmatpush1.bf16.msra.mxu0 %v1650
        %1836 = vmatprep.subr.bf16.mxu0 0
        %1837 = vmatpush1.bf16.msra.mxu0 %v1651
        %1838 = vmatprep.subr.bf16.mxu0 0
        %1839 = vmatpush1.bf16.msra.mxu0 %v1652
        %1840 = vmatprep.mubr.bf16.mxu0 %v1311
        %1841 = vmatmul.mubr.bf16.gmra.mrb[0].mxu0 %v1362
        %v1842 = vpop.f32.mrb[0].mxu0
        %v1843 = vadd.f32 %v1746, %v1842
        %v1844 = vpop.f32.mrb[0].mxu0
        %v1845 = vpop.f32.mrb[0].mxu0
        %v1846 = vadd.f32 %v1749, %v1845
        %v1847 = vpop.f32.mrb[0].mxu0
        %1848 = vmatprep.mubr.bf16.mxu0 %v1314
        %1849 = vmatmul.mubr.bf16.gmra.mrb[0].mxu0 %v1366
        %v1850 = vpop.f32.mrb[0].mxu0
        %v1851 = vadd.f32 %v1754, %v1850
        %v1852 = vpop.f32.mrb[0].mxu0
        %v1853 = vpop.f32.mrb[0].mxu0
        %v1854 = vadd.f32 %v1757, %v1853
        %v1855 = vpop.f32.mrb[0].mxu0
        %1856 = vmatprep.mubr.bf16.mxu0 %v1317
        %1857 = vmatmul.mubr.bf16.gmra.mrb[0].mxu0 %v1370
        %v1858 = vpop.f32.mrb[0].mxu0
        %v1859 = vadd.f32 %v1762, %v1858
        %v1860 = vpop.f32.mrb[0].mxu0
        %v1861 = vpop.f32.mrb[0].mxu0
        %v1862 = vadd.f32 %v1765, %v1861
        %v1863 = vpop.f32.mrb[0].mxu0
        %1864 = vmatprep.mubr.bf16.mxu0 %v1320
        %1865 = vmatmul.mubr.bf16.gmra.mrb[0].mxu0 %v1374
        %v1866 = vpop.f32.mrb[0].mxu0
        %v1867 = vadd.f32 %v1770, %v1866
        %v1868 = vpop.f32.mrb[0].mxu0
        %v1869 = vpop.f32.mrb[0].mxu0
        %v1870 = vadd.f32 %v1773, %v1869
        %v1871 = vpop.f32.mrb[0].mxu0
        %1872 = vmatprep.mubr.bf16.mxu0 %v1323
        %1873 = vmatmul.mubr.bf16.gmra.mrb[0].mxu0 %v1378
        %v1874 = vpop.f32.mrb[0].mxu0
        %v1875 = vadd.f32 %v1778, %v1874
        %v1876 = vpop.f32.mrb[0].mxu0
        %v1877 = vpop.f32.mrb[0].mxu0
        %v1878 = vadd.f32 %v1781, %v1877
        %v1879 = vpop.f32.mrb[0].mxu0
        %1880 = vmatprep.mubr.bf16.mxu0 %v1326
        %1881 = vmatmul.mubr.bf16.gmra.mrb[0].mxu0 %v1382
        %v1882 = vpop.f32.mrb[0].mxu0
        %v1883 = vadd.f32 %v1786, %v1882
        %v1884 = vpop.f32.mrb[0].mxu0
        %v1885 = vpop.f32.mrb[0].mxu0
        %v1886 = vadd.f32 %v1789, %v1885
        %v1887 = vpop.f32.mrb[0].mxu0
        %1888 = vmatprep.mubr.bf16.mxu0 %v1393
        %1889 = vmatmul.mubr.bf16.gmra.mrb[0].mxu0 %v1386
        %v1890 = vpop.f32.mrb[0].mxu0
        %v1891 = vadd.f32 %v1794, %v1890
        %v1892 = vpop.f32.mrb[0].mxu0
        %v1893 = vpop.f32.mrb[0].mxu0
        %v1894 = vadd.f32 %v1797, %v1893
        %v1895 = vpop.f32.mrb[0].mxu0
        %1896 = vmatprep.mubr.bf16.mxu0 %v1396
        %1897 = vmatmul.mubr.bf16.gmra.mrb[0].mxu0 %v1390
        %v1898 = vpop.f32.mrb[0].mxu0
        %v1899 = vadd.f32 %v1802, %v1898
        %v1900 = vpop.f32.mrb[0].mxu0
        %v1901 = vpop.f32.mrb[0].mxu0
        %v1902 = vadd.f32 %v1805, %v1901
        %v1903 = vpop.f32.mrb[0].mxu0
        %1904 = vdwg.mxu0
        %1905 = vmatprep.subr.bf16.mxu0 0
        %1906 = vmatpush1.bf16.msra.mxu0 %v1653
        %1907 = vmatprep.subr.bf16.mxu0 0
        %1908 = vmatpush1.bf16.msra.mxu0 %v1654
        %1909 = vmatprep.subr.bf16.mxu0 0
        %1910 = vmatpush1.bf16.msra.mxu0 %v1655
        %1911 = vmatprep.subr.bf16.mxu0 0
        %1912 = vmatpush1.bf16.msra.mxu0 %v1656
        %1913 = vmatprep.subr.bf16.mxu0 0
        %1914 = vmatpush1.bf16.msra.mxu0 0
        %1915 = vmatprep.subr.bf16.mxu0 0
        %1916 = vmatpush1.bf16.msra.mxu0 0
        %1917 = vmatprep.subr.bf16.mxu0 0
        %1918 = vmatpush1.bf16.msra.mxu0 0
        %1919 = vmatprep.subr.bf16.mxu0 0
        %1920 = vmatpush1.bf16.msra.mxu0 0
        %1921 = vmatprep.subr.bf16.mxu0 0
        %1922 = vmatpush1.bf16.msra.mxu0 0
        %1923 = vmatprep.subr.bf16.mxu0 0
        %1924 = vmatpush1.bf16.msra.mxu0 0
        %1925 = vmatprep.subr.bf16.mxu0 0
        %1926 = vmatpush1.bf16.msra.mxu0 0
        %1927 = vmatprep.subr.bf16.mxu0 0
        %1928 = vmatpush1.bf16.msra.mxu0 0
        %1929 = vmatprep.subr.bf16.mxu0 0
        %1930 = vmatpush1.bf16.msra.mxu0 0
        %1931 = vmatprep.subr.bf16.mxu0 0
        %1932 = vmatpush1.bf16.msra.mxu0 0
        %1933 = vmatprep.subr.bf16.mxu0 0
        %1934 = vmatpush1.bf16.msra.mxu0 0
        %1935 = vmatprep.subr.bf16.mxu0 0
        %1936 = vmatpush1.bf16.msra.mxu0 0
        %1937 = vmatprep.mubr.bf16.mxu0 0
        %1938 = vmatmul.mubr.bf16.gmra.mrb[0].mxu0 %v1693
        %v1939 = vpop.f32.mrb[0].mxu0
        %v1940 = vadd.f32 %v1843, %v1939
        %v1941 = vpop.f32.mrb[0].mxu0
        %v1942 = vpop.f32.mrb[0].mxu0
        %v1943 = vadd.f32 %v1846, %v1942
        %v1944 = vpop.f32.mrb[0].mxu0
        %1945 = vmatprep.mubr.bf16.mxu0 0
        %1946 = vmatmul.mubr.bf16.gmra.mrb[0].mxu0 %v1695
        %v1947 = vpop.f32.mrb[0].mxu0
        %v1948 = vadd.f32 %v1851, %v1947
        %v1949 = vpop.f32.mrb[0].mxu0
        %v1950 = vpop.f32.mrb[0].mxu0
        %v1951 = vadd.f32 %v1854, %v1950
        %v1952 = vpop.f32.mrb[0].mxu0
        %1953 = vmatprep.mubr.bf16.mxu0 0
        %1954 = vmatmul.mubr.bf16.gmra.mrb[0].mxu0 %v1697
        %v1955 = vpop.f32.mrb[0].mxu0
        %v1956 = vadd.f32 %v1859, %v1955
        %v1957 = vpop.f32.mrb[0].mxu0
        %v1958 = vpop.f32.mrb[0].mxu0
        %v1959 = vadd.f32 %v1862, %v1958
        %v1960 = vpop.f32.mrb[0].mxu0
        %1961 = vmatprep.mubr.bf16.mxu0 0
        %1962 = vmatmul.mubr.bf16.gmra.mrb[0].mxu0 %v1699
        %v1963 = vpop.f32.mrb[0].mxu0
        %v1964 = vadd.f32 %v1867, %v1963
        %v1965 = vpop.f32.mrb[0].mxu0
        %v1966 = vpop.f32.mrb[0].mxu0
        %v1967 = vadd.f32 %v1870, %v1966
        %v1968 = vpop.f32.mrb[0].mxu0
        %1969 = vmatprep.mubr.bf16.mxu0 0
        %1970 = vmatmul.mubr.bf16.gmra.mrb[0].mxu0 %v1701
        %v1971 = vpop.f32.mrb[0].mxu0
        %v1972 = vadd.f32 %v1875, %v1971
        %v1973 = vpop.f32.mrb[0].mxu0
        %v1974 = vpop.f32.mrb[0].mxu0
        %v1975 = vadd.f32 %v1878, %v1974
        %v1976 = vpop.f32.mrb[0].mxu0
        %1977 = vmatprep.mubr.bf16.mxu0 0
        %1978 = vmatmul.mubr.bf16.gmra.mrb[0].mxu0 %v1703
        %v1979 = vpop.f32.mrb[0].mxu0
        %v1980 = vadd.f32 %v1883, %v1979
        %v1981 = vpop.f32.mrb[0].mxu0
        %v1982 = vpop.f32.mrb[0].mxu0
        %v1983 = vadd.f32 %v1886, %v1982
        %v1984 = vpop.f32.mrb[0].mxu0
        %1985 = vmatprep.mubr.bf16.mxu0 0
        %1986 = vmatmul.mubr.bf16.gmra.mrb[0].mxu0 %v1706
        %v1987 = vpop.f32.mrb[0].mxu0
        %v1988 = vadd.f32 %v1891, %v1987
        %v1989 = vpop.f32.mrb[0].mxu0
        %v1990 = vpop.f32.mrb[0].mxu0
        %v1991 = vadd.f32 %v1894, %v1990
        %v1992 = vpop.f32.mrb[0].mxu0
        %1993 = vmatprep.mubr.bf16.mxu0 0
        %1994 = vmatmul.mubr.bf16.gmra.mrb[0].mxu0 %v1709
        %v1995 = vpop.f32.mrb[0].mxu0
        %v1996 = vadd.f32 %v1899, %v1995
        %v1997 = vpop.f32.mrb[0].mxu0
        %v1998 = vpop.f32.mrb[0].mxu0
        %v1999 = vadd.f32 %v1902, %v1998
        %v2000 = vpop.f32.mrb[0].mxu0
        %2001 = vdwg.mxu0
        %v2002 = vmax.f32 %v1940, 0.0
        %v2003 = vmax.f32 %v1943, 0.0
        %v2004 = vmax.f32 %v1948, 0.0
        %v2005 = vmax.f32 %v1951, 0.0
        %v2006 = vmax.f32 %v1956, 0.0
        %v2007 = vmax.f32 %v1959, 0.0
        %v2008 = vmax.f32 %v1964, 0.0
        %v2009 = vmax.f32 %v1967, 0.0
        %v2010 = vmax.f32 %v1972, 0.0
        %v2011 = vmax.f32 %v1975, 0.0
        %v2012 = vmax.f32 %v1980, 0.0
        %v2013 = vmax.f32 %v1983, 0.0
        %v2014 = vmax.f32 %v1988, 0.0
        %v2015 = vmax.f32 %v1991, 0.0
        %v2016 = vmax.f32 %v1996, 0.0
        %v2017 = vmax.f32 %v1999, 0.0
        %v2018 = vpack.c.bf16 %v2003, %v2002
        %v2019 = vpack.c.bf16 %v2005, %v2004
        %v2020 = vpack.c.bf16 %v2007, %v2006
        %v2021 = vpack.c.bf16 %v2009, %v2008
        %v2022 = vpack.c.bf16 %v2011, %v2010
        %v2023 = vpack.c.bf16 %v2013, %v2012
        %v2024 = vpack.c.bf16 %v2015, %v2014
        %v2025 = vpack.c.bf16 %v2017, %v2016
        %v2026 = vld [vmem:[%s7] sm:$0xff]
        %v2027 = vld [vmem:[%s7 + $0x8] sm:$0xff]
        %v2028 = vld [vmem:[%s7 + $0x10] sm:$0xff]
        %v2029 = vld [vmem:[%s7 + $0x18] sm:$0xff]
        %v2030 = vld [vmem:[%s7 + $0x20] sm:$0xff]
        %v2031 = vld [vmem:[%s7 + $0x28] sm:$0xff]
        %v2032 = vld [vmem:[%s7 + $0x30] sm:$0xff]
        %v2033 = vld [vmem:[%s7 + $0x38] sm:$0xff]
        %v2034 = vld [vmem:[%s8] sm:$0x3]
        %v2036 = vlaneseq
        %v2037 = vshrl.u32 %v2036, 7
        %v2038 = vsub.s32 0, %v2037
        %v2039 = vrot.slane %v2034, %v2038
        %v2040 = vlaneseq
        %v2041 = vshrl.u32 %v2040, 7
        %v2042 = vsub.s32 1, %v2041
        %v2043 = vrot.slane %v2034, %v2042
        %v2054 = vunpack.c.l.b16 %v2026
        %v2055 = vunpack.c.h.b16 %v2026
        %v2056 = vunpack.c.l.b16 %v2027
        %v2057 = vunpack.c.h.b16 %v2027
        %v2058 = vunpack.c.l.b16 %v2028
        %v2059 = vunpack.c.h.b16 %v2028
        %v2060 = vunpack.c.l.b16 %v2029
        %v2061 = vunpack.c.h.b16 %v2029
        %v2062 = vunpack.c.l.b16 %v2030
        %v2063 = vunpack.c.h.b16 %v2030
        %v2064 = vunpack.c.l.b16 %v2031
        %v2065 = vunpack.c.h.b16 %v2031
        %v2066 = vunpack.c.l.b16 %v2032
        %v2067 = vunpack.c.h.b16 %v2032
        %v2068 = vunpack.c.l.b16 %v2033
        %v2069 = vunpack.c.h.b16 %v2033
        %v2070 = vpack.c.b16 %v2056, %v2054
        %v2071 = vpack.c.b16 %v2057, %v2055
        %v2072 = vpack.c.b16 %v2060, %v2058
        %v2073 = vpack.c.b16 %v2061, %v2059
        %v2074 = vpack.c.b16 %v2064, %v2062
        %v2075 = vpack.c.b16 %v2065, %v2063
        %v2076 = vpack.c.b16 %v2068, %v2066
        %v2077 = vpack.c.b16 %v2069, %v2067
        %v2087 = vsel %vm1303, %v2018, 0
        %v2090 = vsel %vm1303, %v2019, 0
        %v2093 = vsel %vm1303, %v2020, 0
        %v2096 = vsel %vm1303, %v2021, 0
        %v2099 = vsel %vm1303, %v2022, 0
        %v2102 = vsel %vm1303, %v2023, 0
        %v2105 = vsel %vm1303, %v2024, 0
        %v2108 = vsel %vm1303, %v2025, 0
        %2110 = vmatprep.subr.bf16.mxu0 %v2071
        %2111 = vmatpush1.bf16.msra.mxu0 %v2070
        %2112 = vmatprep.subr.bf16.mxu0 %v2073
        %2113 = vmatpush1.bf16.msra.mxu0 %v2072
        %2114 = vmatprep.subr.bf16.mxu0 %v2075
        %2115 = vmatpush1.bf16.msra.mxu0 %v2074
        %2116 = vmatprep.subr.bf16.mxu0 %v2077
        %2117 = vmatpush1.bf16.msra.mxu0 %v2076
        %2118 = vmatprep.subr.bf16.mxu0 0
        %2119 = vmatpush1.bf16.msra.mxu0 0
        %2120 = vmatprep.subr.bf16.mxu0 0
        %2121 = vmatpush1.bf16.msra.mxu0 0
        %2122 = vmatprep.subr.bf16.mxu0 0
        %2123 = vmatpush1.bf16.msra.mxu0 0
        %2124 = vmatprep.subr.bf16.mxu0 0
        %2125 = vmatpush1.bf16.msra.mxu0 0
        %2126 = vmatprep.subr.bf16.mxu0 0
        %2127 = vmatpush1.bf16.msra.mxu0 0
        %2128 = vmatprep.subr.bf16.mxu0 0
        %2129 = vmatpush1.bf16.msra.mxu0 0
        %2130 = vmatprep.subr.bf16.mxu0 0
        %2131 = vmatpush1.bf16.msra.mxu0 0
        %2132 = vmatprep.subr.bf16.mxu0 0
        %2133 = vmatpush1.bf16.msra.mxu0 0
        %2134 = vmatprep.subr.bf16.mxu0 0
        %2135 = vmatpush1.bf16.msra.mxu0 0
        %2136 = vmatprep.subr.bf16.mxu0 0
        %2137 = vmatpush1.bf16.msra.mxu0 0
        %2138 = vmatprep.subr.bf16.mxu0 0
        %2139 = vmatpush1.bf16.msra.mxu0 0
        %2140 = vmatprep.subr.bf16.mxu0 0
        %2141 = vmatpush1.bf16.msra.mxu0 0
        %2142 = vmatprep.mubr.bf16.mxu0 0
        %2143 = vmatmul.mubr.bf16.gmra.mrb[0].mxu0 %v2087
        %v2144 = vpop.f32.mrb[0].mxu0
        %v2145 = vadd.f32 %v2039, %v2144
        %v2146 = vpop.f32.mrb[0].mxu0
        %v2147 = vadd.f32 %v2043, %v2146
        %v2148 = vpop.f32.mrb[0].mxu0
        %v2149 = vadd.f32 %v2039, %v2148
        %v2150 = vpop.f32.mrb[0].mxu0
        %v2151 = vadd.f32 %v2043, %v2150
        %2152 = vmatprep.mubr.bf16.mxu0 0
        %2153 = vmatmul.mubr.bf16.gmra.mrb[0].mxu0 %v2090
        %v2154 = vpop.f32.mrb[0].mxu0
        %v2155 = vadd.f32 %v2039, %v2154
        %v2156 = vpop.f32.mrb[0].mxu0
        %v2157 = vadd.f32 %v2043, %v2156
        %v2158 = vpop.f32.mrb[0].mxu0
        %v2159 = vadd.f32 %v2039, %v2158
        %v2160 = vpop.f32.mrb[0].mxu0
        %v2161 = vadd.f32 %v2043, %v2160
        %2162 = vmatprep.mubr.bf16.mxu0 0
        %2163 = vmatmul.mubr.bf16.gmra.mrb[0].mxu0 %v2093
        %v2164 = vpop.f32.mrb[0].mxu0
        %v2165 = vadd.f32 %v2039, %v2164
        %v2166 = vpop.f32.mrb[0].mxu0
        %v2167 = vadd.f32 %v2043, %v2166
        %v2168 = vpop.f32.mrb[0].mxu0
        %v2169 = vadd.f32 %v2039, %v2168
        %v2170 = vpop.f32.mrb[0].mxu0
        %v2171 = vadd.f32 %v2043, %v2170
        %2172 = vmatprep.mubr.bf16.mxu0 0
        %2173 = vmatmul.mubr.bf16.gmra.mrb[0].mxu0 %v2096
        %v2174 = vpop.f32.mrb[0].mxu0
        %v2175 = vadd.f32 %v2039, %v2174
        %v2176 = vpop.f32.mrb[0].mxu0
        %v2177 = vadd.f32 %v2043, %v2176
        %v2178 = vpop.f32.mrb[0].mxu0
        %v2179 = vadd.f32 %v2039, %v2178
        %v2180 = vpop.f32.mrb[0].mxu0
        %v2181 = vadd.f32 %v2043, %v2180
        %2182 = vmatprep.mubr.bf16.mxu0 0
        %2183 = vmatmul.mubr.bf16.gmra.mrb[0].mxu0 %v2099
        %v2184 = vpop.f32.mrb[0].mxu0
        %v2185 = vadd.f32 %v2039, %v2184
        %v2186 = vpop.f32.mrb[0].mxu0
        %v2187 = vadd.f32 %v2043, %v2186
        %v2188 = vpop.f32.mrb[0].mxu0
        %v2189 = vadd.f32 %v2039, %v2188
        %v2190 = vpop.f32.mrb[0].mxu0
        %v2191 = vadd.f32 %v2043, %v2190
        %2192 = vmatprep.mubr.bf16.mxu0 0
        %2193 = vmatmul.mubr.bf16.gmra.mrb[0].mxu0 %v2102
        %v2194 = vpop.f32.mrb[0].mxu0
        %v2195 = vadd.f32 %v2039, %v2194
        %v2196 = vpop.f32.mrb[0].mxu0
        %v2197 = vadd.f32 %v2043, %v2196
        %v2198 = vpop.f32.mrb[0].mxu0
        %v2199 = vadd.f32 %v2039, %v2198
        %v2200 = vpop.f32.mrb[0].mxu0
        %v2201 = vadd.f32 %v2043, %v2200
        %2202 = vmatprep.mubr.bf16.mxu0 0
        %2203 = vmatmul.mubr.bf16.gmra.mrb[0].mxu0 %v2105
        %v2204 = vpop.f32.mrb[0].mxu0
        %v2205 = vadd.f32 %v2039, %v2204
        %v2206 = vpop.f32.mrb[0].mxu0
        %v2207 = vadd.f32 %v2043, %v2206
        %v2208 = vpop.f32.mrb[0].mxu0
        %v2209 = vadd.f32 %v2039, %v2208
        %v2210 = vpop.f32.mrb[0].mxu0
        %v2211 = vadd.f32 %v2043, %v2210
        %2212 = vmatprep.mubr.bf16.mxu0 0
        %2213 = vmatmul.mubr.bf16.gmra.mrb[0].mxu0 %v2108
        %v2214 = vpop.f32.mrb[0].mxu0
        %v2215 = vadd.f32 %v2039, %v2214
        %v2216 = vpop.f32.mrb[0].mxu0
        %v2217 = vadd.f32 %v2043, %v2216
        %v2218 = vpop.f32.mrb[0].mxu0
        %v2219 = vadd.f32 %v2039, %v2218
        %v2220 = vpop.f32.mrb[0].mxu0
        %v2221 = vadd.f32 %v2043, %v2220
        %2222 = vdwg.mxu0
        %v2223 = vunpack.c.l.bf16 %v523
        %v2224 = vunpack.c.h.bf16 %v523
        %v2225 = vunpack.c.l.bf16 %v524
        %v2226 = vunpack.c.h.bf16 %v524
        %v2227 = vunpack.c.l.bf16 %v525
        %v2228 = vunpack.c.h.bf16 %v525
        %v2229 = vunpack.c.l.bf16 %v526
        %v2230 = vunpack.c.h.bf16 %v526
        %v2231 = vunpack.c.l.bf16 %v527
        %v2232 = vunpack.c.h.bf16 %v527
        %v2233 = vunpack.c.l.bf16 %v528
        %v2234 = vunpack.c.h.bf16 %v528
        %v2235 = vunpack.c.l.bf16 %v529
        %v2236 = vunpack.c.h.bf16 %v529
        %v2237 = vunpack.c.l.bf16 %v530
        %v2238 = vunpack.c.h.bf16 %v530
        %v2239 = vunpack.c.l.bf16 %v531
        %v2240 = vunpack.c.h.bf16 %v531
        %v2241 = vunpack.c.l.bf16 %v532
        %v2242 = vunpack.c.h.bf16 %v532
        %v2243 = vunpack.c.l.bf16 %v533
        %v2244 = vunpack.c.h.bf16 %v533
        %v2245 = vunpack.c.l.bf16 %v534
        %v2246 = vunpack.c.h.bf16 %v534
        %v2247 = vunpack.c.l.bf16 %v535
        %v2248 = vunpack.c.h.bf16 %v535
        %v2249 = vunpack.c.l.bf16 %v536
        %v2250 = vunpack.c.h.bf16 %v536
        %v2251 = vunpack.c.l.bf16 %v537
        %v2252 = vunpack.c.h.bf16 %v537
        %v2253 = vunpack.c.l.bf16 %v538
        %v2254 = vunpack.c.h.bf16 %v538
        %v2255 = vadd.f32 %v2145, %v2223
        %v2256 = vadd.f32 %v2147, %v2224
        %v2257 = vadd.f32 %v2149, %v2225
        %v2258 = vadd.f32 %v2151, %v2226
        %v2259 = vadd.f32 %v2155, %v2227
        %v2260 = vadd.f32 %v2157, %v2228
        %v2261 = vadd.f32 %v2159, %v2229
        %v2262 = vadd.f32 %v2161, %v2230
        %v2263 = vadd.f32 %v2165, %v2231
        %v2264 = vadd.f32 %v2167, %v2232
        %v2265 = vadd.f32 %v2169, %v2233
        %v2266 = vadd.f32 %v2171, %v2234
        %v2267 = vadd.f32 %v2175, %v2235
        %v2268 = vadd.f32 %v2177, %v2236
        %v2269 = vadd.f32 %v2179, %v2237
        %v2270 = vadd.f32 %v2181, %v2238
        %v2271 = vadd.f32 %v2185, %v2239
        %v2272 = vadd.f32 %v2187, %v2240
        %v2273 = vadd.f32 %v2189, %v2241
        %v2274 = vadd.f32 %v2191, %v2242
        %v2275 = vadd.f32 %v2195, %v2243
        %v2276 = vadd.f32 %v2197, %v2244
        %v2277 = vadd.f32 %v2199, %v2245
        %v2278 = vadd.f32 %v2201, %v2246
        %v2279 = vadd.f32 %v2205, %v2247
        %v2280 = vadd.f32 %v2207, %v2248
        %v2281 = vadd.f32 %v2209, %v2249
        %v2282 = vadd.f32 %v2211, %v2250
        %v2283 = vadd.f32 %v2215, %v2251
        %v2284 = vadd.f32 %v2217, %v2252
        %v2285 = vadd.f32 %v2219, %v2253
        %v2286 = vadd.f32 %v2221, %v2254
        %v2287 = vmax.f32 %v2255, 0.0
        %v2288 = vmax.f32 %v2256, 0.0
        %v2289 = vmax.f32 %v2257, 0.0
        %v2290 = vmax.f32 %v2258, 0.0
        %v2291 = vmax.f32 %v2259, 0.0
        %v2292 = vmax.f32 %v2260, 0.0
        %v2293 = vmax.f32 %v2261, 0.0
        %v2294 = vmax.f32 %v2262, 0.0
        %v2295 = vmax.f32 %v2263, 0.0
        %v2296 = vmax.f32 %v2264, 0.0
        %v2297 = vmax.f32 %v2265, 0.0
        %v2298 = vmax.f32 %v2266, 0.0
        %v2299 = vmax.f32 %v2267, 0.0
        %v2300 = vmax.f32 %v2268, 0.0
        %v2301 = vmax.f32 %v2269, 0.0
        %v2302 = vmax.f32 %v2270, 0.0
        %v2303 = vmax.f32 %v2271, 0.0
        %v2304 = vmax.f32 %v2272, 0.0
        %v2305 = vmax.f32 %v2273, 0.0
        %v2306 = vmax.f32 %v2274, 0.0
        %v2307 = vmax.f32 %v2275, 0.0
        %v2308 = vmax.f32 %v2276, 0.0
        %v2309 = vmax.f32 %v2277, 0.0
        %v2310 = vmax.f32 %v2278, 0.0
        %v2311 = vmax.f32 %v2279, 0.0
        %v2312 = vmax.f32 %v2280, 0.0
        %v2313 = vmax.f32 %v2281, 0.0
        %v2314 = vmax.f32 %v2282, 0.0
        %v2315 = vmax.f32 %v2283, 0.0
        %v2316 = vmax.f32 %v2284, 0.0
        %v2317 = vmax.f32 %v2285, 0.0
        %v2318 = vmax.f32 %v2286, 0.0
        %v2319 = vpack.c.bf16 %v2289, %v2287
        %v2320 = vpack.c.bf16 %v2290, %v2288
        %v2321 = vpack.c.bf16 %v2293, %v2291
        %v2322 = vpack.c.bf16 %v2294, %v2292
        %v2323 = vpack.c.bf16 %v2297, %v2295
        %v2324 = vpack.c.bf16 %v2298, %v2296
        %v2325 = vpack.c.bf16 %v2301, %v2299
        %v2326 = vpack.c.bf16 %v2302, %v2300
        %v2327 = vpack.c.bf16 %v2305, %v2303
        %v2328 = vpack.c.bf16 %v2306, %v2304
        %v2329 = vpack.c.bf16 %v2309, %v2307
        %v2330 = vpack.c.bf16 %v2310, %v2308
        %v2331 = vpack.c.bf16 %v2313, %v2311
        %v2332 = vpack.c.bf16 %v2314, %v2312
        %v2333 = vpack.c.bf16 %v2317, %v2315
        %v2334 = vpack.c.bf16 %v2318, %v2316
        %v2351 = vunpack.c.l.b16 %v2319
        %v2352 = vunpack.c.l.b16 %v2320
        %v2353 = vunpack.c.h.b16 %v2319
        %v2354 = vunpack.c.h.b16 %v2320
        %v2355 = vunpack.c.l.b16 %v2321
        %v2356 = vunpack.c.l.b16 %v2322
        %v2357 = vunpack.c.h.b16 %v2321
        %v2358 = vunpack.c.h.b16 %v2322
        %v2359 = vunpack.c.l.b16 %v2323
        %v2360 = vunpack.c.l.b16 %v2324
        %v2361 = vunpack.c.h.b16 %v2323
        %v2362 = vunpack.c.h.b16 %v2324
        %v2363 = vunpack.c.l.b16 %v2325
        %v2364 = vunpack.c.l.b16 %v2326
        %v2365 = vunpack.c.h.b16 %v2325
        %v2366 = vunpack.c.h.b16 %v2326
        %v2367 = vunpack.c.l.b16 %v2327
        %v2368 = vunpack.c.l.b16 %v2328
        %v2369 = vunpack.c.h.b16 %v2327
        %v2370 = vunpack.c.h.b16 %v2328
        %v2371 = vunpack.c.l.b16 %v2329
        %v2372 = vunpack.c.l.b16 %v2330
        %v2373 = vunpack.c.h.b16 %v2329
        %v2374 = vunpack.c.h.b16 %v2330
        %v2375 = vunpack.c.l.b16 %v2331
        %v2376 = vunpack.c.l.b16 %v2332
        %v2377 = vunpack.c.h.b16 %v2331
        %v2378 = vunpack.c.h.b16 %v2332
        %v2379 = vunpack.c.l.b16 %v2333
        %v2380 = vunpack.c.l.b16 %v2334
        %v2381 = vunpack.c.h.b16 %v2333
        %v2382 = vunpack.c.h.b16 %v2334
        %v2383 = vpack.c.b16 %v2352, %v2351
        %v2384 = vpack.c.b16 %v2354, %v2353
        %v2385 = vpack.c.b16 %v2356, %v2355
        %v2386 = vpack.c.b16 %v2358, %v2357
        %v2387 = vpack.c.b16 %v2360, %v2359
        %v2388 = vpack.c.b16 %v2362, %v2361
        %v2389 = vpack.c.b16 %v2364, %v2363
        %v2390 = vpack.c.b16 %v2366, %v2365
        %v2391 = vpack.c.b16 %v2368, %v2367
        %v2392 = vpack.c.b16 %v2370, %v2369
        %v2393 = vpack.c.b16 %v2372, %v2371
        %v2394 = vpack.c.b16 %v2374, %v2373
        %v2395 = vpack.c.b16 %v2376, %v2375
        %v2396 = vpack.c.b16 %v2378, %v2377
        %v2397 = vpack.c.b16 %v2380, %v2379
        %v2398 = vpack.c.b16 %v2382, %v2381
        %2415 = vst [vmem:[%s442] sm:$0xff] %v2383
        %2416 = vst [vmem:[%s442 + $0x8] sm:$0xff] %v2384
        %2417 = vst [vmem:[%s442 + $0x10] sm:$0xff] %v2385
        %2418 = vst [vmem:[%s442 + $0x18] sm:$0xff] %v2386
        %2419 = vst [vmem:[%s442 + $0x20] sm:$0xff] %v2387
        %2420 = vst [vmem:[%s442 + $0x28] sm:$0xff] %v2388
        %2421 = vst [vmem:[%s442 + $0x30] sm:$0xff] %v2389
        %2422 = vst [vmem:[%s442 + $0x38] sm:$0xff] %v2390
        %2423 = vst [vmem:[%s442 + $0x40] sm:$0xff] %v2391
        %2424 = vst [vmem:[%s442 + $0x48] sm:$0xff] %v2392
        %2425 = vst [vmem:[%s442 + $0x50] sm:$0xff] %v2393
        %2426 = vst [vmem:[%s442 + $0x58] sm:$0xff] %v2394
        %2427 = vst [vmem:[%s442 + $0x60] sm:$0xff] %v2395
        %2428 = vst [vmem:[%s442 + $0x68] sm:$0xff] %v2396
        %2429 = vst [vmem:[%s442 + $0x70] sm:$0xff] %v2397
        %2430 = vst [vmem:[%s442 + $0x78] sm:$0xff] %v2398
        %s2431 = sand.u32 %s271, 1
        %s2432 = scalar_lea.sflag [#allocation3], %s2431
        %s2433 = sand.u32 %s271, 1
        %s2434 = smul.addr %s2433, 128
        %s2435 = scalar_lea.vmem [#allocation2], %s2434
        // Predicated region
        $region57: #{pallas_fwd.3} parent=55 // pred_check
          %p2436 = pneg %p281
        $region58: #{pallas_fwd.3} parent=55 // pred_check_branch
          %2438 = sbr.rel (%p2436) target = $region60
        $region59: #{pallas_fwd.3} parent=55 // pred_region
          %s2439 = smul.u32 8, %s28
          %s2441 = ssub.s32 2048, 2048
          %2442 = vsyncadd %s2432, %s2441
          %s2443 = smul.addr %s2439, 4
          %s2444 = smul.addr %s27, 64
          %s2445 = sadd.s32 %s2443, %s2444
          %s2446 = smul.addr %s2445, 64
          %s2447 = scalar_lea.hbm %s9, %s2446
          %s2448 = sshll.u32 %s2435, 4
          %s2449 = int_to_ptr.vmem [resolvable:$true] %s2448
          %2454 = dma.vmem_to_hbm [thread:$0]  %s2449, 2048, %s2447, %s2432, 128, 128, 8
        $region60: #{pallas_fwd.3} parent=55 // pred_fallthru
          _
      $region56: #{pallas_fwd.3} parent=5 // pred_fallthru
        _
      %p2455 = scmp.le.s32.totalorder 2, %s18
      // Predicated region
      $region61: #{pallas_fwd.3} parent=5 // pred_check
        %p2456 = pneg %p2455
      $region62: #{pallas_fwd.3} parent=5 // pred_check_branch
        %2458 = sbr.rel (%p2456) target = $region64
      $region63: #{pallas_fwd.3} parent=5 // pred_region
        %s2459 = ssub.s32 %s18, 2
        // Predicated region
        $region65: #{pallas_fwd.3} parent=63 // pred_check
          %p2460 = pneg %p287
        $region66: #{pallas_fwd.3} parent=63 // pred_check_branch
          %2462 = sbr.rel (%p2460) target = $region68
        $region67: #{pallas_fwd.3} parent=63 // pred_region
          %s2463 = sand.u32 %s272, 1
          %s2464 = scalar_lea.sflag [#allocation3], %s2463
          %s2465 = sand.u32 %s272, 1
          %s2466 = smul.addr %s2465, 128
          %s2467 = scalar_lea.vmem [#allocation2], %s2466
          %2468 = dma.done %s2464, 2048
        $region68: #{pallas_fwd.3} parent=63 // pred_fallthru
          _
      $region64: #{pallas_fwd.3} parent=5 // pred_fallthru
        _
    $region6: #{pallas_fwd.3} parent=1 // loop_footer
      %s22 = sadd.s32 1, %s18
    $region7: #{pallas_fwd.3} parent=1 // loop_footer_branch
      %17 = sbr.rel target = $region3
    $region8: #{pallas_fwd.3} parent=1 // loop_exit
      _
    %2469 = vsyncpa [#allocation3], 1
    %s2470 = scalar_lea.sflag [#allocation3], 1
    %2471 = vsyncpa %s2470, 1

</llo_original>
